<compile_context>
chip_gen: v5e
topology: v5e:2x2
jax: 0.10.0
libtpu: 0.0.40
codegen_flags: <defaults>
</compile_context>

<pallas_src>
import functools

import jax
import jax.numpy as jnp
from jax.experimental import pallas as pl
from jax.experimental.pallas import tpu as pltpu


SPATIAL_FEAT_DIM = 32
NHID = 128
LEVELS = 8
KSIZE = 7
OUT_PAD = 128  # lane-dense classifier output width (>= num_classes)


# ---------------------------------------------------------------------------
# Fused kernel: projection -> 8 temporal blocks -> time-sum + classifier.
# One grid step processes `bt` sequences; weights live in two packed slabs.
# ---------------------------------------------------------------------------
def _fused_kernel(frames_ref, w_ref, b_ref, out_ref, pad_ref, *, bt, T, plan):
    PAD = T  # causal zero-pad rows at the top of pad_ref

    # Zero the causal-padding rows once; they are never overwritten.
    pad_ref[:, :PAD, :] = jnp.zeros((bt, PAD, NHID), jnp.bfloat16)

    def bias(idx):                        # [1, 128] f32 row of the bias slab
        return b_ref[idx:idx + 1, :]

    def mm(x2d_bf16, w_off, rows):        # x @ w_slab[w_off : w_off+rows]
        w = w_ref[w_off:w_off + rows, :]
        return jnp.dot(x2d_bf16, w, preferred_element_type=jnp.float32)

    def causal_conv(x_bf, shifts, w_off, b_idx):
        """Causal dilated conv1d (Conv1d + Chomp1d) as one MXU matmul.

        x_bf:   [bt, T, NHID] bf16 activation (time on sublanes).
        shifts: static surviving tap shifts (all < T).
        Shifted taps are produced by staging x_bf below the zero pad rows of
        pad_ref and re-reading at static row offsets (im2col over time, bf16).
        """
        if shifts == (0,):                # dilation >= T: plain 1x1 conv
            xk = x_bf
        else:
            pad_ref[:, PAD:, :] = x_bf    # stage once per conv, in bf16
            cols = [x_bf if s == 0 else pad_ref[:, PAD - s:PAD - s + T, :]
                    for s in shifts]
            xk = jnp.concatenate(cols, axis=-1)
        y = mm(xk.reshape(bt * T, len(shifts) * NHID),
               w_off, len(shifts) * NHID)
        return y.reshape(bt, T, NHID) + bias(b_idx)

    # Per-frame spatial-feature projection (channel-padded to NHID lanes).
    proj_off, proj_rows, proj_b = plan["proj"]
    frames = frames_ref[...].reshape(bt * T, -1)              # [bt*T, F] bf16
    x = (mm(frames, proj_off, proj_rows) + bias(proj_b)).reshape(bt, T, NHID)

    # TemporalConvNet, fully unrolled (activations stay resident in VMEM).
    for (s1, o1, b1, s2, o2, b2, ds) in plan["levels"]:
        x_bf = x.astype(jnp.bfloat16)
        h = jnp.maximum(causal_conv(x_bf, s1, o1, b1), 0.0)
        h = jnp.maximum(causal_conv(h.astype(jnp.bfloat16), s2, o2, b2), 0.0)
        if ds is not None:                # 1x1 downsample on the residual path
            od, bd = ds
            res = (mm(x_bf.reshape(bt * T, NHID), od, NHID)
                   .reshape(bt, T, NHID) + bias(bd))
        else:
            res = x
        x = jnp.maximum(h + res, 0.0)

    # Head: sum over time (PyTorch dim=2), classifier with lane-dense output.
    ol, bl = plan["head"]
    feat = jnp.sum(x, axis=1)                                 # [bt, NHID] f32
    logits = mm(feat.astype(jnp.bfloat16), ol, NHID) + bias(bl)
    out_ref[...] = logits.reshape(1, bt, OUT_PAD)


# ---------------------------------------------------------------------------
# One-time host-side parameter packing (static tap plan + fused slabs)
# ---------------------------------------------------------------------------
def _conv_plan(w, dilation, L):
    """Surviving causal taps (shift < L) and their stacked weight."""
    taps = [((KSIZE - 1 - j) * dilation, j) for j in range(KSIZE)]
    taps = [(s, j) for (s, j) in taps if s < L]
    assert taps and max(s for s, _ in taps) < L, (taps, L)   # pad-region invariant
    shifts = tuple(s for s, _ in taps)
    w_eff = jnp.concatenate([w[j] for _, j in taps], axis=0)  # [n*Cin, Cout]
    return shifts, w_eff


def prepare_params(params, T):
    """ONE-TIME packing into two MXU-friendly slabs + a static plan.

    Returns (w_slab [W_ROWS,128] bf16, b_slab [NB,128] f32, plan, n_cls).
    Call once and reuse; the forward path is then just the pallas_call.
    """
    w_chunks, b_rows = [], []

    def add_w(mat):                       # -> (row offset, rows)
        off = sum(c.shape[0] for c in w_chunks)
        w_chunks.append(jnp.asarray(mat, jnp.float32).astype(jnp.bfloat16))
        return off, mat.shape[0]

    def add_b(row):                       # -> row index in the bias slab
        idx = len(b_rows)
        b_rows.append(jnp.asarray(row, jnp.float32).reshape(1, -1))
        return idx

    wf = params["wf"]                                        # [F, 32]
    F = wf.shape[0]
    wf_pad = jnp.zeros((F, NHID), jnp.float32).at[:, :SPATIAL_FEAT_DIM].set(wf)
    bf_pad = (jnp.zeros((1, NHID), jnp.float32)
              .at[:, :SPATIAL_FEAT_DIM].set(params["bf"]))
    proj_off, proj_rows = add_w(wf_pad)
    proj_b = add_b(bf_pad)

    levels = []
    for i, blk in enumerate(params["blocks"]):
        d = 2 ** i
        w1 = blk["w1"]                                       # [K, Cin, 128]
        cin = w1.shape[1]
        if cin != NHID:                                      # pad Cin to 128 lanes
            # TODO(synk): level-0 conv1 could use its true Cin=32 (K=224) instead
            # of 128-padded taps; skipped since the kernel is overhead-bound here.
            w1 = jnp.zeros((KSIZE, NHID, NHID), jnp.float32).at[:, :cin, :].set(w1)
        s1, w1_eff = _conv_plan(w1, d, T)
        s2, w2_eff = _conv_plan(blk["w2"], d, T)
        o1, _ = add_w(w1_eff); b1 = add_b(blk["b1"])
        o2, _ = add_w(w2_eff); b2 = add_b(blk["b2"])
        if "wd" in blk:                                      # 1x1 downsample path
            wd = jnp.zeros((NHID, NHID), jnp.float32).at[:cin, :].set(blk["wd"])
            od, _ = add_w(wd); bd = add_b(blk["bd"])
            ds = (od, bd)
        else:
            ds = None
        levels.append((s1, o1, b1, s2, o2, b2, ds))

    n_cls = params["wl"].shape[1]
    wl_pad = jnp.zeros((NHID, OUT_PAD), jnp.float32).at[:, :n_cls].set(params["wl"])
    bl_pad = jnp.zeros((1, OUT_PAD), jnp.float32).at[:, :n_cls].set(params["bl"])
    ol, _ = add_w(wl_pad)
    bl = add_b(bl_pad)

    w_slab = jnp.concatenate(w_chunks, axis=0)               # [W_ROWS, 128] bf16
    b_slab = jnp.concatenate(b_rows, axis=0)                 # [NB, 128] f32
    nb = b_slab.shape[0]
    nb_pad = -(-nb // 8) * 8                                 # sublane-align rows
    if nb_pad != nb:
        b_slab = jnp.concatenate(
            [b_slab, jnp.zeros((nb_pad - nb, NHID), jnp.float32)], axis=0)

    plan = {"proj": (proj_off, proj_rows, proj_b),
            "levels": tuple(levels),
            "head": (ol, bl)}
    return jax.device_put(w_slab), jax.device_put(b_slab), plan, n_cls


# ---------------------------------------------------------------------------
# Parameters (deterministic in-script init; shapes from ResTCN.__init__)
# ---------------------------------------------------------------------------
def init_params(key, num_classes, feat_in):
    keys = jax.random.split(key, 4 + LEVELS)
    params = {}
    # Stand-in for resnet18 backbone + its replaced fc -> 32-dim feature.
    params["wf"] = jax.random.normal(keys[0], (feat_in, SPATIAL_FEAT_DIM),
                                     jnp.float32) * 0.01
    params["bf"] = jnp.zeros((1, SPATIAL_FEAT_DIM), jnp.float32)

    blocks = []
    cin = SPATIAL_FEAT_DIM
    for i in range(LEVELS):
        bk = jax.random.split(keys[4 + i], 6)
        cout = NHID
        blk = {
            "w1": jax.random.normal(bk[0], (KSIZE, cin, cout), jnp.float32) * 0.01,
            "b1": jax.random.normal(bk[1], (1, cout), jnp.float32) * 0.01,
            "w2": jax.random.normal(bk[2], (KSIZE, cout, cout), jnp.float32) * 0.01,
            "b2": jax.random.normal(bk[3], (1, cout), jnp.float32) * 0.01,
        }
        if cin != cout:  # first level: 32 -> 128 needs 1x1 downsample
            blk["wd"] = jax.random.normal(bk[4], (cin, cout), jnp.float32) * 0.01
            blk["bd"] = jax.random.normal(bk[5], (1, cout), jnp.float32) * 0.01
        blocks.append(blk)
        cin = cout
    params["blocks"] = blocks

    params["wl"] = (jax.random.normal(keys[1], (NHID, num_classes), jnp.float32)
                    * (1.0 / jnp.sqrt(NHID)))
    params["bl"] = jnp.zeros((1, num_classes), jnp.float32)
    return params


# ---------------------------------------------------------------------------
# Forward pass (mirrors ResTCN.forward) — a single fused pallas_call
# ---------------------------------------------------------------------------
def make_forward(prepared):
    """Build a jitted forward; weight packing is NOT re-run per call."""
    w_slab, b_slab, plan, n_cls = prepared
    w_rows, nb = w_slab.shape[0], b_slab.shape[0]

    @jax.jit
    def _fwd(data, w_slab, b_slab):
        # data: [B, T, 1, H, W] grayscale frame sequence.
        B, T, Ci, H, W = data.shape
        F = Ci * H * W
        nt = 2 if (B >= 2 and B % 2 == 0) else 1  # 2 batch tiles -> one per
        bt = B // nt                              # TensorCore on v7x megacore
        frames = data.reshape(nt, bt * T, F).astype(jnp.bfloat16)

        kernel = functools.partial(_fused_kernel, bt=bt, T=T, plan=plan)
        out = pl.pallas_call(
            kernel,
            grid=(nt,),
            in_specs=[
                pl.BlockSpec((1, bt * T, F), lambda i: (i, 0, 0)),
                pl.BlockSpec((w_rows, NHID), lambda i: (0, 0)),
                pl.BlockSpec((nb, NHID), lambda i: (0, 0)),
            ],
            out_specs=pl.BlockSpec((1, bt, OUT_PAD), lambda i: (i, 0, 0)),
            out_shape=jax.ShapeDtypeStruct((nt, bt, OUT_PAD), jnp.float32),
            # [bt, T(zero pad) + T(data), NHID] bf16 causal / im2col staging.
            scratch_shapes=[pltpu.VMEM((bt, 2 * T, NHID), jnp.bfloat16)],
            compiler_params=pltpu.CompilerParams(
                dimension_semantics=("parallel",)),
            cost_estimate=pl.CostEstimate(
                flops=2 * B * T * w_rows * NHID,
                transcendentals=0,
                bytes_accessed=(frames.size * 2 + w_slab.size * 2
                                + b_slab.size * 4 + B * OUT_PAD * 4)),
        )(frames, w_slab, b_slab)
        return out.reshape(B, OUT_PAD)[:, :n_cls]             # [B, num_classes]

    return lambda data: _fwd(data, w_slab, b_slab)


if __name__ == "__main__":
    key = jax.random.PRNGKey(0)
    kd, kp = jax.random.split(key)

    B, T, H, W = 2, 16, 16, 16
    NUM_CLASSES = 10

    data = jax.random.normal(kd, (B, T, 1, H, W), jnp.float32)
    params = init_params(kp, NUM_CLASSES, feat_in=1 * H * W)

    prepared = prepare_params(params, T)   # one-time weight packing (cached)
    res_tcn_forward = make_forward(prepared)

    out = res_tcn_forward(data)
    jax.block_until_ready(out)
    assert out.shape == (B, NUM_CLASSES), out.shape
    assert bool(jnp.all(jnp.isfinite(out)))
    print("KERNEL_OK")
</pallas_src>

<mosaic_0001>
module attributes {stable_mosaic.version = 11 : i64} {
  func.func @_fused_kernel(%arg0: i32, %arg1: memref<1x16x256xbf16, #tpu.memory_space<vmem>>, %arg2: memref<6656x128xbf16, #tpu.memory_space<vmem>>, %arg3: memref<24x128xf32, #tpu.memory_space<vmem>>, %arg4: memref<1x1x128xf32, #tpu.memory_space<vmem>>, %arg5: memref<1x32x128xbf16, #tpu.memory_space<vmem>>) attributes {dimension_semantics = [#tpu.dimension_semantics<parallel>], iteration_bounds = array<i64: 2>, scalar_prefetch = 0 : i64, scratch_operands = 1 : i64, tpu.core_type = #tpu.core_type<tc>, window_params = [{transform_indices = @transform_0, window_bounds = array<i64: 1, 16, 256>}, {pipeline_mode = #tpu.pipeline_mode<synchronous>, transform_indices = @transform_1, window_bounds = array<i64: 6656, 128>}, {pipeline_mode = #tpu.pipeline_mode<synchronous>, transform_indices = @transform_2, window_bounds = array<i64: 24, 128>}, {transform_indices = @transform_3, window_bounds = array<i64: 1, 1, 128>}]} {
    %cst = arith.constant 0.000000e+00 : bf16
    %0 = vector.broadcast %cst : bf16 to vector<1x16x128xbf16>
    %c0 = arith.constant 0 : index
    %c0_0 = arith.constant 0 : index
    %c0_1 = arith.constant 0 : index
    %1 = vector.load %arg5[%c0, %c0_0, %c0_1] : memref<1x32x128xbf16, #tpu.memory_space<vmem>>, vector<1x16x128xbf16>
    tpu.vector_store %arg5[%c0, %c0_0, %c0_1], %0 {strides = array<i32>} : memref<1x32x128xbf16, #tpu.memory_space<vmem>>, vector<1x16x128xbf16>,
    %c0_2 = arith.constant 0 : index
    %c0_3 = arith.constant 0 : index
    %c0_4 = arith.constant 0 : index
    %2 = vector.load %arg1[%c0_2, %c0_3, %c0_4] : memref<1x16x256xbf16, #tpu.memory_space<vmem>>, vector<1x16x256xbf16>
    %3 = vector.shape_cast %2 : vector<1x16x256xbf16> to vector<16x256xbf16>
    %c0_5 = arith.constant 0 : index
    %c0_6 = arith.constant 0 : index
    %4 = vector.load %arg2[%c0_5, %c0_6] : memref<6656x128xbf16, #tpu.memory_space<vmem>>, vector<256x128xbf16>
    %cst_7 = arith.constant dense<0.000000e+00> : vector<16x128xf32>
    %5 = tpu.matmul %3, %4, %cst_7 {dimension_numbers = #tpu.dot_dimension_numbers<[1], [0], [0], [1], [0, 0, 1, 1], [], []>} : vector<16x256xbf16>, vector<256x128xbf16>, vector<16x128xf32> -> vector<16x128xf32>
    %c0_8 = arith.constant 0 : index
    %c0_9 = arith.constant 0 : index
    %6 = vector.load %arg3[%c0_8, %c0_9] : memref<24x128xf32, #tpu.memory_space<vmem>>, vector<1x128xf32>
    %7 = vector.broadcast %6 : vector<1x128xf32> to vector<16x128xf32>
    %8 = arith.addf %5, %7 : vector<16x128xf32>
    %9 = vector.shape_cast %8 : vector<16x128xf32> to vector<1x16x128xf32>
    %10 = arith.truncf %9 : vector<1x16x128xf32> to vector<1x16x128xbf16>
    %c0_10 = arith.constant 0 : index
    %c16 = arith.constant 16 : index
    %c0_11 = arith.constant 0 : index
    %11 = vector.load %arg5[%c0_10, %c16, %c0_11] : memref<1x32x128xbf16, #tpu.memory_space<vmem>>, vector<1x16x128xbf16>
    tpu.vector_store %arg5[%c0_10, %c16, %c0_11], %10 {strides = array<i32>} : memref<1x32x128xbf16, #tpu.memory_space<vmem>>, vector<1x16x128xbf16>,
    %c0_12 = arith.constant 0 : index
    %c10 = arith.constant 10 : index
    %c0_13 = arith.constant 0 : index
    %12 = vector.load %arg5[%c0_12, %c10, %c0_13] : memref<1x32x128xbf16, #tpu.memory_space<vmem>>, vector<1x16x128xbf16>
    %c0_14 = arith.constant 0 : index
    %c11 = arith.constant 11 : index
    %c0_15 = arith.constant 0 : index
    %13 = vector.load %arg5[%c0_14, %c11, %c0_15] : memref<1x32x128xbf16, #tpu.memory_space<vmem>>, vector<1x16x128xbf16>
    %c0_16 = arith.constant 0 : index
    %c12 = arith.constant 12 : index
    %c0_17 = arith.constant 0 : index
    %14 = vector.load %arg5[%c0_16, %c12, %c0_17] : memref<1x32x128xbf16, #tpu.memory_space<vmem>>, vector<1x16x128xbf16>
    %c0_18 = arith.constant 0 : index
    %c13 = arith.constant 13 : index
    %c0_19 = arith.constant 0 : index
    %15 = vector.load %arg5[%c0_18, %c13, %c0_19] : memref<1x32x128xbf16, #tpu.memory_space<vmem>>, vector<1x16x128xbf16>
    %c0_20 = arith.constant 0 : index
    %c14 = arith.constant 14 : index
    %c0_21 = arith.constant 0 : index
    %16 = vector.load %arg5[%c0_20, %c14, %c0_21] : memref<1x32x128xbf16, #tpu.memory_space<vmem>>, vector<1x16x128xbf16>
    %c0_22 = arith.constant 0 : index
    %c15 = arith.constant 15 : index
    %c0_23 = arith.constant 0 : index
    %17 = vector.load %arg5[%c0_22, %c15, %c0_23] : memref<1x32x128xbf16, #tpu.memory_space<vmem>>, vector<1x16x128xbf16>
    %18 = tpu.concatenate %12, %13, %14, %15, %16, %17, %10 in 2 : vector<1x16x128xbf16>, vector<1x16x128xbf16>, vector<1x16x128xbf16>, vector<1x16x128xbf16>, vector<1x16x128xbf16>, vector<1x16x128xbf16>, vector<1x16x128xbf16> -> vector<1x16x896xbf16>
    %19 = vector.shape_cast %18 : vector<1x16x896xbf16> to vector<16x896xbf16>
    %c256 = arith.constant 256 : index
    %c0_24 = arith.constant 0 : index
    %20 = vector.load %arg2[%c256, %c0_24] : memref<6656x128xbf16, #tpu.memory_space<vmem>>, vector<896x128xbf16>
    %cst_25 = arith.constant dense<0.000000e+00> : vector<16x128xf32>
    %21 = tpu.matmul %19, %20, %cst_25 {dimension_numbers = #tpu.dot_dimension_numbers<[1], [0], [0], [1], [0, 0, 1, 1], [], []>} : vector<16x896xbf16>, vector<896x128xbf16>, vector<16x128xf32> -> vector<16x128xf32>
    %22 = vector.shape_cast %21 : vector<16x128xf32> to vector<1x16x128xf32>
    %c1 = arith.constant 1 : index
    %c0_26 = arith.constant 0 : index
    %23 = vector.load %arg3[%c1, %c0_26] : memref<24x128xf32, #tpu.memory_space<vmem>>, vector<1x128xf32>
    %24 = vector.shape_cast %23 : vector<1x128xf32> to vector<1x1x128xf32>
    %25 = vector.broadcast %24 : vector<1x1x128xf32> to vector<1x16x128xf32>
    %26 = arith.addf %22, %25 : vector<1x16x128xf32>
    %cst_27 = arith.constant 0.000000e+00 : f32
    %27 = vector.broadcast %cst_27 : f32 to vector<1x16x128xf32>
    %28 = arith.maximumf %26, %27 : vector<1x16x128xf32>
    %29 = arith.truncf %28 : vector<1x16x128xf32> to vector<1x16x128xbf16>
    %c0_28 = arith.constant 0 : index
    %c16_29 = arith.constant 16 : index
    %c0_30 = arith.constant 0 : index
    %30 = vector.load %arg5[%c0_28, %c16_29, %c0_30] : memref<1x32x128xbf16, #tpu.memory_space<vmem>>, vector<1x16x128xbf16>
    tpu.vector_store %arg5[%c0_28, %c16_29, %c0_30], %29 {strides = array<i32>} : memref<1x32x128xbf16, #tpu.memory_space<vmem>>, vector<1x16x128xbf16>,
    %c0_31 = arith.constant 0 : index
    %c10_32 = arith.constant 10 : index
    %c0_33 = arith.constant 0 : index
    %31 = vector.load %arg5[%c0_31, %c10_32, %c0_33] : memref<1x32x128xbf16, #tpu.memory_space<vmem>>, vector<1x16x128xbf16>
    %c0_34 = arith.constant 0 : index
    %c11_35 = arith.constant 11 : index
    %c0_36 = arith.constant 0 : index
    %32 = vector.load %arg5[%c0_34, %c11_35, %c0_36] : memref<1x32x128xbf16, #tpu.memory_space<vmem>>, vector<1x16x128xbf16>
    %c0_37 = arith.constant 0 : index
    %c12_38 = arith.constant 12 : index
    %c0_39 = arith.constant 0 : index
    %33 = vector.load %arg5[%c0_37, %c12_38, %c0_39] : memref<1x32x128xbf16, #tpu.memory_space<vmem>>, vector<1x16x128xbf16>
    %c0_40 = arith.constant 0 : index
    %c13_41 = arith.constant 13 : index
    %c0_42 = arith.constant 0 : index
    %34 = vector.load %arg5[%c0_40, %c13_41, %c0_42] : memref<1x32x128xbf16, #tpu.memory_space<vmem>>, vector<1x16x128xbf16>
    %c0_43 = arith.constant 0 : index
    %c14_44 = arith.constant 14 : index
    %c0_45 = arith.constant 0 : index
    %35 = vector.load %arg5[%c0_43, %c14_44, %c0_45] : memref<1x32x128xbf16, #tpu.memory_space<vmem>>, vector<1x16x128xbf16>
    %c0_46 = arith.constant 0 : index
    %c15_47 = arith.constant 15 : index
    %c0_48 = arith.constant 0 : index
    %36 = vector.load %arg5[%c0_46, %c15_47, %c0_48] : memref<1x32x128xbf16, #tpu.memory_space<vmem>>, vector<1x16x128xbf16>
    %37 = tpu.concatenate %31, %32, %33, %34, %35, %36, %29 in 2 : vector<1x16x128xbf16>, vector<1x16x128xbf16>, vector<1x16x128xbf16>, vector<1x16x128xbf16>, vector<1x16x128xbf16>, vector<1x16x128xbf16>, vector<1x16x128xbf16> -> vector<1x16x896xbf16>
    %38 = vector.shape_cast %37 : vector<1x16x896xbf16> to vector<16x896xbf16>
    %c1152 = arith.constant 1152 : index
    %c0_49 = arith.constant 0 : index
    %39 = vector.load %arg2[%c1152, %c0_49] : memref<6656x128xbf16, #tpu.memory_space<vmem>>, vector<896x128xbf16>
    %cst_50 = arith.constant dense<0.000000e+00> : vector<16x128xf32>
    %40 = tpu.matmul %38, %39, %cst_50 {dimension_numbers = #tpu.dot_dimension_numbers<[1], [0], [0], [1], [0, 0, 1, 1], [], []>} : vector<16x896xbf16>, vector<896x128xbf16>, vector<16x128xf32> -> vector<16x128xf32>
    %41 = vector.shape_cast %40 : vector<16x128xf32> to vector<1x16x128xf32>
    %c2 = arith.constant 2 : index
    %c0_51 = arith.constant 0 : index
    %42 = vector.load %arg3[%c2, %c0_51] : memref<24x128xf32, #tpu.memory_space<vmem>>, vector<1x128xf32>
    %43 = vector.shape_cast %42 : vector<1x128xf32> to vector<1x1x128xf32>
    %44 = vector.broadcast %43 : vector<1x1x128xf32> to vector<1x16x128xf32>
    %45 = arith.addf %41, %44 : vector<1x16x128xf32>
    %cst_52 = arith.constant 0.000000e+00 : f32
    %46 = vector.broadcast %cst_52 : f32 to vector<1x16x128xf32>
    %47 = arith.maximumf %45, %46 : vector<1x16x128xf32>
    %48 = vector.shape_cast %10 : vector<1x16x128xbf16> to vector<16x128xbf16>
    %c2048 = arith.constant 2048 : index
    %c0_53 = arith.constant 0 : index
    %49 = vector.load %arg2[%c2048, %c0_53] : memref<6656x128xbf16, #tpu.memory_space<vmem>>, vector<128x128xbf16>
    %cst_54 = arith.constant dense<0.000000e+00> : vector<16x128xf32>
    %50 = tpu.matmul %48, %49, %cst_54 {dimension_numbers = #tpu.dot_dimension_numbers<[1], [0], [0], [1], [0, 0, 1, 1], [], []>} : vector<16x128xbf16>, vector<128x128xbf16>, vector<16x128xf32> -> vector<16x128xf32>
    %51 = vector.shape_cast %50 : vector<16x128xf32> to vector<1x16x128xf32>
    %c3 = arith.constant 3 : index
    %c0_55 = arith.constant 0 : index
    %52 = vector.load %arg3[%c3, %c0_55] : memref<24x128xf32, #tpu.memory_space<vmem>>, vector<1x128xf32>
    %53 = vector.shape_cast %52 : vector<1x128xf32> to vector<1x1x128xf32>
    %54 = vector.broadcast %53 : vector<1x1x128xf32> to vector<1x16x128xf32>
    %55 = arith.addf %51, %54 : vector<1x16x128xf32>
    %56 = arith.addf %47, %55 : vector<1x16x128xf32>
    %cst_56 = arith.constant 0.000000e+00 : f32
    %57 = vector.broadcast %cst_56 : f32 to vector<1x16x128xf32>
    %58 = arith.maximumf %56, %57 : vector<1x16x128xf32>
    %59 = arith.truncf %58 : vector<1x16x128xf32> to vector<1x16x128xbf16>
    %c0_57 = arith.constant 0 : index
    %c16_58 = arith.constant 16 : index
    %c0_59 = arith.constant 0 : index
    %60 = vector.load %arg5[%c0_57, %c16_58, %c0_59] : memref<1x32x128xbf16, #tpu.memory_space<vmem>>, vector<1x16x128xbf16>
    tpu.vector_store %arg5[%c0_57, %c16_58, %c0_59], %59 {strides = array<i32>} : memref<1x32x128xbf16, #tpu.memory_space<vmem>>, vector<1x16x128xbf16>,
    %c0_60 = arith.constant 0 : index
    %c4 = arith.constant 4 : index
    %c0_61 = arith.constant 0 : index
    %61 = vector.load %arg5[%c0_60, %c4, %c0_61] : memref<1x32x128xbf16, #tpu.memory_space<vmem>>, vector<1x16x128xbf16>
    %c0_62 = arith.constant 0 : index
    %c6 = arith.constant 6 : index
    %c0_63 = arith.constant 0 : index
    %62 = vector.load %arg5[%c0_62, %c6, %c0_63] : memref<1x32x128xbf16, #tpu.memory_space<vmem>>, vector<1x16x128xbf16>
    %c0_64 = arith.constant 0 : index
    %c8 = arith.constant 8 : index
    %c0_65 = arith.constant 0 : index
    %63 = vector.load %arg5[%c0_64, %c8, %c0_65] : memref<1x32x128xbf16, #tpu.memory_space<vmem>>, vector<1x16x128xbf16>
    %c0_66 = arith.constant 0 : index
    %c10_67 = arith.constant 10 : index
    %c0_68 = arith.constant 0 : index
    %64 = vector.load %arg5[%c0_66, %c10_67, %c0_68] : memref<1x32x128xbf16, #tpu.memory_space<vmem>>, vector<1x16x128xbf16>
    %c0_69 = arith.constant 0 : index
    %c12_70 = arith.constant 12 : index
    %c0_71 = arith.constant 0 : index
    %65 = vector.load %arg5[%c0_69, %c12_70, %c0_71] : memref<1x32x128xbf16, #tpu.memory_space<vmem>>, vector<1x16x128xbf16>
    %c0_72 = arith.constant 0 : index
    %c14_73 = arith.constant 14 : index
    %c0_74 = arith.constant 0 : index
    %66 = vector.load %arg5[%c0_72, %c14_73, %c0_74] : memref<1x32x128xbf16, #tpu.memory_space<vmem>>, vector<1x16x128xbf16>
    %67 = tpu.concatenate %61, %62, %63, %64, %65, %66, %59 in 2 : vector<1x16x128xbf16>, vector<1x16x128xbf16>, vector<1x16x128xbf16>, vector<1x16x128xbf16>, vector<1x16x128xbf16>, vector<1x16x128xbf16>, vector<1x16x128xbf16> -> vector<1x16x896xbf16>
    %68 = vector.shape_cast %67 : vector<1x16x896xbf16> to vector<16x896xbf16>
    %c2176 = arith.constant 2176 : index
    %c0_75 = arith.constant 0 : index
    %69 = vector.load %arg2[%c2176, %c0_75] : memref<6656x128xbf16, #tpu.memory_space<vmem>>, vector<896x128xbf16>
    %cst_76 = arith.constant dense<0.000000e+00> : vector<16x128xf32>
    %70 = tpu.matmul %68, %69, %cst_76 {dimension_numbers = #tpu.dot_dimension_numbers<[1], [0], [0], [1], [0, 0, 1, 1], [], []>} : vector<16x896xbf16>, vector<896x128xbf16>, vector<16x128xf32> -> vector<16x128xf32>
    %71 = vector.shape_cast %70 : vector<16x128xf32> to vector<1x16x128xf32>
    %c4_77 = arith.constant 4 : index
    %c0_78 = arith.constant 0 : index
    %72 = vector.load %arg3[%c4_77, %c0_78] : memref<24x128xf32, #tpu.memory_space<vmem>>, vector<1x128xf32>
    %73 = vector.shape_cast %72 : vector<1x128xf32> to vector<1x1x128xf32>
    %74 = vector.broadcast %73 : vector<1x1x128xf32> to vector<1x16x128xf32>
    %75 = arith.addf %71, %74 : vector<1x16x128xf32>
    %cst_79 = arith.constant 0.000000e+00 : f32
    %76 = vector.broadcast %cst_79 : f32 to vector<1x16x128xf32>
    %77 = arith.maximumf %75, %76 : vector<1x16x128xf32>
    %78 = arith.truncf %77 : vector<1x16x128xf32> to vector<1x16x128xbf16>
    %c0_80 = arith.constant 0 : index
    %c16_81 = arith.constant 16 : index
    %c0_82 = arith.constant 0 : index
    %79 = vector.load %arg5[%c0_80, %c16_81, %c0_82] : memref<1x32x128xbf16, #tpu.memory_space<vmem>>, vector<1x16x128xbf16>
    tpu.vector_store %arg5[%c0_80, %c16_81, %c0_82], %78 {strides = array<i32>} : memref<1x32x128xbf16, #tpu.memory_space<vmem>>, vector<1x16x128xbf16>,
    %c0_83 = arith.constant 0 : index
    %c4_84 = arith.constant 4 : index
    %c0_85 = arith.constant 0 : index
    %80 = vector.load %arg5[%c0_83, %c4_84, %c0_85] : memref<1x32x128xbf16, #tpu.memory_space<vmem>>, vector<1x16x128xbf16>
    %c0_86 = arith.constant 0 : index
    %c6_87 = arith.constant 6 : index
    %c0_88 = arith.constant 0 : index
    %81 = vector.load %arg5[%c0_86, %c6_87, %c0_88] : memref<1x32x128xbf16, #tpu.memory_space<vmem>>, vector<1x16x128xbf16>
    %c0_89 = arith.constant 0 : index
    %c8_90 = arith.constant 8 : index
    %c0_91 = arith.constant 0 : index
    %82 = vector.load %arg5[%c0_89, %c8_90, %c0_91] : memref<1x32x128xbf16, #tpu.memory_space<vmem>>, vector<1x16x128xbf16>
    %c0_92 = arith.constant 0 : index
    %c10_93 = arith.constant 10 : index
    %c0_94 = arith.constant 0 : index
    %83 = vector.load %arg5[%c0_92, %c10_93, %c0_94] : memref<1x32x128xbf16, #tpu.memory_space<vmem>>, vector<1x16x128xbf16>
    %c0_95 = arith.constant 0 : index
    %c12_96 = arith.constant 12 : index
    %c0_97 = arith.constant 0 : index
    %84 = vector.load %arg5[%c0_95, %c12_96, %c0_97] : memref<1x32x128xbf16, #tpu.memory_space<vmem>>, vector<1x16x128xbf16>
    %c0_98 = arith.constant 0 : index
    %c14_99 = arith.constant 14 : index
    %c0_100 = arith.constant 0 : index
    %85 = vector.load %arg5[%c0_98, %c14_99, %c0_100] : memref<1x32x128xbf16, #tpu.memory_space<vmem>>, vector<1x16x128xbf16>
    %86 = tpu.concatenate %80, %81, %82, %83, %84, %85, %78 in 2 : vector<1x16x128xbf16>, vector<1x16x128xbf16>, vector<1x16x128xbf16>, vector<1x16x128xbf16>, vector<1x16x128xbf16>, vector<1x16x128xbf16>, vector<1x16x128xbf16> -> vector<1x16x896xbf16>
    %87 = vector.shape_cast %86 : vector<1x16x896xbf16> to vector<16x896xbf16>
    %c3072 = arith.constant 3072 : index
    %c0_101 = arith.constant 0 : index
    %88 = vector.load %arg2[%c3072, %c0_101] : memref<6656x128xbf16, #tpu.memory_space<vmem>>, vector<896x128xbf16>
    %cst_102 = arith.constant dense<0.000000e+00> : vector<16x128xf32>
    %89 = tpu.matmul %87, %88, %cst_102 {dimension_numbers = #tpu.dot_dimension_numbers<[1], [0], [0], [1], [0, 0, 1, 1], [], []>} : vector<16x896xbf16>, vector<896x128xbf16>, vector<16x128xf32> -> vector<16x128xf32>
    %90 = vector.shape_cast %89 : vector<16x128xf32> to vector<1x16x128xf32>
    %c5 = arith.constant 5 : index
    %c0_103 = arith.constant 0 : index
    %91 = vector.load %arg3[%c5, %c0_103] : memref<24x128xf32, #tpu.memory_space<vmem>>, vector<1x128xf32>
    %92 = vector.shape_cast %91 : vector<1x128xf32> to vector<1x1x128xf32>
    %93 = vector.broadcast %92 : vector<1x1x128xf32> to vector<1x16x128xf32>
    %94 = arith.addf %90, %93 : vector<1x16x128xf32>
    %cst_104 = arith.constant 0.000000e+00 : f32
    %95 = vector.broadcast %cst_104 : f32 to vector<1x16x128xf32>
    %96 = arith.maximumf %94, %95 : vector<1x16x128xf32>
    %97 = arith.addf %96, %58 : vector<1x16x128xf32>
    %cst_105 = arith.constant 0.000000e+00 : f32
    %98 = vector.broadcast %cst_105 : f32 to vector<1x16x128xf32>
    %99 = arith.maximumf %97, %98 : vector<1x16x128xf32>
    %100 = arith.truncf %99 : vector<1x16x128xf32> to vector<1x16x128xbf16>
    %c0_106 = arith.constant 0 : index
    %c16_107 = arith.constant 16 : index
    %c0_108 = arith.constant 0 : index
    %101 = vector.load %arg5[%c0_106, %c16_107, %c0_108] : memref<1x32x128xbf16, #tpu.memory_space<vmem>>, vector<1x16x128xbf16>
    tpu.vector_store %arg5[%c0_106, %c16_107, %c0_108], %100 {strides = array<i32>} : memref<1x32x128xbf16, #tpu.memory_space<vmem>>, vector<1x16x128xbf16>,
    %c0_109 = arith.constant 0 : index
    %c4_110 = arith.constant 4 : index
    %c0_111 = arith.constant 0 : index
    %102 = vector.load %arg5[%c0_109, %c4_110, %c0_111] : memref<1x32x128xbf16, #tpu.memory_space<vmem>>, vector<1x16x128xbf16>
    %c0_112 = arith.constant 0 : index
    %c8_113 = arith.constant 8 : index
    %c0_114 = arith.constant 0 : index
    %103 = vector.load %arg5[%c0_112, %c8_113, %c0_114] : memref<1x32x128xbf16, #tpu.memory_space<vmem>>, vector<1x16x128xbf16>
    %c0_115 = arith.constant 0 : index
    %c12_116 = arith.constant 12 : index
    %c0_117 = arith.constant 0 : index
    %104 = vector.load %arg5[%c0_115, %c12_116, %c0_117] : memref<1x32x128xbf16, #tpu.memory_space<vmem>>, vector<1x16x128xbf16>
    %105 = tpu.concatenate %102, %103, %104, %100 in 2 : vector<1x16x128xbf16>, vector<1x16x128xbf16>, vector<1x16x128xbf16>, vector<1x16x128xbf16> -> vector<1x16x512xbf16>
    %106 = vector.shape_cast %105 : vector<1x16x512xbf16> to vector<16x512xbf16>
    %c3968 = arith.constant 3968 : index
    %c0_118 = arith.constant 0 : index
    %107 = vector.load %arg2[%c3968, %c0_118] : memref<6656x128xbf16, #tpu.memory_space<vmem>>, vector<512x128xbf16>
    %cst_119 = arith.constant dense<0.000000e+00> : vector<16x128xf32>
    %108 = tpu.matmul %106, %107, %cst_119 {dimension_numbers = #tpu.dot_dimension_numbers<[1], [0], [0], [1], [0, 0, 1, 1], [], []>} : vector<16x512xbf16>, vector<512x128xbf16>, vector<16x128xf32> -> vector<16x128xf32>
    %109 = vector.shape_cast %108 : vector<16x128xf32> to vector<1x16x128xf32>
    %c6_120 = arith.constant 6 : index
    %c0_121 = arith.constant 0 : index
    %110 = vector.load %arg3[%c6_120, %c0_121] : memref<24x128xf32, #tpu.memory_space<vmem>>, vector<1x128xf32>
    %111 = vector.shape_cast %110 : vector<1x128xf32> to vector<1x1x128xf32>
    %112 = vector.broadcast %111 : vector<1x1x128xf32> to vector<1x16x128xf32>
    %113 = arith.addf %109, %112 : vector<1x16x128xf32>
    %cst_122 = arith.constant 0.000000e+00 : f32
    %114 = vector.broadcast %cst_122 : f32 to vector<1x16x128xf32>
    %115 = arith.maximumf %113, %114 : vector<1x16x128xf32>
    %116 = arith.truncf %115 : vector<1x16x128xf32> to vector<1x16x128xbf16>
    %c0_123 = arith.constant 0 : index
    %c16_124 = arith.constant 16 : index
    %c0_125 = arith.constant 0 : index
    %117 = vector.load %arg5[%c0_123, %c16_124, %c0_125] : memref<1x32x128xbf16, #tpu.memory_space<vmem>>, vector<1x16x128xbf16>
    tpu.vector_store %arg5[%c0_123, %c16_124, %c0_125], %116 {strides = array<i32>} : memref<1x32x128xbf16, #tpu.memory_space<vmem>>, vector<1x16x128xbf16>,
    %c0_126 = arith.constant 0 : index
    %c4_127 = arith.constant 4 : index
    %c0_128 = arith.constant 0 : index
    %118 = vector.load %arg5[%c0_126, %c4_127, %c0_128] : memref<1x32x128xbf16, #tpu.memory_space<vmem>>, vector<1x16x128xbf16>
    %c0_129 = arith.constant 0 : index
    %c8_130 = arith.constant 8 : index
    %c0_131 = arith.constant 0 : index
    %119 = vector.load %arg5[%c0_129, %c8_130, %c0_131] : memref<1x32x128xbf16, #tpu.memory_space<vmem>>, vector<1x16x128xbf16>
    %c0_132 = arith.constant 0 : index
    %c12_133 = arith.constant 12 : index
    %c0_134 = arith.constant 0 : index
    %120 = vector.load %arg5[%c0_132, %c12_133, %c0_134] : memref<1x32x128xbf16, #tpu.memory_space<vmem>>, vector<1x16x128xbf16>
    %121 = tpu.concatenate %118, %119, %120, %116 in 2 : vector<1x16x128xbf16>, vector<1x16x128xbf16>, vector<1x16x128xbf16>, vector<1x16x128xbf16> -> vector<1x16x512xbf16>
    %122 = vector.shape_cast %121 : vector<1x16x512xbf16> to vector<16x512xbf16>
    %c4480 = arith.constant 4480 : index
    %c0_135 = arith.constant 0 : index
    %123 = vector.load %arg2[%c4480, %c0_135] : memref<6656x128xbf16, #tpu.memory_space<vmem>>, vector<512x128xbf16>
    %cst_136 = arith.constant dense<0.000000e+00> : vector<16x128xf32>
    %124 = tpu.matmul %122, %123, %cst_136 {dimension_numbers = #tpu.dot_dimension_numbers<[1], [0], [0], [1], [0, 0, 1, 1], [], []>} : vector<16x512xbf16>, vector<512x128xbf16>, vector<16x128xf32> -> vector<16x128xf32>
    %125 = vector.shape_cast %124 : vector<16x128xf32> to vector<1x16x128xf32>
    %c7 = arith.constant 7 : index
    %c0_137 = arith.constant 0 : index
    %126 = vector.load %arg3[%c7, %c0_137] : memref<24x128xf32, #tpu.memory_space<vmem>>, vector<1x128xf32>
    %127 = vector.shape_cast %126 : vector<1x128xf32> to vector<1x1x128xf32>
    %128 = vector.broadcast %127 : vector<1x1x128xf32> to vector<1x16x128xf32>
    %129 = arith.addf %125, %128 : vector<1x16x128xf32>
    %cst_138 = arith.constant 0.000000e+00 : f32
    %130 = vector.broadcast %cst_138 : f32 to vector<1x16x128xf32>
    %131 = arith.maximumf %129, %130 : vector<1x16x128xf32>
    %132 = arith.addf %131, %99 : vector<1x16x128xf32>
    %cst_139 = arith.constant 0.000000e+00 : f32
    %133 = vector.broadcast %cst_139 : f32 to vector<1x16x128xf32>
    %134 = arith.maximumf %132, %133 : vector<1x16x128xf32>
    %135 = arith.truncf %134 : vector<1x16x128xf32> to vector<1x16x128xbf16>
    %c0_140 = arith.constant 0 : index
    %c16_141 = arith.constant 16 : index
    %c0_142 = arith.constant 0 : index
    %136 = vector.load %arg5[%c0_140, %c16_141, %c0_142] : memref<1x32x128xbf16, #tpu.memory_space<vmem>>, vector<1x16x128xbf16>
    tpu.vector_store %arg5[%c0_140, %c16_141, %c0_142], %135 {strides = array<i32>} : memref<1x32x128xbf16, #tpu.memory_space<vmem>>, vector<1x16x128xbf16>,
    %c0_143 = arith.constant 0 : index
    %c8_144 = arith.constant 8 : index
    %c0_145 = arith.constant 0 : index
    %137 = vector.load %arg5[%c0_143, %c8_144, %c0_145] : memref<1x32x128xbf16, #tpu.memory_space<vmem>>, vector<1x16x128xbf16>
    %138 = tpu.concatenate %137, %135 in 2 : vector<1x16x128xbf16>, vector<1x16x128xbf16> -> vector<1x16x256xbf16>
    %139 = vector.shape_cast %138 : vector<1x16x256xbf16> to vector<16x256xbf16>
    %c4992 = arith.constant 4992 : index
    %c0_146 = arith.constant 0 : index
    %140 = vector.load %arg2[%c4992, %c0_146] : memref<6656x128xbf16, #tpu.memory_space<vmem>>, vector<256x128xbf16>
    %cst_147 = arith.constant dense<0.000000e+00> : vector<16x128xf32>
    %141 = tpu.matmul %139, %140, %cst_147 {dimension_numbers = #tpu.dot_dimension_numbers<[1], [0], [0], [1], [0, 0, 1, 1], [], []>} : vector<16x256xbf16>, vector<256x128xbf16>, vector<16x128xf32> -> vector<16x128xf32>
    %142 = vector.shape_cast %141 : vector<16x128xf32> to vector<1x16x128xf32>
    %c8_148 = arith.constant 8 : index
    %c0_149 = arith.constant 0 : index
    %143 = vector.load %arg3[%c8_148, %c0_149] : memref<24x128xf32, #tpu.memory_space<vmem>>, vector<1x128xf32>
    %144 = vector.shape_cast %143 : vector<1x128xf32> to vector<1x1x128xf32>
    %145 = vector.broadcast %144 : vector<1x1x128xf32> to vector<1x16x128xf32>
    %146 = arith.addf %142, %145 : vector<1x16x128xf32>
    %cst_150 = arith.constant 0.000000e+00 : f32
    %147 = vector.broadcast %cst_150 : f32 to vector<1x16x128xf32>
    %148 = arith.maximumf %146, %147 : vector<1x16x128xf32>
    %149 = arith.truncf %148 : vector<1x16x128xf32> to vector<1x16x128xbf16>
    %c0_151 = arith.constant 0 : index
    %c16_152 = arith.constant 16 : index
    %c0_153 = arith.constant 0 : index
    %150 = vector.load %arg5[%c0_151, %c16_152, %c0_153] : memref<1x32x128xbf16, #tpu.memory_space<vmem>>, vector<1x16x128xbf16>
    tpu.vector_store %arg5[%c0_151, %c16_152, %c0_153], %149 {strides = array<i32>} : memref<1x32x128xbf16, #tpu.memory_space<vmem>>, vector<1x16x128xbf16>,
    %c0_154 = arith.constant 0 : index
    %c8_155 = arith.constant 8 : index
    %c0_156 = arith.constant 0 : index
    %151 = vector.load %arg5[%c0_154, %c8_155, %c0_156] : memref<1x32x128xbf16, #tpu.memory_space<vmem>>, vector<1x16x128xbf16>
    %152 = tpu.concatenate %151, %149 in 2 : vector<1x16x128xbf16>, vector<1x16x128xbf16> -> vector<1x16x256xbf16>
    %153 = vector.shape_cast %152 : vector<1x16x256xbf16> to vector<16x256xbf16>
    %c5248 = arith.constant 5248 : index
    %c0_157 = arith.constant 0 : index
    %154 = vector.load %arg2[%c5248, %c0_157] : memref<6656x128xbf16, #tpu.memory_space<vmem>>, vector<256x128xbf16>
    %cst_158 = arith.constant dense<0.000000e+00> : vector<16x128xf32>
    %155 = tpu.matmul %153, %154, %cst_158 {dimension_numbers = #tpu.dot_dimension_numbers<[1], [0], [0], [1], [0, 0, 1, 1], [], []>} : vector<16x256xbf16>, vector<256x128xbf16>, vector<16x128xf32> -> vector<16x128xf32>
    %156 = vector.shape_cast %155 : vector<16x128xf32> to vector<1x16x128xf32>
    %c9 = arith.constant 9 : index
    %c0_159 = arith.constant 0 : index
    %157 = vector.load %arg3[%c9, %c0_159] : memref<24x128xf32, #tpu.memory_space<vmem>>, vector<1x128xf32>
    %158 = vector.shape_cast %157 : vector<1x128xf32> to vector<1x1x128xf32>
    %159 = vector.broadcast %158 : vector<1x1x128xf32> to vector<1x16x128xf32>
    %160 = arith.addf %156, %159 : vector<1x16x128xf32>
    %cst_160 = arith.constant 0.000000e+00 : f32
    %161 = vector.broadcast %cst_160 : f32 to vector<1x16x128xf32>
    %162 = arith.maximumf %160, %161 : vector<1x16x128xf32>
    %163 = arith.addf %162, %134 : vector<1x16x128xf32>
    %cst_161 = arith.constant 0.000000e+00 : f32
    %164 = vector.broadcast %cst_161 : f32 to vector<1x16x128xf32>
    %165 = arith.maximumf %163, %164 : vector<1x16x128xf32>
    %166 = arith.truncf %165 : vector<1x16x128xf32> to vector<1x16x128xbf16>
    %167 = vector.shape_cast %166 : vector<1x16x128xbf16> to vector<16x128xbf16>
    %c5504 = arith.constant 5504 : index
    %c0_162 = arith.constant 0 : index
    %168 = vector.load %arg2[%c5504, %c0_162] : memref<6656x128xbf16, #tpu.memory_space<vmem>>, vector<128x128xbf16>
    %cst_163 = arith.constant dense<0.000000e+00> : vector<16x128xf32>
    %169 = tpu.matmul %167, %168, %cst_163 {dimension_numbers = #tpu.dot_dimension_numbers<[1], [0], [0], [1], [0, 0, 1, 1], [], []>} : vector<16x128xbf16>, vector<128x128xbf16>, vector<16x128xf32> -> vector<16x128xf32>
    %170 = vector.shape_cast %169 : vector<16x128xf32> to vector<1x16x128xf32>
    %c10_164 = arith.constant 10 : index
    %c0_165 = arith.constant 0 : index
    %171 = vector.load %arg3[%c10_164, %c0_165] : memref<24x128xf32, #tpu.memory_space<vmem>>, vector<1x128xf32>
    %172 = vector.shape_cast %171 : vector<1x128xf32> to vector<1x1x128xf32>
    %173 = vector.broadcast %172 : vector<1x1x128xf32> to vector<1x16x128xf32>
    %174 = arith.addf %170, %173 : vector<1x16x128xf32>
    %cst_166 = arith.constant 0.000000e+00 : f32
    %175 = vector.broadcast %cst_166 : f32 to vector<1x16x128xf32>
    %176 = arith.maximumf %174, %175 : vector<1x16x128xf32>
    %177 = arith.truncf %176 : vector<1x16x128xf32> to vector<1x16x128xbf16>
    %178 = vector.shape_cast %177 : vector<1x16x128xbf16> to vector<16x128xbf16>
    %c5632 = arith.constant 5632 : index
    %c0_167 = arith.constant 0 : index
    %179 = vector.load %arg2[%c5632, %c0_167] : memref<6656x128xbf16, #tpu.memory_space<vmem>>, vector<128x128xbf16>
    %cst_168 = arith.constant dense<0.000000e+00> : vector<16x128xf32>
    %180 = tpu.matmul %178, %179, %cst_168 {dimension_numbers = #tpu.dot_dimension_numbers<[1], [0], [0], [1], [0, 0, 1, 1], [], []>} : vector<16x128xbf16>, vector<128x128xbf16>, vector<16x128xf32> -> vector<16x128xf32>
    %181 = vector.shape_cast %180 : vector<16x128xf32> to vector<1x16x128xf32>
    %c11_169 = arith.constant 11 : index
    %c0_170 = arith.constant 0 : index
    %182 = vector.load %arg3[%c11_169, %c0_170] : memref<24x128xf32, #tpu.memory_space<vmem>>, vector<1x128xf32>
    %183 = vector.shape_cast %182 : vector<1x128xf32> to vector<1x1x128xf32>
    %184 = vector.broadcast %183 : vector<1x1x128xf32> to vector<1x16x128xf32>
    %185 = arith.addf %181, %184 : vector<1x16x128xf32>
    %cst_171 = arith.constant 0.000000e+00 : f32
    %186 = vector.broadcast %cst_171 : f32 to vector<1x16x128xf32>
    %187 = arith.maximumf %185, %186 : vector<1x16x128xf32>
    %188 = arith.addf %187, %165 : vector<1x16x128xf32>
    %cst_172 = arith.constant 0.000000e+00 : f32
    %189 = vector.broadcast %cst_172 : f32 to vector<1x16x128xf32>
    %190 = arith.maximumf %188, %189 : vector<1x16x128xf32>
    %191 = arith.truncf %190 : vector<1x16x128xf32> to vector<1x16x128xbf16>
    %192 = vector.shape_cast %191 : vector<1x16x128xbf16> to vector<16x128xbf16>
    %c5760 = arith.constant 5760 : index
    %c0_173 = arith.constant 0 : index
    %193 = vector.load %arg2[%c5760, %c0_173] : memref<6656x128xbf16, #tpu.memory_space<vmem>>, vector<128x128xbf16>
    %cst_174 = arith.constant dense<0.000000e+00> : vector<16x128xf32>
    %194 = tpu.matmul %192, %193, %cst_174 {dimension_numbers = #tpu.dot_dimension_numbers<[1], [0], [0], [1], [0, 0, 1, 1], [], []>} : vector<16x128xbf16>, vector<128x128xbf16>, vector<16x128xf32> -> vector<16x128xf32>
    %195 = vector.shape_cast %194 : vector<16x128xf32> to vector<1x16x128xf32>
    %c12_175 = arith.constant 12 : index
    %c0_176 = arith.constant 0 : index
    %196 = vector.load %arg3[%c12_175, %c0_176] : memref<24x128xf32, #tpu.memory_space<vmem>>, vector<1x128xf32>
    %197 = vector.shape_cast %196 : vector<1x128xf32> to vector<1x1x128xf32>
    %198 = vector.broadcast %197 : vector<1x1x128xf32> to vector<1x16x128xf32>
    %199 = arith.addf %195, %198 : vector<1x16x128xf32>
    %cst_177 = arith.constant 0.000000e+00 : f32
    %200 = vector.broadcast %cst_177 : f32 to vector<1x16x128xf32>
    %201 = arith.maximumf %199, %200 : vector<1x16x128xf32>
    %202 = arith.truncf %201 : vector<1x16x128xf32> to vector<1x16x128xbf16>
    %203 = vector.shape_cast %202 : vector<1x16x128xbf16> to vector<16x128xbf16>
    %c5888 = arith.constant 5888 : index
    %c0_178 = arith.constant 0 : index
    %204 = vector.load %arg2[%c5888, %c0_178] : memref<6656x128xbf16, #tpu.memory_space<vmem>>, vector<128x128xbf16>
    %cst_179 = arith.constant dense<0.000000e+00> : vector<16x128xf32>
    %205 = tpu.matmul %203, %204, %cst_179 {dimension_numbers = #tpu.dot_dimension_numbers<[1], [0], [0], [1], [0, 0, 1, 1], [], []>} : vector<16x128xbf16>, vector<128x128xbf16>, vector<16x128xf32> -> vector<16x128xf32>
    %206 = vector.shape_cast %205 : vector<16x128xf32> to vector<1x16x128xf32>
    %c13_180 = arith.constant 13 : index
    %c0_181 = arith.constant 0 : index
    %207 = vector.load %arg3[%c13_180, %c0_181] : memref<24x128xf32, #tpu.memory_space<vmem>>, vector<1x128xf32>
    %208 = vector.shape_cast %207 : vector<1x128xf32> to vector<1x1x128xf32>
    %209 = vector.broadcast %208 : vector<1x1x128xf32> to vector<1x16x128xf32>
    %210 = arith.addf %206, %209 : vector<1x16x128xf32>
    %cst_182 = arith.constant 0.000000e+00 : f32
    %211 = vector.broadcast %cst_182 : f32 to vector<1x16x128xf32>
    %212 = arith.maximumf %210, %211 : vector<1x16x128xf32>
    %213 = arith.addf %212, %190 : vector<1x16x128xf32>
    %cst_183 = arith.constant 0.000000e+00 : f32
    %214 = vector.broadcast %cst_183 : f32 to vector<1x16x128xf32>
    %215 = arith.maximumf %213, %214 : vector<1x16x128xf32>
    %216 = arith.truncf %215 : vector<1x16x128xf32> to vector<1x16x128xbf16>
    %217 = vector.shape_cast %216 : vector<1x16x128xbf16> to vector<16x128xbf16>
    %c6016 = arith.constant 6016 : index
    %c0_184 = arith.constant 0 : index
    %218 = vector.load %arg2[%c6016, %c0_184] : memref<6656x128xbf16, #tpu.memory_space<vmem>>, vector<128x128xbf16>
    %cst_185 = arith.constant dense<0.000000e+00> : vector<16x128xf32>
    %219 = tpu.matmul %217, %218, %cst_185 {dimension_numbers = #tpu.dot_dimension_numbers<[1], [0], [0], [1], [0, 0, 1, 1], [], []>} : vector<16x128xbf16>, vector<128x128xbf16>, vector<16x128xf32> -> vector<16x128xf32>
    %220 = vector.shape_cast %219 : vector<16x128xf32> to vector<1x16x128xf32>
    %c14_186 = arith.constant 14 : index
    %c0_187 = arith.constant 0 : index
    %221 = vector.load %arg3[%c14_186, %c0_187] : memref<24x128xf32, #tpu.memory_space<vmem>>, vector<1x128xf32>
    %222 = vector.shape_cast %221 : vector<1x128xf32> to vector<1x1x128xf32>
    %223 = vector.broadcast %222 : vector<1x1x128xf32> to vector<1x16x128xf32>
    %224 = arith.addf %220, %223 : vector<1x16x128xf32>
    %cst_188 = arith.constant 0.000000e+00 : f32
    %225 = vector.broadcast %cst_188 : f32 to vector<1x16x128xf32>
    %226 = arith.maximumf %224, %225 : vector<1x16x128xf32>
    %227 = arith.truncf %226 : vector<1x16x128xf32> to vector<1x16x128xbf16>
    %228 = vector.shape_cast %227 : vector<1x16x128xbf16> to vector<16x128xbf16>
    %c6144 = arith.constant 6144 : index
    %c0_189 = arith.constant 0 : index
    %229 = vector.load %arg2[%c6144, %c0_189] : memref<6656x128xbf16, #tpu.memory_space<vmem>>, vector<128x128xbf16>
    %cst_190 = arith.constant dense<0.000000e+00> : vector<16x128xf32>
    %230 = tpu.matmul %228, %229, %cst_190 {dimension_numbers = #tpu.dot_dimension_numbers<[1], [0], [0], [1], [0, 0, 1, 1], [], []>} : vector<16x128xbf16>, vector<128x128xbf16>, vector<16x128xf32> -> vector<16x128xf32>
    %231 = vector.shape_cast %230 : vector<16x128xf32> to vector<1x16x128xf32>
    %c15_191 = arith.constant 15 : index
    %c0_192 = arith.constant 0 : index
    %232 = vector.load %arg3[%c15_191, %c0_192] : memref<24x128xf32, #tpu.memory_space<vmem>>, vector<1x128xf32>
    %233 = vector.shape_cast %232 : vector<1x128xf32> to vector<1x1x128xf32>
    %234 = vector.broadcast %233 : vector<1x1x128xf32> to vector<1x16x128xf32>
    %235 = arith.addf %231, %234 : vector<1x16x128xf32>
    %cst_193 = arith.constant 0.000000e+00 : f32
    %236 = vector.broadcast %cst_193 : f32 to vector<1x16x128xf32>
    %237 = arith.maximumf %235, %236 : vector<1x16x128xf32>
    %238 = arith.addf %237, %215 : vector<1x16x128xf32>
    %cst_194 = arith.constant 0.000000e+00 : f32
    %239 = vector.broadcast %cst_194 : f32 to vector<1x16x128xf32>
    %240 = arith.maximumf %238, %239 : vector<1x16x128xf32>
    %241 = arith.truncf %240 : vector<1x16x128xf32> to vector<1x16x128xbf16>
    %242 = vector.shape_cast %241 : vector<1x16x128xbf16> to vector<16x128xbf16>
    %c6272 = arith.constant 6272 : index
    %c0_195 = arith.constant 0 : index
    %243 = vector.load %arg2[%c6272, %c0_195] : memref<6656x128xbf16, #tpu.memory_space<vmem>>, vector<128x128xbf16>
    %cst_196 = arith.constant dense<0.000000e+00> : vector<16x128xf32>
    %244 = tpu.matmul %242, %243, %cst_196 {dimension_numbers = #tpu.dot_dimension_numbers<[1], [0], [0], [1], [0, 0, 1, 1], [], []>} : vector<16x128xbf16>, vector<128x128xbf16>, vector<16x128xf32> -> vector<16x128xf32>
    %245 = vector.shape_cast %244 : vector<16x128xf32> to vector<1x16x128xf32>
    %c16_197 = arith.constant 16 : index
    %c0_198 = arith.constant 0 : index
    %246 = vector.load %arg3[%c16_197, %c0_198] : memref<24x128xf32, #tpu.memory_space<vmem>>, vector<1x128xf32>
    %247 = vector.shape_cast %246 : vector<1x128xf32> to vector<1x1x128xf32>
    %248 = vector.broadcast %247 : vector<1x1x128xf32> to vector<1x16x128xf32>
    %249 = arith.addf %245, %248 : vector<1x16x128xf32>
    %cst_199 = arith.constant 0.000000e+00 : f32
    %250 = vector.broadcast %cst_199 : f32 to vector<1x16x128xf32>
    %251 = arith.maximumf %249, %250 : vector<1x16x128xf32>
    %252 = arith.truncf %251 : vector<1x16x128xf32> to vector<1x16x128xbf16>
    %253 = vector.shape_cast %252 : vector<1x16x128xbf16> to vector<16x128xbf16>
    %c6400 = arith.constant 6400 : index
    %c0_200 = arith.constant 0 : index
    %254 = vector.load %arg2[%c6400, %c0_200] : memref<6656x128xbf16, #tpu.memory_space<vmem>>, vector<128x128xbf16>
    %cst_201 = arith.constant dense<0.000000e+00> : vector<16x128xf32>
    %255 = tpu.matmul %253, %254, %cst_201 {dimension_numbers = #tpu.dot_dimension_numbers<[1], [0], [0], [1], [0, 0, 1, 1], [], []>} : vector<16x128xbf16>, vector<128x128xbf16>, vector<16x128xf32> -> vector<16x128xf32>
    %256 = vector.shape_cast %255 : vector<16x128xf32> to vector<1x16x128xf32>
    %c17 = arith.constant 17 : index
    %c0_202 = arith.constant 0 : index
    %257 = vector.load %arg3[%c17, %c0_202] : memref<24x128xf32, #tpu.memory_space<vmem>>, vector<1x128xf32>
    %258 = vector.shape_cast %257 : vector<1x128xf32> to vector<1x1x128xf32>
    %259 = vector.broadcast %258 : vector<1x1x128xf32> to vector<1x16x128xf32>
    %260 = arith.addf %256, %259 : vector<1x16x128xf32>
    %cst_203 = arith.constant 0.000000e+00 : f32
    %261 = vector.broadcast %cst_203 : f32 to vector<1x16x128xf32>
    %262 = arith.maximumf %260, %261 : vector<1x16x128xf32>
    %263 = arith.addf %262, %240 : vector<1x16x128xf32>
    %cst_204 = arith.constant 0.000000e+00 : f32
    %264 = vector.broadcast %cst_204 : f32 to vector<1x16x128xf32>
    %265 = arith.maximumf %263, %264 : vector<1x16x128xf32>
    %cst_205 = arith.constant dense<0.000000e+00> : vector<1x128xf32>
    %266 = vector.multi_reduction <add>, %265, %cst_205 [1] : vector<1x16x128xf32> to vector<1x128xf32>
    %267 = arith.truncf %266 : vector<1x128xf32> to vector<1x128xbf16>
    %c6528 = arith.constant 6528 : index
    %c0_206 = arith.constant 0 : index
    %268 = vector.load %arg2[%c6528, %c0_206] : memref<6656x128xbf16, #tpu.memory_space<vmem>>, vector<128x128xbf16>
    %cst_207 = arith.constant dense<0.000000e+00> : vector<1x128xf32>
    %269 = tpu.matmul %267, %268, %cst_207 {dimension_numbers = #tpu.dot_dimension_numbers<[1], [0], [0], [1], [0, 0, 1, 1], [], []>} : vector<1x128xbf16>, vector<128x128xbf16>, vector<1x128xf32> -> vector<1x128xf32>
    %c18 = arith.constant 18 : index
    %c0_208 = arith.constant 0 : index
    %270 = vector.load %arg3[%c18, %c0_208] : memref<24x128xf32, #tpu.memory_space<vmem>>, vector<1x128xf32>
    %271 = arith.addf %269, %270 : vector<1x128xf32>
    %272 = vector.shape_cast %271 : vector<1x128xf32> to vector<1x1x128xf32>
    %c0_209 = arith.constant 0 : index
    %c0_210 = arith.constant 0 : index
    %c0_211 = arith.constant 0 : index
    %273 = vector.load %arg4[%c0_209, %c0_210, %c0_211] : memref<1x1x128xf32, #tpu.memory_space<vmem>>, vector<1x1x128xf32>
    tpu.vector_store %arg4[%c0_209, %c0_210, %c0_211], %272 {strides = array<i32>} : memref<1x1x128xf32, #tpu.memory_space<vmem>>, vector<1x1x128xf32>,
    return
  }
  func.func @transform_0(%arg0: i32) -> (i32, i32, i32) {
    %c0_i32 = arith.constant 0 : i32
    %c0_i32_0 = arith.constant 0 : i32
    %c0_i32_1 = arith.constant 0 : i32
    return %arg0, %c0_i32, %c0_i32_0 : i32, i32, i32
  }
  func.func @transform_1(%arg0: i32) -> (i32, i32) {
    %c0_i32 = arith.constant 0 : i32
    %c0_i32_0 = arith.constant 0 : i32
    %c0_i32_1 = arith.constant 0 : i32
    return %c0_i32, %c0_i32_0 : i32, i32
  }
  func.func @transform_2(%arg0: i32) -> (i32, i32) {
    %c0_i32 = arith.constant 0 : i32
    %c0_i32_0 = arith.constant 0 : i32
    %c0_i32_1 = arith.constant 0 : i32
    return %c0_i32, %c0_i32_0 : i32, i32
  }
  func.func @transform_3(%arg0: i32) -> (i32, i32, i32) {
    %c0_i32 = arith.constant 0 : i32
    %c0_i32_0 = arith.constant 0 : i32
    %c0_i32_1 = arith.constant 0 : i32
    return %arg0, %c0_i32, %c0_i32_0 : i32, i32, i32
  }
}

</mosaic_0001>

<llo_original>
// kernel: _fwd.1
$region0: #{_fwd.1}
  #allocation0 [shape = 'u32[]', space=smem, size = 0x4, offset = 0x4, fixed_abs, tag = 'smem constant byte address 0x4 - core index']
  #allocation1 [shape = 'u32[72,128]{1,0:T(1,128)}', space=vmem, size = 0x9000, scoped, tag = 'internal scratch']
  #allocation2 [shape = 'bf16[1,32,128]{2,1,0:T(8,128)(2,1)}', space=vmem, size = 0x2000, scoped, tag = 'scratch operand']
  %s0 = inlined_call_operand.vmem [shape: bf16[2,16,256], index: 0, kind: input, shape index: {}]
  %s1 = inlined_call_operand.hbm [shape: bf16[6656,128], index: 1, kind: input, shape index: {}]
  %s2 = inlined_call_operand.hbm [shape: f32[24,128], index: 2, kind: input, shape index: {}]
  %s3 = inlined_call_operand.hbm [shape: f32[2,1,128], index: 3, kind: output, shape index: {}]
  %s4 = sld [smem:[#allocation0]]
  $region53: #{_fwd.1} parent=0
    _
  %s6 = ssub.s32 1, %s4
  %s7 = scalar_select 0, %s6, %s4
  $region1: #{_fwd.1} parent=0
    #allocation3 [shape = 'u8[1703936]{0}', space=vmem, size = 0x1a0000, scoped, tag = 'input window, operand 1, single buffered']
    #allocation4 [shape = 's32[2]{0}', space=sflag, size = 0x8, scoped, tag = 'scoped memory for _fwd.1']
    #allocation5 [shape = 's32[2]{0}', space=sflag, size = 0x8, scoped, tag = 'scoped memory for _fwd.1']
    #allocation6 [shape = 'u8[12288]{0}', space=vmem, size = 0x3000, scoped, tag = 'input window, operand 2, single buffered']
    #allocation7 [shape = 's32[1]{0}', space=sflag, size = 0x4, scoped, tag = 'scoped memory for _fwd.1']
    #allocation8 [shape = 'u8[1024]{0}', space=vmem, size = 0x400, scoped, tag = 'output window, operand 0']
    %8 = vsyncpa [#allocation4], 0
    %9 = vsyncpa [#allocation7], 0
    %10 = vsyncpa [#allocation5], 0
    %s11 = scalar_lea.sflag [#allocation5], 1
    %12 = vsyncpa %s11, 0
    loop: start=0, step=1, limit=4
    $region2: #{_fwd.1} parent=1 // loop_pre_header
      _
    $region3: #{_fwd.1} parent=1 // loop_header
      %s14 = sphi 0, %s18
      %p15 = scmp.ge.s32.totalorder %s14, 4
      %s24 = sphi 0, %s26
      %s27 = sphi 0, %s24
      %s28 = sphi 0, %s27
      %s44 = sphi 0, %s28
      %s48 = sphi 0, %s48
      %s50 = sphi 0, %s48
      %s51 = sphi 0, %s50
      %s65 = sphi 0, %s51
      %s69 = sphi 0, %s69
      %s71 = sphi 0, %s69
      %s72 = sphi 0, %s71
      %s86 = sphi 0, %s72
      %s92 = sphi 0, %s94
      %s95 = sphi 0, %s92
      %s96 = sphi 0, %s95
      %s112 = sphi 0, %s96
    $region4: #{_fwd.1} parent=1 // loop_header_branch
      %17 = sbr.rel (%p15) target = $region8
    $region5: #{_fwd.1} parent=1 // loop_body
      %s19 = ssub.s32 %s14, 1
      %s20 = ssub.s32 %s14, 2
      %s21 = sadd.s32 %s14, 1
      %s22 = ssub.s32 %s14, %s21
      %p23 = scmp.eq.s32.totalorder %s22, 0
      %s25 = sadd.s32 %s24, 1
      %s26 = scalar_select %p23, %s24, %s25
      %p29 = pneg %p23
      %p30 = scmp.eq.s32.totalorder %s14, 1
      %p31 = por %p29, %p30
      %p32 = scmp.ne.s32.totalorder %s24, %s27
      %p33 = scmp.eq.s32.totalorder %s14, 0
      %p34 = por %p32, %p33
      %p35 = scmp.ne.s32.totalorder %s24, %s27
      %p36 = scmp.eq.s32.totalorder %s19, 1
      %p37 = por %p35, %p36
      %p38 = scmp.ne.s32.totalorder %s27, %s28
      %p39 = scmp.eq.s32.totalorder %s19, 0
      %p40 = por %p38, %p39
      %p41 = scmp.ne.s32.totalorder %s27, %s28
      %p42 = scmp.eq.s32.totalorder %s20, 1
      %p43 = por %p41, %p42
      %p45 = scmp.ne.s32.totalorder %s28, %s44
      %p46 = scmp.eq.s32.totalorder %s20, 0
      %p47 = por %p45, %p46
      %s49 = sadd.s32 %s48, 1
      %p52 = scmp.eq.s32.totalorder %s14, 1
      %p53 = scmp.ne.s32.totalorder %s48, %s50
      %p54 = scmp.eq.s32.totalorder %s14, 0
      %p55 = por %p53, %p54
      %p56 = scmp.ne.s32.totalorder %s48, %s50
      %p57 = scmp.eq.s32.totalorder %s19, 1
      %p58 = por %p56, %p57
      %p59 = scmp.ne.s32.totalorder %s50, %s51
      %p60 = scmp.eq.s32.totalorder %s19, 0
      %p61 = por %p59, %p60
      %p62 = scmp.ne.s32.totalorder %s50, %s51
      %p63 = scmp.eq.s32.totalorder %s20, 1
      %p64 = por %p62, %p63
      %p66 = scmp.ne.s32.totalorder %s51, %s65
      %p67 = scmp.eq.s32.totalorder %s20, 0
      %p68 = por %p66, %p67
      %s70 = sadd.s32 %s69, 1
      %p73 = scmp.eq.s32.totalorder %s14, 1
      %p74 = scmp.ne.s32.totalorder %s69, %s71
      %p75 = scmp.eq.s32.totalorder %s14, 0
      %p76 = por %p74, %p75
      %p77 = scmp.ne.s32.totalorder %s69, %s71
      %p78 = scmp.eq.s32.totalorder %s19, 1
      %p79 = por %p77, %p78
      %p80 = scmp.ne.s32.totalorder %s71, %s72
      %p81 = scmp.eq.s32.totalorder %s19, 0
      %p82 = por %p80, %p81
      %p83 = scmp.ne.s32.totalorder %s71, %s72
      %p84 = scmp.eq.s32.totalorder %s20, 1
      %p85 = por %p83, %p84
      %p87 = scmp.ne.s32.totalorder %s72, %s86
      %p88 = scmp.eq.s32.totalorder %s20, 0
      %p89 = por %p87, %p88
      %s90 = ssub.s32 %s14, %s21
      %p91 = scmp.eq.s32.totalorder %s90, 0
      %s93 = sadd.s32 %s92, 1
      %s94 = scalar_select %p91, %s92, %s93
      %p97 = pneg %p91
      %p98 = scmp.eq.s32.totalorder %s14, 1
      %p99 = por %p97, %p98
      %p100 = scmp.ne.s32.totalorder %s92, %s95
      %p101 = scmp.eq.s32.totalorder %s14, 0
      %p102 = por %p100, %p101
      %p103 = scmp.ne.s32.totalorder %s92, %s95
      %p104 = scmp.eq.s32.totalorder %s19, 1
      %p105 = por %p103, %p104
      %p106 = scmp.ne.s32.totalorder %s95, %s96
      %p107 = scmp.eq.s32.totalorder %s19, 0
      %p108 = por %p106, %p107
      %p109 = scmp.ne.s32.totalorder %s95, %s96
      %p110 = scmp.eq.s32.totalorder %s20, 1
      %p111 = por %p109, %p110
      %p113 = scmp.ne.s32.totalorder %s96, %s112
      %p114 = scmp.eq.s32.totalorder %s20, 0
      %p115 = por %p113, %p114
      %p116 = scmp.le.s32.totalorder 1, %s14
      %p117 = scmp.lt.s32.totalorder %s14, 3
      %p118 = pnand %p116, %p117
      %p119 = pneg %p118
      // Predicated region
      $region9: #{_fwd.1} parent=5 // pred_check
        _
      $region10: #{_fwd.1} parent=5 // pred_check_branch
        %121 = sbr.rel (%p118) target = $region12
      $region11: #{_fwd.1} parent=5 // pred_region
        %s122 = ssub.s32 %s14, 1
        // Predicated region
        $region13: #{_fwd.1} parent=11 // pred_check
          %p123 = pneg %p61
        $region14: #{_fwd.1} parent=11 // pred_check_branch
          %125 = sbr.rel (%p123) target = $region16
        $region15: #{_fwd.1} parent=11 // pred_region
          %127 = vsyncadd [#allocation4], 0
          %s128 = sshll.u32 %s1, 4
          %s129 = int_to_ptr.hbm [resolvable:$true] %s128
          %s130 = sshll.u32 [#allocation3], 4
          %s131 = int_to_ptr.vmem [resolvable:$true] %s130
          %136 = dma.hbm_to_vmem [thread:$0]  %s129, 53248, %s131, [#allocation4], 64, 64, 4
        $region16: #{_fwd.1} parent=11 // pred_fallthru
          _
        // Predicated region
        $region17: #{_fwd.1} parent=11 // pred_check
          %p137 = pneg %p82
        $region18: #{_fwd.1} parent=11 // pred_check_branch
          %139 = sbr.rel (%p137) target = $region20
        $region19: #{_fwd.1} parent=11 // pred_region
          %141 = vsyncadd [#allocation7], 0
          %s142 = sshll.u32 %s2, 4
          %s143 = int_to_ptr.hbm [resolvable:$true] %s142
          %s144 = sshll.u32 [#allocation6], 4
          %s145 = int_to_ptr.vmem [resolvable:$true] %s144
          %150 = dma.hbm_to_vmem [thread:$0]  %s143, 384, %s145, [#allocation7], 128, 128, 8
        $region20: #{_fwd.1} parent=11 // pred_fallthru
          _
      $region12: #{_fwd.1} parent=5 // pred_fallthru
        _
      %p151 = scmp.lt.s32.totalorder %s14, 2
      // Predicated region
      $region21: #{_fwd.1} parent=5 // pred_check
        %p152 = pneg %p151
      $region22: #{_fwd.1} parent=5 // pred_check_branch
        %154 = sbr.rel (%p152) target = $region24
      $region23: #{_fwd.1} parent=5 // pred_region
        // Predicated region
        $region25: #{_fwd.1} parent=23 // pred_check
          %p155 = pneg %p34
        $region26: #{_fwd.1} parent=23 // pred_check_branch
          %157 = sbr.rel (%p155) target = $region28
        $region27: #{_fwd.1} parent=23 // pred_region
          %p158 = scmp.lt.s32.totalorder %s14, 1
          %s159 = scalar_select %p158, %s14, 1
          %s160 = smul.addr %s159, 4
          %s161 = smul.addr %s160, 4
          %s162 = scalar_lea.vmem %s0, %s161
        $region28: #{_fwd.1} parent=23 // pred_fallthru
          _
      $region24: #{_fwd.1} parent=5 // pred_fallthru
        _
      %p163 = scmp.le.s32.totalorder 1, %s14
      %p164 = scmp.lt.s32.totalorder %s14, 3
      %p165 = pnand %p163, %p164
      %p166 = pneg %p165
      // Predicated region
      $region29: #{_fwd.1} parent=5 // pred_check
        _
      $region30: #{_fwd.1} parent=5 // pred_check_branch
        %168 = sbr.rel (%p165) target = $region32
      $region31: #{_fwd.1} parent=5 // pred_region
        %s169 = ssub.s32 %s14, 1
        // Predicated region
        $region33: #{_fwd.1} parent=31 // pred_check
          %p170 = pneg %p61
        $region34: #{_fwd.1} parent=31 // pred_check_branch
          %172 = sbr.rel (%p170) target = $region36
        $region35: #{_fwd.1} parent=31 // pred_region
          %174 = dma.done [#allocation4], 53248
        $region36: #{_fwd.1} parent=31 // pred_fallthru
          _
        // Predicated region
        $region37: #{_fwd.1} parent=31 // pred_check
          %p175 = pneg %p82
        $region38: #{_fwd.1} parent=31 // pred_check_branch
          %177 = sbr.rel (%p175) target = $region40
        $region39: #{_fwd.1} parent=31 // pred_region
          %179 = dma.done [#allocation7], 384
        $region40: #{_fwd.1} parent=31 // pred_fallthru
          _
        %p180 = scmp.lt.s32.totalorder %s19, 1
        %s181 = scalar_select %p180, %s19, 1
        %s182 = smul.addr %s181, 4
        %s183 = smul.addr %s182, 4
        %s184 = scalar_lea.vmem %s0, %s183
        %p185 = pneg %p40
        %p186 = pneg %p37
        %p187 = pneg %p61
        %p188 = pneg %p58
        %p189 = pneg %p82
        %p190 = pneg %p79
        %p191 = pneg %p108
        %p192 = pneg %p105
        %s193 = sand.u32 %s95, 1
        %s194 = scalar_lea.sflag [#allocation5], %s193
        %s195 = sand.u32 %s95, 1
        %s196 = scalar_lea.vmem [#allocation8], %s195
        %p197 = scmp.lt.s32.totalorder %s19, 1
        %s198 = scalar_select %p197, %s19, 1
        %s199 = smul.addr %s198, 4
        %s200 = smul.addr %s199, 4
        %s201 = scalar_lea.vmem %s0, %s200
        %203 = vst [vmem:[#allocation2] sm:$0xf] 0
        %204 = vst [vmem:[#allocation2 + $0x4] sm:$0xf] 0
        %v205 = vld [vmem:[%s201] sm:$0xff]
        %v206 = vld [vmem:[%s201 + $0x8] sm:$0xff]
        %v207 = vld [vmem:[#allocation3] sm:$0xf]
        %v208 = vld [vmem:[#allocation3 + $0x4] sm:$0xf]
        %v209 = vld [vmem:[#allocation3 + $0x8] sm:$0xf]
        %v210 = vld [vmem:[#allocation3 + $0xc] sm:$0xf]
        %v211 = vld [vmem:[#allocation3 + $0x10] sm:$0xf]
        %v212 = vld [vmem:[#allocation3 + $0x14] sm:$0xf]
        %v213 = vld [vmem:[#allocation3 + $0x18] sm:$0xf]
        %v214 = vld [vmem:[#allocation3 + $0x1c] sm:$0xf]
        %v215 = vld [vmem:[#allocation3 + $0x20] sm:$0xf]
        %v216 = vld [vmem:[#allocation3 + $0x24] sm:$0xf]
        %v217 = vld [vmem:[#allocation3 + $0x28] sm:$0xf]
        %v218 = vld [vmem:[#allocation3 + $0x2c] sm:$0xf]
        %v219 = vld [vmem:[#allocation3 + $0x30] sm:$0xf]
        %v220 = vld [vmem:[#allocation3 + $0x34] sm:$0xf]
        %v221 = vld [vmem:[#allocation3 + $0x38] sm:$0xf]
        %v222 = vld [vmem:[#allocation3 + $0x3c] sm:$0xf]
        %v223 = vld [vmem:[#allocation3 + $0x40] sm:$0xf]
        %v224 = vld [vmem:[#allocation3 + $0x44] sm:$0xf]
        %v225 = vld [vmem:[#allocation3 + $0x48] sm:$0xf]
        %v226 = vld [vmem:[#allocation3 + $0x4c] sm:$0xf]
        %v227 = vld [vmem:[#allocation3 + $0x50] sm:$0xf]
        %v228 = vld [vmem:[#allocation3 + $0x54] sm:$0xf]
        %v229 = vld [vmem:[#allocation3 + $0x58] sm:$0xf]
        %v230 = vld [vmem:[#allocation3 + $0x5c] sm:$0xf]
        %v231 = vld [vmem:[#allocation3 + $0x60] sm:$0xf]
        %v232 = vld [vmem:[#allocation3 + $0x64] sm:$0xf]
        %v233 = vld [vmem:[#allocation3 + $0x68] sm:$0xf]
        %v234 = vld [vmem:[#allocation3 + $0x6c] sm:$0xf]
        %v235 = vld [vmem:[#allocation3 + $0x70] sm:$0xf]
        %v236 = vld [vmem:[#allocation3 + $0x74] sm:$0xf]
        %v237 = vld [vmem:[#allocation3 + $0x78] sm:$0xf]
        %v238 = vld [vmem:[#allocation3 + $0x7c] sm:$0xf]
        %v239 = vld [vmem:[#allocation6] sm:$0x1]
        %v240 = vperm.slane %v239, 0
        %v243 = vunpack.c.l.b16 %v205
        %v244 = vunpack.c.h.b16 %v205
        %v245 = vunpack.c.l.b16 %v206
        %v246 = vunpack.c.h.b16 %v206
        %v247 = vpack.c.b16 %v245, %v243
        %v248 = vpack.c.b16 %v246, %v244
        %v283 = vunpack.c.l.b16 %v207
        %v284 = vunpack.c.l.b16 %v208
        %v285 = vunpack.c.l.b16 %v209
        %v286 = vunpack.c.l.b16 %v210
        %v287 = vunpack.c.l.b16 %v211
        %v288 = vunpack.c.l.b16 %v212
        %v289 = vunpack.c.l.b16 %v213
        %v290 = vunpack.c.l.b16 %v214
        %v291 = vunpack.c.l.b16 %v215
        %v292 = vunpack.c.l.b16 %v216
        %v293 = vunpack.c.l.b16 %v217
        %v294 = vunpack.c.l.b16 %v218
        %v295 = vunpack.c.l.b16 %v219
        %v296 = vunpack.c.l.b16 %v220
        %v297 = vunpack.c.l.b16 %v221
        %v298 = vunpack.c.l.b16 %v222
        %v299 = vunpack.c.l.b16 %v223
        %v300 = vunpack.c.l.b16 %v224
        %v301 = vunpack.c.l.b16 %v225
        %v302 = vunpack.c.l.b16 %v226
        %v303 = vunpack.c.l.b16 %v227
        %v304 = vunpack.c.l.b16 %v228
        %v305 = vunpack.c.l.b16 %v229
        %v306 = vunpack.c.l.b16 %v230
        %v307 = vunpack.c.l.b16 %v231
        %v308 = vunpack.c.l.b16 %v232
        %v309 = vunpack.c.l.b16 %v233
        %v310 = vunpack.c.l.b16 %v234
        %v311 = vunpack.c.l.b16 %v235
        %v312 = vunpack.c.l.b16 %v236
        %v313 = vunpack.c.l.b16 %v237
        %v314 = vunpack.c.l.b16 %v238
        %v315 = vpack.c.b16 %v284, %v283
        %v316 = vpack.c.b16 %v286, %v285
        %v317 = vpack.c.b16 %v288, %v287
        %v318 = vpack.c.b16 %v290, %v289
        %v319 = vpack.c.b16 %v292, %v291
        %v320 = vpack.c.b16 %v294, %v293
        %v321 = vpack.c.b16 %v296, %v295
        %v322 = vpack.c.b16 %v298, %v297
        %v323 = vpack.c.b16 %v300, %v299
        %v324 = vpack.c.b16 %v302, %v301
        %v325 = vpack.c.b16 %v304, %v303
        %v326 = vpack.c.b16 %v306, %v305
        %v327 = vpack.c.b16 %v308, %v307
        %v328 = vpack.c.b16 %v310, %v309
        %v329 = vpack.c.b16 %v312, %v311
        %v330 = vpack.c.b16 %v314, %v313
        %347 = vmatpush.bf16.msra.mxu0 %v322
        %348 = vmatpush.bf16.msra.mxu0 %v321
        %349 = vmatpush.bf16.msra.mxu0 %v320
        %350 = vmatpush.bf16.msra.mxu0 %v319
        %351 = vmatpush.bf16.msra.mxu0 %v318
        %352 = vmatpush.bf16.msra.mxu0 %v317
        %353 = vmatpush.bf16.msra.mxu0 %v316
        %354 = vmatpush.bf16.msra.mxu0 %v315
        %355 = vmatmul.bf16.gmra.mxu0 %v247
        %v356 = vpop.f32.mrf.mxu0
        %v357 = vadd.f32 %v240, %v356
        %v358 = vpop.f32.mrf.mxu0
        %v359 = vadd.f32 %v240, %v358
        %360 = vdwg.mxu0
        %361 = vmatpush.bf16.msra.mxu0 %v330
        %362 = vmatpush.bf16.msra.mxu0 %v329
        %363 = vmatpush.bf16.msra.mxu0 %v328
        %364 = vmatpush.bf16.msra.mxu0 %v327
        %365 = vmatpush.bf16.msra.mxu0 %v326
        %366 = vmatpush.bf16.msra.mxu0 %v325
        %367 = vmatpush.bf16.msra.mxu0 %v324
        %368 = vmatpush.bf16.msra.mxu0 %v323
        %369 = vmatmul.bf16.gmra.mxu0 %v248
        %v370 = vpop.f32.mrf.mxu0
        %v371 = vadd.f32 %v357, %v370
        %v372 = vpop.f32.mrf.mxu0
        %v373 = vadd.f32 %v359, %v372
        %374 = vdwg.mxu0
        %v375 = vpack.c.bf16 %v371, %v371
        %v376 = vpack.c.bf16 %v373, %v373
        %377 = vst [vmem:[#allocation2 + $0x8] sm:$0xf] %v375
        %378 = vst [vmem:[#allocation2 + $0xc] sm:$0xf] %v376
        %v379 = vld [vmem:[#allocation2 + $0x4] sm:$0xe]
        %v380 = vld [vmem:[#allocation2 + $0x8] sm:$0xf]
        %v381 = vld [vmem:[#allocation2 + $0xc] sm:$0x1]
        %v382 = vld [vmem:[#allocation2 + $0xc] sm:$0x3]
        %v383 = vld [vmem:[#allocation2 + $0x4] sm:$0xc]
        %v384 = vld [vmem:[#allocation2 + $0xc] sm:$0x7]
        %v385 = vld [vmem:[#allocation2 + $0x4] sm:$0x8]
        %v386 = vld [vmem:[#allocation2 + $0xc] sm:$0xf]
        %v390 = vunpack.c.l.b16 %v379
        %v391 = vunpack.c.l.b16 %v380
        %v392 = vunpack.c.l.b16 %v381
        %v393 = vpack.c.b16 %v391, %v390
        %v394 = vpack.c.b16 %v392, %v392
        %v396 = vunpack.c.l.b16 %v382
        %v397 = vpack.c.b16 %v396, %v396
        %vm398 = vsmask.f32 7424
        %v400 = vshrl.u32 %v393, 16
        %v402 = vshll.u32 %v393, 16
        %v404 = vrot.slane %v402, 1
        %v405 = vor.u32 %v400, %v404
        %v407 = vshll.u32 %v397, 16
        %v409 = vrot.slane %v407, 1
        %v410 = vsel %vm398, %v405, %v409
        %v411 = vshrl.u32 %v397, 16
        %v413 = vor.u32 %v411, %v409
        %v415 = vunpack.c.l.b16 %v383
        %v416 = vpack.c.b16 %v391, %v415
        %vm417 = vcmask 1046528
        %v418 = vrot.slane %v416, 1
        %v419 = vrot.slane %v397, 1
        %v420 = vsel %vm417, %v418, %v419
        %v422 = vunpack.c.l.b16 %v384
        %v423 = vpack.c.b16 %v422, %v422
        %vm424 = vsmask.f32 6400
        %v426 = vshrl.u32 %v416, 16
        %v428 = vrot.slane %v426, 1
        %v429 = vshll.u32 %v416, 16
        %v431 = vrot.slane %v429, 2
        %v432 = vor.u32 %v428, %v431
        %v434 = vshrl.u32 %v423, 16
        %v436 = vrot.slane %v434, 1
        %v437 = vshll.u32 %v423, 16
        %v439 = vrot.slane %v437, 2
        %v440 = vor.u32 %v436, %v439
        %v441 = vsel %vm424, %v432, %v440
        %v443 = vunpack.c.l.b16 %v385
        %v444 = vpack.c.b16 %v391, %v443
        %vm445 = vcmask 1045504
        %v446 = vrot.slane %v444, 2
        %v447 = vrot.slane %v423, 2
        %v448 = vsel %vm445, %v446, %v447
        %v450 = vunpack.c.l.b16 %v386
        %v451 = vpack.c.b16 %v450, %v450
        %vm452 = vsmask.f32 5376
        %v454 = vshrl.u32 %v444, 16
        %v456 = vrot.slane %v454, 2
        %v457 = vshll.u32 %v444, 16
        %v459 = vrot.slane %v457, 3
        %v460 = vor.u32 %v456, %v459
        %v462 = vshrl.u32 %v451, 16
        %v464 = vrot.slane %v462, 2
        %v465 = vshll.u32 %v451, 16
        %v467 = vrot.slane %v465, 3
        %v468 = vor.u32 %v464, %v467
        %v469 = vsel %vm452, %v460, %v468
        %v472 = vunpack.c.l.b16 %v375
        %v473 = vunpack.c.l.b16 %v376
        %v474 = vpack.c.b16 %v473, %v472
        %v475 = vrot.slane %v474, 7
        %v476 = vld [vmem:[#allocation3 + $0x80] sm:$0xf]
        %v477 = vld [vmem:[#allocation3 + $0x84] sm:$0xf]
        %v478 = vld [vmem:[#allocation3 + $0x88] sm:$0xf]
        %v479 = vld [vmem:[#allocation3 + $0x8c] sm:$0xf]
        %v480 = vld [vmem:[#allocation3 + $0x90] sm:$0xf]
        %v481 = vld [vmem:[#allocation3 + $0x94] sm:$0xf]
        %v482 = vld [vmem:[#allocation3 + $0x98] sm:$0xf]
        %v483 = vld [vmem:[#allocation3 + $0x9c] sm:$0xf]
        %v484 = vld [vmem:[#allocation3 + $0xa0] sm:$0xf]
        %v485 = vld [vmem:[#allocation3 + $0xa4] sm:$0xf]
        %v486 = vld [vmem:[#allocation3 + $0xa8] sm:$0xf]
        %v487 = vld [vmem:[#allocation3 + $0xac] sm:$0xf]
        %v488 = vld [vmem:[#allocation3 + $0xb0] sm:$0xf]
        %v489 = vld [vmem:[#allocation3 + $0xb4] sm:$0xf]
        %v490 = vld [vmem:[#allocation3 + $0xb8] sm:$0xf]
        %v491 = vld [vmem:[#allocation3 + $0xbc] sm:$0xf]
        %v492 = vld [vmem:[#allocation3 + $0xc0] sm:$0xf]
        %v493 = vld [vmem:[#allocation3 + $0xc4] sm:$0xf]
        %v494 = vld [vmem:[#allocation3 + $0xc8] sm:$0xf]
        %v495 = vld [vmem:[#allocation3 + $0xcc] sm:$0xf]
        %v496 = vld [vmem:[#allocation3 + $0xd0] sm:$0xf]
        %v497 = vld [vmem:[#allocation3 + $0xd4] sm:$0xf]
        %v498 = vld [vmem:[#allocation3 + $0xd8] sm:$0xf]
        %v499 = vld [vmem:[#allocation3 + $0xdc] sm:$0xf]
        %v500 = vld [vmem:[#allocation3 + $0xe0] sm:$0xf]
        %v501 = vld [vmem:[#allocation3 + $0xe4] sm:$0xf]
        %v502 = vld [vmem:[#allocation3 + $0xe8] sm:$0xf]
        %v503 = vld [vmem:[#allocation3 + $0xec] sm:$0xf]
        %v504 = vld [vmem:[#allocation3 + $0xf0] sm:$0xf]
        %v505 = vld [vmem:[#allocation3 + $0xf4] sm:$0xf]
        %v506 = vld [vmem:[#allocation3 + $0xf8] sm:$0xf]
        %v507 = vld [vmem:[#allocation3 + $0xfc] sm:$0xf]
        %v508 = vld [vmem:[#allocation3 + $0x100] sm:$0xf]
        %v509 = vld [vmem:[#allocation3 + $0x104] sm:$0xf]
        %v510 = vld [vmem:[#allocation3 + $0x108] sm:$0xf]
        %v511 = vld [vmem:[#allocation3 + $0x10c] sm:$0xf]
        %v512 = vld [vmem:[#allocation3 + $0x110] sm:$0xf]
        %v513 = vld [vmem:[#allocation3 + $0x114] sm:$0xf]
        %v514 = vld [vmem:[#allocation3 + $0x118] sm:$0xf]
        %v515 = vld [vmem:[#allocation3 + $0x11c] sm:$0xf]
        %v516 = vld [vmem:[#allocation3 + $0x120] sm:$0xf]
        %v517 = vld [vmem:[#allocation3 + $0x124] sm:$0xf]
        %v518 = vld [vmem:[#allocation3 + $0x128] sm:$0xf]
        %v519 = vld [vmem:[#allocation3 + $0x12c] sm:$0xf]
        %v520 = vld [vmem:[#allocation3 + $0x130] sm:$0xf]
        %v521 = vld [vmem:[#allocation3 + $0x134] sm:$0xf]
        %v522 = vld [vmem:[#allocation3 + $0x138] sm:$0xf]
        %v523 = vld [vmem:[#allocation3 + $0x13c] sm:$0xf]
        %v524 = vld [vmem:[#allocation3 + $0x140] sm:$0xf]
        %v525 = vld [vmem:[#allocation3 + $0x144] sm:$0xf]
        %v526 = vld [vmem:[#allocation3 + $0x148] sm:$0xf]
        %v527 = vld [vmem:[#allocation3 + $0x14c] sm:$0xf]
        %v528 = vld [vmem:[#allocation3 + $0x150] sm:$0xf]
        %v529 = vld [vmem:[#allocation3 + $0x154] sm:$0xf]
        %v530 = vld [vmem:[#allocation3 + $0x158] sm:$0xf]
        %v531 = vld [vmem:[#allocation3 + $0x15c] sm:$0xf]
        %v532 = vld [vmem:[#allocation3 + $0x160] sm:$0xf]
        %v533 = vld [vmem:[#allocation3 + $0x164] sm:$0xf]
        %v534 = vld [vmem:[#allocation3 + $0x168] sm:$0xf]
        %v535 = vld [vmem:[#allocation3 + $0x16c] sm:$0xf]
        %v536 = vld [vmem:[#allocation3 + $0x170] sm:$0xf]
        %v537 = vld [vmem:[#allocation3 + $0x174] sm:$0xf]
        %v538 = vld [vmem:[#allocation3 + $0x178] sm:$0xf]
        %v539 = vld [vmem:[#allocation3 + $0x17c] sm:$0xf]
        %v540 = vld [vmem:[#allocation3 + $0x180] sm:$0xf]
        %v541 = vld [vmem:[#allocation3 + $0x184] sm:$0xf]
        %v542 = vld [vmem:[#allocation3 + $0x188] sm:$0xf]
        %v543 = vld [vmem:[#allocation3 + $0x18c] sm:$0xf]
        %v544 = vld [vmem:[#allocation3 + $0x190] sm:$0xf]
        %v545 = vld [vmem:[#allocation3 + $0x194] sm:$0xf]
        %v546 = vld [vmem:[#allocation3 + $0x198] sm:$0xf]
        %v547 = vld [vmem:[#allocation3 + $0x19c] sm:$0xf]
        %v548 = vld [vmem:[#allocation3 + $0x1a0] sm:$0xf]
        %v549 = vld [vmem:[#allocation3 + $0x1a4] sm:$0xf]
        %v550 = vld [vmem:[#allocation3 + $0x1a8] sm:$0xf]
        %v551 = vld [vmem:[#allocation3 + $0x1ac] sm:$0xf]
        %v552 = vld [vmem:[#allocation3 + $0x1b0] sm:$0xf]
        %v553 = vld [vmem:[#allocation3 + $0x1b4] sm:$0xf]
        %v554 = vld [vmem:[#allocation3 + $0x1b8] sm:$0xf]
        %v555 = vld [vmem:[#allocation3 + $0x1bc] sm:$0xf]
        %v556 = vld [vmem:[#allocation3 + $0x1c0] sm:$0xf]
        %v557 = vld [vmem:[#allocation3 + $0x1c4] sm:$0xf]
        %v558 = vld [vmem:[#allocation3 + $0x1c8] sm:$0xf]
        %v559 = vld [vmem:[#allocation3 + $0x1cc] sm:$0xf]
        %v560 = vld [vmem:[#allocation3 + $0x1d0] sm:$0xf]
        %v561 = vld [vmem:[#allocation3 + $0x1d4] sm:$0xf]
        %v562 = vld [vmem:[#allocation3 + $0x1d8] sm:$0xf]
        %v563 = vld [vmem:[#allocation3 + $0x1dc] sm:$0xf]
        %v564 = vld [vmem:[#allocation3 + $0x1e0] sm:$0xf]
        %v565 = vld [vmem:[#allocation3 + $0x1e4] sm:$0xf]
        %v566 = vld [vmem:[#allocation3 + $0x1e8] sm:$0xf]
        %v567 = vld [vmem:[#allocation3 + $0x1ec] sm:$0xf]
        %v568 = vld [vmem:[#allocation3 + $0x1f0] sm:$0xf]
        %v569 = vld [vmem:[#allocation3 + $0x1f4] sm:$0xf]
        %v570 = vld [vmem:[#allocation3 + $0x1f8] sm:$0xf]
        %v571 = vld [vmem:[#allocation3 + $0x1fc] sm:$0xf]
        %v572 = vld [vmem:[#allocation3 + $0x200] sm:$0xf]
        %v573 = vld [vmem:[#allocation3 + $0x204] sm:$0xf]
        %v574 = vld [vmem:[#allocation3 + $0x208] sm:$0xf]
        %v575 = vld [vmem:[#allocation3 + $0x20c] sm:$0xf]
        %v576 = vld [vmem:[#allocation3 + $0x210] sm:$0xf]
        %v577 = vld [vmem:[#allocation3 + $0x214] sm:$0xf]
        %v578 = vld [vmem:[#allocation3 + $0x218] sm:$0xf]
        %v579 = vld [vmem:[#allocation3 + $0x21c] sm:$0xf]
        %v580 = vld [vmem:[#allocation3 + $0x220] sm:$0xf]
        %v581 = vld [vmem:[#allocation3 + $0x224] sm:$0xf]
        %v582 = vld [vmem:[#allocation3 + $0x228] sm:$0xf]
        %v583 = vld [vmem:[#allocation3 + $0x22c] sm:$0xf]
        %v584 = vld [vmem:[#allocation3 + $0x230] sm:$0xf]
        %v585 = vld [vmem:[#allocation3 + $0x234] sm:$0xf]
        %v586 = vld [vmem:[#allocation3 + $0x238] sm:$0xf]
        %v587 = vld [vmem:[#allocation3 + $0x23c] sm:$0xf]
        %v588 = vrot.slane %v393, 1
        %v589 = vrot.slane %v394, 1
        %v590 = vsel %vm417, %v588, %v589
        %v591 = vrot.slane %v410, 1
        %v592 = vrot.slane %v413, 1
        %v593 = vsel %vm417, %v591, %v592
        %v594 = vrot.slane %v420, 1
        %v595 = vrot.slane %v419, 1
        %v596 = vsel %vm417, %v594, %v595
        %v597 = vrot.slane %v441, 1
        %v598 = vrot.slane %v440, 1
        %v599 = vsel %vm417, %v597, %v598
        %v600 = vrot.slane %v448, 1
        %v601 = vrot.slane %v447, 1
        %v602 = vsel %vm417, %v600, %v601
        %v603 = vrot.slane %v469, 1
        %v604 = vrot.slane %v468, 1
        %v605 = vsel %vm417, %v603, %v604
        %v606 = vrot.slane %v475, 1
        %v607 = vsel %vm417, %v606, %v606
        %v727 = vunpack.c.l.b16 %v476
        %v728 = vunpack.c.l.b16 %v477
        %v729 = vunpack.c.l.b16 %v478
        %v730 = vunpack.c.l.b16 %v479
        %v731 = vunpack.c.l.b16 %v480
        %v732 = vunpack.c.l.b16 %v481
        %v733 = vunpack.c.l.b16 %v482
        %v734 = vunpack.c.l.b16 %v483
        %v735 = vunpack.c.l.b16 %v484
        %v736 = vunpack.c.l.b16 %v485
        %v737 = vunpack.c.l.b16 %v486
        %v738 = vunpack.c.l.b16 %v487
        %v739 = vunpack.c.l.b16 %v488
        %v740 = vunpack.c.l.b16 %v489
        %v741 = vunpack.c.l.b16 %v490
        %v742 = vunpack.c.l.b16 %v491
        %v743 = vunpack.c.l.b16 %v492
        %v744 = vunpack.c.l.b16 %v493
        %v745 = vunpack.c.l.b16 %v494
        %v746 = vunpack.c.l.b16 %v495
        %v747 = vunpack.c.l.b16 %v496
        %v748 = vunpack.c.l.b16 %v497
        %v749 = vunpack.c.l.b16 %v498
        %v750 = vunpack.c.l.b16 %v499
        %v751 = vunpack.c.l.b16 %v500
        %v752 = vunpack.c.l.b16 %v501
        %v753 = vunpack.c.l.b16 %v502
        %v754 = vunpack.c.l.b16 %v503
        %v755 = vunpack.c.l.b16 %v504
        %v756 = vunpack.c.l.b16 %v505
        %v757 = vunpack.c.l.b16 %v506
        %v758 = vunpack.c.l.b16 %v507
        %v759 = vunpack.c.l.b16 %v508
        %v760 = vunpack.c.l.b16 %v509
        %v761 = vunpack.c.l.b16 %v510
        %v762 = vunpack.c.l.b16 %v511
        %v763 = vunpack.c.l.b16 %v512
        %v764 = vunpack.c.l.b16 %v513
        %v765 = vunpack.c.l.b16 %v514
        %v766 = vunpack.c.l.b16 %v515
        %v767 = vunpack.c.l.b16 %v516
        %v768 = vunpack.c.l.b16 %v517
        %v769 = vunpack.c.l.b16 %v518
        %v770 = vunpack.c.l.b16 %v519
        %v771 = vunpack.c.l.b16 %v520
        %v772 = vunpack.c.l.b16 %v521
        %v773 = vunpack.c.l.b16 %v522
        %v774 = vunpack.c.l.b16 %v523
        %v775 = vunpack.c.l.b16 %v524
        %v776 = vunpack.c.l.b16 %v525
        %v777 = vunpack.c.l.b16 %v526
        %v778 = vunpack.c.l.b16 %v527
        %v779 = vunpack.c.l.b16 %v528
        %v780 = vunpack.c.l.b16 %v529
        %v781 = vunpack.c.l.b16 %v530
        %v782 = vunpack.c.l.b16 %v531
        %v783 = vunpack.c.l.b16 %v532
        %v784 = vunpack.c.l.b16 %v533
        %v785 = vunpack.c.l.b16 %v534
        %v786 = vunpack.c.l.b16 %v535
        %v787 = vunpack.c.l.b16 %v536
        %v788 = vunpack.c.l.b16 %v537
        %v789 = vunpack.c.l.b16 %v538
        %v790 = vunpack.c.l.b16 %v539
        %v791 = vunpack.c.l.b16 %v540
        %v792 = vunpack.c.l.b16 %v541
        %v793 = vunpack.c.l.b16 %v542
        %v794 = vunpack.c.l.b16 %v543
        %v795 = vunpack.c.l.b16 %v544
        %v796 = vunpack.c.l.b16 %v545
        %v797 = vunpack.c.l.b16 %v546
        %v798 = vunpack.c.l.b16 %v547
        %v799 = vunpack.c.l.b16 %v548
        %v800 = vunpack.c.l.b16 %v549
        %v801 = vunpack.c.l.b16 %v550
        %v802 = vunpack.c.l.b16 %v551
        %v803 = vunpack.c.l.b16 %v552
        %v804 = vunpack.c.l.b16 %v553
        %v805 = vunpack.c.l.b16 %v554
        %v806 = vunpack.c.l.b16 %v555
        %v807 = vunpack.c.l.b16 %v556
        %v808 = vunpack.c.l.b16 %v557
        %v809 = vunpack.c.l.b16 %v558
        %v810 = vunpack.c.l.b16 %v559
        %v811 = vunpack.c.l.b16 %v560
        %v812 = vunpack.c.l.b16 %v561
        %v813 = vunpack.c.l.b16 %v562
        %v814 = vunpack.c.l.b16 %v563
        %v815 = vunpack.c.l.b16 %v564
        %v816 = vunpack.c.l.b16 %v565
        %v817 = vunpack.c.l.b16 %v566
        %v818 = vunpack.c.l.b16 %v567
        %v819 = vunpack.c.l.b16 %v568
        %v820 = vunpack.c.l.b16 %v569
        %v821 = vunpack.c.l.b16 %v570
        %v822 = vunpack.c.l.b16 %v571
        %v823 = vunpack.c.l.b16 %v572
        %v824 = vunpack.c.l.b16 %v573
        %v825 = vunpack.c.l.b16 %v574
        %v826 = vunpack.c.l.b16 %v575
        %v827 = vunpack.c.l.b16 %v576
        %v828 = vunpack.c.l.b16 %v577
        %v829 = vunpack.c.l.b16 %v578
        %v830 = vunpack.c.l.b16 %v579
        %v831 = vunpack.c.l.b16 %v580
        %v832 = vunpack.c.l.b16 %v581
        %v833 = vunpack.c.l.b16 %v582
        %v834 = vunpack.c.l.b16 %v583
        %v835 = vunpack.c.l.b16 %v584
        %v836 = vunpack.c.l.b16 %v585
        %v837 = vunpack.c.l.b16 %v586
        %v838 = vunpack.c.l.b16 %v587
        %v839 = vpack.c.b16 %v728, %v727
        %v840 = vpack.c.b16 %v730, %v729
        %v841 = vpack.c.b16 %v732, %v731
        %v842 = vpack.c.b16 %v734, %v733
        %v843 = vpack.c.b16 %v736, %v735
        %v844 = vpack.c.b16 %v738, %v737
        %v845 = vpack.c.b16 %v740, %v739
        %v846 = vpack.c.b16 %v742, %v741
        %v847 = vpack.c.b16 %v744, %v743
        %v848 = vpack.c.b16 %v746, %v745
        %v849 = vpack.c.b16 %v748, %v747
        %v850 = vpack.c.b16 %v750, %v749
        %v851 = vpack.c.b16 %v752, %v751
        %v852 = vpack.c.b16 %v754, %v753
        %v853 = vpack.c.b16 %v756, %v755
        %v854 = vpack.c.b16 %v758, %v757
        %v855 = vpack.c.b16 %v760, %v759
        %v856 = vpack.c.b16 %v762, %v761
        %v857 = vpack.c.b16 %v764, %v763
        %v858 = vpack.c.b16 %v766, %v765
        %v859 = vpack.c.b16 %v768, %v767
        %v860 = vpack.c.b16 %v770, %v769
        %v861 = vpack.c.b16 %v772, %v771
        %v862 = vpack.c.b16 %v774, %v773
        %v863 = vpack.c.b16 %v776, %v775
        %v864 = vpack.c.b16 %v778, %v777
        %v865 = vpack.c.b16 %v780, %v779
        %v866 = vpack.c.b16 %v782, %v781
        %v867 = vpack.c.b16 %v784, %v783
        %v868 = vpack.c.b16 %v786, %v785
        %v869 = vpack.c.b16 %v788, %v787
        %v870 = vpack.c.b16 %v790, %v789
        %v871 = vpack.c.b16 %v792, %v791
        %v872 = vpack.c.b16 %v794, %v793
        %v873 = vpack.c.b16 %v796, %v795
        %v874 = vpack.c.b16 %v798, %v797
        %v875 = vpack.c.b16 %v800, %v799
        %v876 = vpack.c.b16 %v802, %v801
        %v877 = vpack.c.b16 %v804, %v803
        %v878 = vpack.c.b16 %v806, %v805
        %v879 = vpack.c.b16 %v808, %v807
        %v880 = vpack.c.b16 %v810, %v809
        %v881 = vpack.c.b16 %v812, %v811
        %v882 = vpack.c.b16 %v814, %v813
        %v883 = vpack.c.b16 %v816, %v815
        %v884 = vpack.c.b16 %v818, %v817
        %v885 = vpack.c.b16 %v820, %v819
        %v886 = vpack.c.b16 %v822, %v821
        %v887 = vpack.c.b16 %v824, %v823
        %v888 = vpack.c.b16 %v826, %v825
        %v889 = vpack.c.b16 %v828, %v827
        %v890 = vpack.c.b16 %v830, %v829
        %v891 = vpack.c.b16 %v832, %v831
        %v892 = vpack.c.b16 %v834, %v833
        %v893 = vpack.c.b16 %v836, %v835
        %v894 = vpack.c.b16 %v838, %v837
        %951 = vmatpush.bf16.msra.mxu0 %v846
        %952 = vmatpush.bf16.msra.mxu0 %v845
        %953 = vmatpush.bf16.msra.mxu0 %v844
        %954 = vmatpush.bf16.msra.mxu0 %v843
        %955 = vmatpush.bf16.msra.mxu0 %v842
        %956 = vmatpush.bf16.msra.mxu0 %v841
        %957 = vmatpush.bf16.msra.mxu0 %v840
        %958 = vmatpush.bf16.msra.mxu0 %v839
        %959 = vmatmul.bf16.gmra.mxu0 %v590
        %v960 = vpop.f32.mrf.mxu0
        %v961 = vadd.f32 0.0, %v960
        %v962 = vpop.f32.mrf.mxu0
        %v963 = vadd.f32 0.0, %v962
        %964 = vdwg.mxu0
        %965 = vmatpush.bf16.msra.mxu0 %v854
        %966 = vmatpush.bf16.msra.mxu0 %v853
        %967 = vmatpush.bf16.msra.mxu0 %v852
        %968 = vmatpush.bf16.msra.mxu0 %v851
        %969 = vmatpush.bf16.msra.mxu0 %v850
        %970 = vmatpush.bf16.msra.mxu0 %v849
        %971 = vmatpush.bf16.msra.mxu0 %v848
        %972 = vmatpush.bf16.msra.mxu0 %v847
        %973 = vmatmul.bf16.gmra.mxu0 %v593
        %v974 = vpop.f32.mrf.mxu0
        %v975 = vadd.f32 %v961, %v974
        %v976 = vpop.f32.mrf.mxu0
        %v977 = vadd.f32 %v963, %v976
        %978 = vdwg.mxu0
        %979 = vmatpush.bf16.msra.mxu0 %v862
        %980 = vmatpush.bf16.msra.mxu0 %v861
        %981 = vmatpush.bf16.msra.mxu0 %v860
        %982 = vmatpush.bf16.msra.mxu0 %v859
        %983 = vmatpush.bf16.msra.mxu0 %v858
        %984 = vmatpush.bf16.msra.mxu0 %v857
        %985 = vmatpush.bf16.msra.mxu0 %v856
        %986 = vmatpush.bf16.msra.mxu0 %v855
        %987 = vmatmul.bf16.gmra.mxu0 %v596
        %v988 = vpop.f32.mrf.mxu0
        %v989 = vadd.f32 %v975, %v988
        %v990 = vpop.f32.mrf.mxu0
        %v991 = vadd.f32 %v977, %v990
        %992 = vdwg.mxu0
        %993 = vmatpush.bf16.msra.mxu0 %v870
        %994 = vmatpush.bf16.msra.mxu0 %v869
        %995 = vmatpush.bf16.msra.mxu0 %v868
        %996 = vmatpush.bf16.msra.mxu0 %v867
        %997 = vmatpush.bf16.msra.mxu0 %v866
        %998 = vmatpush.bf16.msra.mxu0 %v865
        %999 = vmatpush.bf16.msra.mxu0 %v864
        %1000 = vmatpush.bf16.msra.mxu0 %v863
        %1001 = vmatmul.bf16.gmra.mxu0 %v599
        %v1002 = vpop.f32.mrf.mxu0
        %v1003 = vadd.f32 %v989, %v1002
        %v1004 = vpop.f32.mrf.mxu0
        %v1005 = vadd.f32 %v991, %v1004
        %1006 = vdwg.mxu0
        %1007 = vmatpush.bf16.msra.mxu0 %v878
        %1008 = vmatpush.bf16.msra.mxu0 %v877
        %1009 = vmatpush.bf16.msra.mxu0 %v876
        %1010 = vmatpush.bf16.msra.mxu0 %v875
        %1011 = vmatpush.bf16.msra.mxu0 %v874
        %1012 = vmatpush.bf16.msra.mxu0 %v873
        %1013 = vmatpush.bf16.msra.mxu0 %v872
        %1014 = vmatpush.bf16.msra.mxu0 %v871
        %1015 = vmatmul.bf16.gmra.mxu0 %v602
        %v1016 = vpop.f32.mrf.mxu0
        %v1017 = vadd.f32 %v1003, %v1016
        %v1018 = vpop.f32.mrf.mxu0
        %v1019 = vadd.f32 %v1005, %v1018
        %1020 = vdwg.mxu0
        %1021 = vmatpush.bf16.msra.mxu0 %v886
        %1022 = vmatpush.bf16.msra.mxu0 %v885
        %1023 = vmatpush.bf16.msra.mxu0 %v884
        %1024 = vmatpush.bf16.msra.mxu0 %v883
        %1025 = vmatpush.bf16.msra.mxu0 %v882
        %1026 = vmatpush.bf16.msra.mxu0 %v881
        %1027 = vmatpush.bf16.msra.mxu0 %v880
        %1028 = vmatpush.bf16.msra.mxu0 %v879
        %1029 = vmatmul.bf16.gmra.mxu0 %v605
        %v1030 = vpop.f32.mrf.mxu0
        %v1031 = vadd.f32 %v1017, %v1030
        %v1032 = vpop.f32.mrf.mxu0
        %v1033 = vadd.f32 %v1019, %v1032
        %1034 = vdwg.mxu0
        %1035 = vmatpush.bf16.msra.mxu0 %v894
        %1036 = vmatpush.bf16.msra.mxu0 %v893
        %1037 = vmatpush.bf16.msra.mxu0 %v892
        %1038 = vmatpush.bf16.msra.mxu0 %v891
        %1039 = vmatpush.bf16.msra.mxu0 %v890
        %1040 = vmatpush.bf16.msra.mxu0 %v889
        %1041 = vmatpush.bf16.msra.mxu0 %v888
        %1042 = vmatpush.bf16.msra.mxu0 %v887
        %1043 = vmatmul.bf16.gmra.mxu0 %v607
        %v1044 = vpop.f32.mrf.mxu0
        %v1045 = vadd.f32 %v1031, %v1044
        %v1046 = vpop.f32.mrf.mxu0
        %v1047 = vadd.f32 %v1033, %v1046
        %1048 = vdwg.mxu0
        %v1049 = vld [vmem:[#allocation6 + $0x1] sm:$0x1]
        %v1050 = vperm.slane %v1049, 0
        %v1051 = vadd.f32 %v1045, %v1050
        %v1052 = vadd.f32 %v1047, %v1050
        %v1053 = vmax.f32 %v1051, 0.0
        %v1054 = vmax.f32 %v1052, 0.0
        %v1055 = vpack.c.bf16 %v1053, %v1053
        %v1056 = vpack.c.bf16 %v1054, %v1054
        %1057 = vst [vmem:[#allocation2 + $0x8] sm:$0xf] %v1055
        %1058 = vst [vmem:[#allocation2 + $0xc] sm:$0xf] %v1056
        %v1059 = vld [vmem:[#allocation2 + $0x4] sm:$0xe]
        %v1060 = vld [vmem:[#allocation2 + $0x8] sm:$0xf]
        %v1061 = vld [vmem:[#allocation2 + $0xc] sm:$0x1]
        %v1062 = vld [vmem:[#allocation2 + $0xc] sm:$0x3]
        %v1063 = vld [vmem:[#allocation2 + $0x4] sm:$0xc]
        %v1064 = vld [vmem:[#allocation2 + $0xc] sm:$0x7]
        %v1065 = vld [vmem:[#allocation2 + $0x4] sm:$0x8]
        %v1066 = vld [vmem:[#allocation2 + $0xc] sm:$0xf]
        %v1070 = vunpack.c.l.b16 %v1059
        %v1071 = vunpack.c.l.b16 %v1060
        %v1072 = vunpack.c.l.b16 %v1061
        %v1073 = vpack.c.b16 %v1071, %v1070
        %v1074 = vpack.c.b16 %v1072, %v1072
        %v1076 = vunpack.c.l.b16 %v1062
        %v1077 = vpack.c.b16 %v1076, %v1076
        %v1079 = vshrl.u32 %v1073, 16
        %v1081 = vshll.u32 %v1073, 16
        %v1083 = vrot.slane %v1081, 1
        %v1084 = vor.u32 %v1079, %v1083
        %v1086 = vshll.u32 %v1077, 16
        %v1088 = vrot.slane %v1086, 1
        %v1089 = vsel %vm398, %v1084, %v1088
        %v1090 = vshrl.u32 %v1077, 16
        %v1092 = vor.u32 %v1090, %v1088
        %v1094 = vunpack.c.l.b16 %v1063
        %v1095 = vpack.c.b16 %v1071, %v1094
        %v1096 = vrot.slane %v1095, 1
        %v1097 = vrot.slane %v1077, 1
        %v1098 = vsel %vm417, %v1096, %v1097
        %v1100 = vunpack.c.l.b16 %v1064
        %v1101 = vpack.c.b16 %v1100, %v1100
        %v1103 = vshrl.u32 %v1095, 16
        %v1105 = vrot.slane %v1103, 1
        %v1106 = vshll.u32 %v1095, 16
        %v1108 = vrot.slane %v1106, 2
        %v1109 = vor.u32 %v1105, %v1108
        %v1111 = vshrl.u32 %v1101, 16
        %v1113 = vrot.slane %v1111, 1
        %v1114 = vshll.u32 %v1101, 16
        %v1116 = vrot.slane %v1114, 2
        %v1117 = vor.u32 %v1113, %v1116
        %v1118 = vsel %vm424, %v1109, %v1117
        %v1120 = vunpack.c.l.b16 %v1065
        %v1121 = vpack.c.b16 %v1071, %v1120
        %v1122 = vrot.slane %v1121, 2
        %v1123 = vrot.slane %v1101, 2
        %v1124 = vsel %vm445, %v1122, %v1123
        %v1126 = vunpack.c.l.b16 %v1066
        %v1127 = vpack.c.b16 %v1126, %v1126
        %v1129 = vshrl.u32 %v1121, 16
        %v1131 = vrot.slane %v1129, 2
        %v1132 = vshll.u32 %v1121, 16
        %v1134 = vrot.slane %v1132, 3
        %v1135 = vor.u32 %v1131, %v1134
        %v1137 = vshrl.u32 %v1127, 16
        %v1139 = vrot.slane %v1137, 2
        %v1140 = vshll.u32 %v1127, 16
        %v1142 = vrot.slane %v1140, 3
        %v1143 = vor.u32 %v1139, %v1142
        %v1144 = vsel %vm452, %v1135, %v1143
        %v1147 = vunpack.c.l.b16 %v1055
        %v1148 = vunpack.c.l.b16 %v1056
        %v1149 = vpack.c.b16 %v1148, %v1147
        %v1150 = vrot.slane %v1149, 7
        %v1151 = vld [vmem:[#allocation3 + $0x240] sm:$0xf]
        %v1152 = vld [vmem:[#allocation3 + $0x244] sm:$0xf]
        %v1153 = vld [vmem:[#allocation3 + $0x248] sm:$0xf]
        %v1154 = vld [vmem:[#allocation3 + $0x24c] sm:$0xf]
        %v1155 = vld [vmem:[#allocation3 + $0x250] sm:$0xf]
        %v1156 = vld [vmem:[#allocation3 + $0x254] sm:$0xf]
        %v1157 = vld [vmem:[#allocation3 + $0x258] sm:$0xf]
        %v1158 = vld [vmem:[#allocation3 + $0x25c] sm:$0xf]
        %v1159 = vld [vmem:[#allocation3 + $0x260] sm:$0xf]
        %v1160 = vld [vmem:[#allocation3 + $0x264] sm:$0xf]
        %v1161 = vld [vmem:[#allocation3 + $0x268] sm:$0xf]
        %v1162 = vld [vmem:[#allocation3 + $0x26c] sm:$0xf]
        %v1163 = vld [vmem:[#allocation3 + $0x270] sm:$0xf]
        %v1164 = vld [vmem:[#allocation3 + $0x274] sm:$0xf]
        %v1165 = vld [vmem:[#allocation3 + $0x278] sm:$0xf]
        %v1166 = vld [vmem:[#allocation3 + $0x27c] sm:$0xf]
        %v1167 = vld [vmem:[#allocation3 + $0x280] sm:$0xf]
        %v1168 = vld [vmem:[#allocation3 + $0x284] sm:$0xf]
        %v1169 = vld [vmem:[#allocation3 + $0x288] sm:$0xf]
        %v1170 = vld [vmem:[#allocation3 + $0x28c] sm:$0xf]
        %v1171 = vld [vmem:[#allocation3 + $0x290] sm:$0xf]
        %v1172 = vld [vmem:[#allocation3 + $0x294] sm:$0xf]
        %v1173 = vld [vmem:[#allocation3 + $0x298] sm:$0xf]
        %v1174 = vld [vmem:[#allocation3 + $0x29c] sm:$0xf]
        %v1175 = vld [vmem:[#allocation3 + $0x2a0] sm:$0xf]
        %v1176 = vld [vmem:[#allocation3 + $0x2a4] sm:$0xf]
        %v1177 = vld [vmem:[#allocation3 + $0x2a8] sm:$0xf]
        %v1178 = vld [vmem:[#allocation3 + $0x2ac] sm:$0xf]
        %v1179 = vld [vmem:[#allocation3 + $0x2b0] sm:$0xf]
        %v1180 = vld [vmem:[#allocation3 + $0x2b4] sm:$0xf]
        %v1181 = vld [vmem:[#allocation3 + $0x2b8] sm:$0xf]
        %v1182 = vld [vmem:[#allocation3 + $0x2bc] sm:$0xf]
        %v1183 = vld [vmem:[#allocation3 + $0x2c0] sm:$0xf]
        %v1184 = vld [vmem:[#allocation3 + $0x2c4] sm:$0xf]
        %v1185 = vld [vmem:[#allocation3 + $0x2c8] sm:$0xf]
        %v1186 = vld [vmem:[#allocation3 + $0x2cc] sm:$0xf]
        %v1187 = vld [vmem:[#allocation3 + $0x2d0] sm:$0xf]
        %v1188 = vld [vmem:[#allocation3 + $0x2d4] sm:$0xf]
        %v1189 = vld [vmem:[#allocation3 + $0x2d8] sm:$0xf]
        %v1190 = vld [vmem:[#allocation3 + $0x2dc] sm:$0xf]
        %v1191 = vld [vmem:[#allocation3 + $0x2e0] sm:$0xf]
        %v1192 = vld [vmem:[#allocation3 + $0x2e4] sm:$0xf]
        %v1193 = vld [vmem:[#allocation3 + $0x2e8] sm:$0xf]
        %v1194 = vld [vmem:[#allocation3 + $0x2ec] sm:$0xf]
        %v1195 = vld [vmem:[#allocation3 + $0x2f0] sm:$0xf]
        %v1196 = vld [vmem:[#allocation3 + $0x2f4] sm:$0xf]
        %v1197 = vld [vmem:[#allocation3 + $0x2f8] sm:$0xf]
        %v1198 = vld [vmem:[#allocation3 + $0x2fc] sm:$0xf]
        %v1199 = vld [vmem:[#allocation3 + $0x300] sm:$0xf]
        %v1200 = vld [vmem:[#allocation3 + $0x304] sm:$0xf]
        %v1201 = vld [vmem:[#allocation3 + $0x308] sm:$0xf]
        %v1202 = vld [vmem:[#allocation3 + $0x30c] sm:$0xf]
        %v1203 = vld [vmem:[#allocation3 + $0x310] sm:$0xf]
        %v1204 = vld [vmem:[#allocation3 + $0x314] sm:$0xf]
        %v1205 = vld [vmem:[#allocation3 + $0x318] sm:$0xf]
        %v1206 = vld [vmem:[#allocation3 + $0x31c] sm:$0xf]
        %v1207 = vld [vmem:[#allocation3 + $0x320] sm:$0xf]
        %v1208 = vld [vmem:[#allocation3 + $0x324] sm:$0xf]
        %v1209 = vld [vmem:[#allocation3 + $0x328] sm:$0xf]
        %v1210 = vld [vmem:[#allocation3 + $0x32c] sm:$0xf]
        %v1211 = vld [vmem:[#allocation3 + $0x330] sm:$0xf]
        %v1212 = vld [vmem:[#allocation3 + $0x334] sm:$0xf]
        %v1213 = vld [vmem:[#allocation3 + $0x338] sm:$0xf]
        %v1214 = vld [vmem:[#allocation3 + $0x33c] sm:$0xf]
        %v1215 = vld [vmem:[#allocation3 + $0x340] sm:$0xf]
        %v1216 = vld [vmem:[#allocation3 + $0x344] sm:$0xf]
        %v1217 = vld [vmem:[#allocation3 + $0x348] sm:$0xf]
        %v1218 = vld [vmem:[#allocation3 + $0x34c] sm:$0xf]
        %v1219 = vld [vmem:[#allocation3 + $0x350] sm:$0xf]
        %v1220 = vld [vmem:[#allocation3 + $0x354] sm:$0xf]
        %v1221 = vld [vmem:[#allocation3 + $0x358] sm:$0xf]
        %v1222 = vld [vmem:[#allocation3 + $0x35c] sm:$0xf]
        %v1223 = vld [vmem:[#allocation3 + $0x360] sm:$0xf]
        %v1224 = vld [vmem:[#allocation3 + $0x364] sm:$0xf]
        %v1225 = vld [vmem:[#allocation3 + $0x368] sm:$0xf]
        %v1226 = vld [vmem:[#allocation3 + $0x36c] sm:$0xf]
        %v1227 = vld [vmem:[#allocation3 + $0x370] sm:$0xf]
        %v1228 = vld [vmem:[#allocation3 + $0x374] sm:$0xf]
        %v1229 = vld [vmem:[#allocation3 + $0x378] sm:$0xf]
        %v1230 = vld [vmem:[#allocation3 + $0x37c] sm:$0xf]
        %v1231 = vld [vmem:[#allocation3 + $0x380] sm:$0xf]
        %v1232 = vld [vmem:[#allocation3 + $0x384] sm:$0xf]
        %v1233 = vld [vmem:[#allocation3 + $0x388] sm:$0xf]
        %v1234 = vld [vmem:[#allocation3 + $0x38c] sm:$0xf]
        %v1235 = vld [vmem:[#allocation3 + $0x390] sm:$0xf]
        %v1236 = vld [vmem:[#allocation3 + $0x394] sm:$0xf]
        %v1237 = vld [vmem:[#allocation3 + $0x398] sm:$0xf]
        %v1238 = vld [vmem:[#allocation3 + $0x39c] sm:$0xf]
        %v1239 = vld [vmem:[#allocation3 + $0x3a0] sm:$0xf]
        %v1240 = vld [vmem:[#allocation3 + $0x3a4] sm:$0xf]
        %v1241 = vld [vmem:[#allocation3 + $0x3a8] sm:$0xf]
        %v1242 = vld [vmem:[#allocation3 + $0x3ac] sm:$0xf]
        %v1243 = vld [vmem:[#allocation3 + $0x3b0] sm:$0xf]
        %v1244 = vld [vmem:[#allocation3 + $0x3b4] sm:$0xf]
        %v1245 = vld [vmem:[#allocation3 + $0x3b8] sm:$0xf]
        %v1246 = vld [vmem:[#allocation3 + $0x3bc] sm:$0xf]
        %v1247 = vld [vmem:[#allocation3 + $0x3c0] sm:$0xf]
        %v1248 = vld [vmem:[#allocation3 + $0x3c4] sm:$0xf]
        %v1249 = vld [vmem:[#allocation3 + $0x3c8] sm:$0xf]
        %v1250 = vld [vmem:[#allocation3 + $0x3cc] sm:$0xf]
        %v1251 = vld [vmem:[#allocation3 + $0x3d0] sm:$0xf]
        %v1252 = vld [vmem:[#allocation3 + $0x3d4] sm:$0xf]
        %v1253 = vld [vmem:[#allocation3 + $0x3d8] sm:$0xf]
        %v1254 = vld [vmem:[#allocation3 + $0x3dc] sm:$0xf]
        %v1255 = vld [vmem:[#allocation3 + $0x3e0] sm:$0xf]
        %v1256 = vld [vmem:[#allocation3 + $0x3e4] sm:$0xf]
        %v1257 = vld [vmem:[#allocation3 + $0x3e8] sm:$0xf]
        %v1258 = vld [vmem:[#allocation3 + $0x3ec] sm:$0xf]
        %v1259 = vld [vmem:[#allocation3 + $0x3f0] sm:$0xf]
        %v1260 = vld [vmem:[#allocation3 + $0x3f4] sm:$0xf]
        %v1261 = vld [vmem:[#allocation3 + $0x3f8] sm:$0xf]
        %v1262 = vld [vmem:[#allocation3 + $0x3fc] sm:$0xf]
        %v1263 = vrot.slane %v1073, 1
        %v1264 = vrot.slane %v1074, 1
        %v1265 = vsel %vm417, %v1263, %v1264
        %v1266 = vrot.slane %v1089, 1
        %v1267 = vrot.slane %v1092, 1
        %v1268 = vsel %vm417, %v1266, %v1267
        %v1269 = vrot.slane %v1098, 1
        %v1270 = vrot.slane %v1097, 1
        %v1271 = vsel %vm417, %v1269, %v1270
        %v1272 = vrot.slane %v1118, 1
        %v1273 = vrot.slane %v1117, 1
        %v1274 = vsel %vm417, %v1272, %v1273
        %v1275 = vrot.slane %v1124, 1
        %v1276 = vrot.slane %v1123, 1
        %v1277 = vsel %vm417, %v1275, %v1276
        %v1278 = vrot.slane %v1144, 1
        %v1279 = vrot.slane %v1143, 1
        %v1280 = vsel %vm417, %v1278, %v1279
        %v1281 = vrot.slane %v1150, 1
        %v1282 = vsel %vm417, %v1281, %v1281
        %v1402 = vunpack.c.l.b16 %v1151
        %v1403 = vunpack.c.l.b16 %v1152
        %v1404 = vunpack.c.l.b16 %v1153
        %v1405 = vunpack.c.l.b16 %v1154
        %v1406 = vunpack.c.l.b16 %v1155
        %v1407 = vunpack.c.l.b16 %v1156
        %v1408 = vunpack.c.l.b16 %v1157
        %v1409 = vunpack.c.l.b16 %v1158
        %v1410 = vunpack.c.l.b16 %v1159
        %v1411 = vunpack.c.l.b16 %v1160
        %v1412 = vunpack.c.l.b16 %v1161
        %v1413 = vunpack.c.l.b16 %v1162
        %v1414 = vunpack.c.l.b16 %v1163
        %v1415 = vunpack.c.l.b16 %v1164
        %v1416 = vunpack.c.l.b16 %v1165
        %v1417 = vunpack.c.l.b16 %v1166
        %v1418 = vunpack.c.l.b16 %v1167
        %v1419 = vunpack.c.l.b16 %v1168
        %v1420 = vunpack.c.l.b16 %v1169
        %v1421 = vunpack.c.l.b16 %v1170
        %v1422 = vunpack.c.l.b16 %v1171
        %v1423 = vunpack.c.l.b16 %v1172
        %v1424 = vunpack.c.l.b16 %v1173
        %v1425 = vunpack.c.l.b16 %v1174
        %v1426 = vunpack.c.l.b16 %v1175
        %v1427 = vunpack.c.l.b16 %v1176
        %v1428 = vunpack.c.l.b16 %v1177
        %v1429 = vunpack.c.l.b16 %v1178
        %v1430 = vunpack.c.l.b16 %v1179
        %v1431 = vunpack.c.l.b16 %v1180
        %v1432 = vunpack.c.l.b16 %v1181
        %v1433 = vunpack.c.l.b16 %v1182
        %v1434 = vunpack.c.l.b16 %v1183
        %v1435 = vunpack.c.l.b16 %v1184
        %v1436 = vunpack.c.l.b16 %v1185
        %v1437 = vunpack.c.l.b16 %v1186
        %v1438 = vunpack.c.l.b16 %v1187
        %v1439 = vunpack.c.l.b16 %v1188
        %v1440 = vunpack.c.l.b16 %v1189
        %v1441 = vunpack.c.l.b16 %v1190
        %v1442 = vunpack.c.l.b16 %v1191
        %v1443 = vunpack.c.l.b16 %v1192
        %v1444 = vunpack.c.l.b16 %v1193
        %v1445 = vunpack.c.l.b16 %v1194
        %v1446 = vunpack.c.l.b16 %v1195
        %v1447 = vunpack.c.l.b16 %v1196
        %v1448 = vunpack.c.l.b16 %v1197
        %v1449 = vunpack.c.l.b16 %v1198
        %v1450 = vunpack.c.l.b16 %v1199
        %v1451 = vunpack.c.l.b16 %v1200
        %v1452 = vunpack.c.l.b16 %v1201
        %v1453 = vunpack.c.l.b16 %v1202
        %v1454 = vunpack.c.l.b16 %v1203
        %v1455 = vunpack.c.l.b16 %v1204
        %v1456 = vunpack.c.l.b16 %v1205
        %v1457 = vunpack.c.l.b16 %v1206
        %v1458 = vunpack.c.l.b16 %v1207
        %v1459 = vunpack.c.l.b16 %v1208
        %v1460 = vunpack.c.l.b16 %v1209
        %v1461 = vunpack.c.l.b16 %v1210
        %v1462 = vunpack.c.l.b16 %v1211
        %v1463 = vunpack.c.l.b16 %v1212
        %v1464 = vunpack.c.l.b16 %v1213
        %v1465 = vunpack.c.l.b16 %v1214
        %v1466 = vunpack.c.l.b16 %v1215
        %v1467 = vunpack.c.l.b16 %v1216
        %v1468 = vunpack.c.l.b16 %v1217
        %v1469 = vunpack.c.l.b16 %v1218
        %v1470 = vunpack.c.l.b16 %v1219
        %v1471 = vunpack.c.l.b16 %v1220
        %v1472 = vunpack.c.l.b16 %v1221
        %v1473 = vunpack.c.l.b16 %v1222
        %v1474 = vunpack.c.l.b16 %v1223
        %v1475 = vunpack.c.l.b16 %v1224
        %v1476 = vunpack.c.l.b16 %v1225
        %v1477 = vunpack.c.l.b16 %v1226
        %v1478 = vunpack.c.l.b16 %v1227
        %v1479 = vunpack.c.l.b16 %v1228
        %v1480 = vunpack.c.l.b16 %v1229
        %v1481 = vunpack.c.l.b16 %v1230
        %v1482 = vunpack.c.l.b16 %v1231
        %v1483 = vunpack.c.l.b16 %v1232
        %v1484 = vunpack.c.l.b16 %v1233
        %v1485 = vunpack.c.l.b16 %v1234
        %v1486 = vunpack.c.l.b16 %v1235
        %v1487 = vunpack.c.l.b16 %v1236
        %v1488 = vunpack.c.l.b16 %v1237
        %v1489 = vunpack.c.l.b16 %v1238
        %v1490 = vunpack.c.l.b16 %v1239
        %v1491 = vunpack.c.l.b16 %v1240
        %v1492 = vunpack.c.l.b16 %v1241
        %v1493 = vunpack.c.l.b16 %v1242
        %v1494 = vunpack.c.l.b16 %v1243
        %v1495 = vunpack.c.l.b16 %v1244
        %v1496 = vunpack.c.l.b16 %v1245
        %v1497 = vunpack.c.l.b16 %v1246
        %v1498 = vunpack.c.l.b16 %v1247
        %v1499 = vunpack.c.l.b16 %v1248
        %v1500 = vunpack.c.l.b16 %v1249
        %v1501 = vunpack.c.l.b16 %v1250
        %v1502 = vunpack.c.l.b16 %v1251
        %v1503 = vunpack.c.l.b16 %v1252
        %v1504 = vunpack.c.l.b16 %v1253
        %v1505 = vunpack.c.l.b16 %v1254
        %v1506 = vunpack.c.l.b16 %v1255
        %v1507 = vunpack.c.l.b16 %v1256
        %v1508 = vunpack.c.l.b16 %v1257
        %v1509 = vunpack.c.l.b16 %v1258
        %v1510 = vunpack.c.l.b16 %v1259
        %v1511 = vunpack.c.l.b16 %v1260
        %v1512 = vunpack.c.l.b16 %v1261
        %v1513 = vunpack.c.l.b16 %v1262
        %v1514 = vpack.c.b16 %v1403, %v1402
        %v1515 = vpack.c.b16 %v1405, %v1404
        %v1516 = vpack.c.b16 %v1407, %v1406
        %v1517 = vpack.c.b16 %v1409, %v1408
        %v1518 = vpack.c.b16 %v1411, %v1410
        %v1519 = vpack.c.b16 %v1413, %v1412
        %v1520 = vpack.c.b16 %v1415, %v1414
        %v1521 = vpack.c.b16 %v1417, %v1416
        %v1522 = vpack.c.b16 %v1419, %v1418
        %v1523 = vpack.c.b16 %v1421, %v1420
        %v1524 = vpack.c.b16 %v1423, %v1422
        %v1525 = vpack.c.b16 %v1425, %v1424
        %v1526 = vpack.c.b16 %v1427, %v1426
        %v1527 = vpack.c.b16 %v1429, %v1428
        %v1528 = vpack.c.b16 %v1431, %v1430
        %v1529 = vpack.c.b16 %v1433, %v1432
        %v1530 = vpack.c.b16 %v1435, %v1434
        %v1531 = vpack.c.b16 %v1437, %v1436
        %v1532 = vpack.c.b16 %v1439, %v1438
        %v1533 = vpack.c.b16 %v1441, %v1440
        %v1534 = vpack.c.b16 %v1443, %v1442
        %v1535 = vpack.c.b16 %v1445, %v1444
        %v1536 = vpack.c.b16 %v1447, %v1446
        %v1537 = vpack.c.b16 %v1449, %v1448
        %v1538 = vpack.c.b16 %v1451, %v1450
        %v1539 = vpack.c.b16 %v1453, %v1452
        %v1540 = vpack.c.b16 %v1455, %v1454
        %v1541 = vpack.c.b16 %v1457, %v1456
        %v1542 = vpack.c.b16 %v1459, %v1458
        %v1543 = vpack.c.b16 %v1461, %v1460
        %v1544 = vpack.c.b16 %v1463, %v1462
        %v1545 = vpack.c.b16 %v1465, %v1464
        %v1546 = vpack.c.b16 %v1467, %v1466
        %v1547 = vpack.c.b16 %v1469, %v1468
        %v1548 = vpack.c.b16 %v1471, %v1470
        %v1549 = vpack.c.b16 %v1473, %v1472
        %v1550 = vpack.c.b16 %v1475, %v1474
        %v1551 = vpack.c.b16 %v1477, %v1476
        %v1552 = vpack.c.b16 %v1479, %v1478
        %v1553 = vpack.c.b16 %v1481, %v1480
        %v1554 = vpack.c.b16 %v1483, %v1482
        %v1555 = vpack.c.b16 %v1485, %v1484
        %v1556 = vpack.c.b16 %v1487, %v1486
        %v1557 = vpack.c.b16 %v1489, %v1488
        %v1558 = vpack.c.b16 %v1491, %v1490
        %v1559 = vpack.c.b16 %v1493, %v1492
        %v1560 = vpack.c.b16 %v1495, %v1494
        %v1561 = vpack.c.b16 %v1497, %v1496
        %v1562 = vpack.c.b16 %v1499, %v1498
        %v1563 = vpack.c.b16 %v1501, %v1500
        %v1564 = vpack.c.b16 %v1503, %v1502
        %v1565 = vpack.c.b16 %v1505, %v1504
        %v1566 = vpack.c.b16 %v1507, %v1506
        %v1567 = vpack.c.b16 %v1509, %v1508
        %v1568 = vpack.c.b16 %v1511, %v1510
        %v1569 = vpack.c.b16 %v1513, %v1512
        %1626 = vmatpush.bf16.msra.mxu0 %v1521
        %1627 = vmatpush.bf16.msra.mxu0 %v1520
        %1628 = vmatpush.bf16.msra.mxu0 %v1519
        %1629 = vmatpush.bf16.msra.mxu0 %v1518
        %1630 = vmatpush.bf16.msra.mxu0 %v1517
        %1631 = vmatpush.bf16.msra.mxu0 %v1516
        %1632 = vmatpush.bf16.msra.mxu0 %v1515
        %1633 = vmatpush.bf16.msra.mxu0 %v1514
        %1634 = vmatmul.bf16.gmra.mxu0 %v1265
        %v1635 = vpop.f32.mrf.mxu0
        %v1636 = vadd.f32 0.0, %v1635
        %v1637 = vpop.f32.mrf.mxu0
        %v1638 = vadd.f32 0.0, %v1637
        %1639 = vdwg.mxu0
        %1640 = vmatpush.bf16.msra.mxu0 %v1529
        %1641 = vmatpush.bf16.msra.mxu0 %v1528
        %1642 = vmatpush.bf16.msra.mxu0 %v1527
        %1643 = vmatpush.bf16.msra.mxu0 %v1526
        %1644 = vmatpush.bf16.msra.mxu0 %v1525
        %1645 = vmatpush.bf16.msra.mxu0 %v1524
        %1646 = vmatpush.bf16.msra.mxu0 %v1523
        %1647 = vmatpush.bf16.msra.mxu0 %v1522
        %1648 = vmatmul.bf16.gmra.mxu0 %v1268
        %v1649 = vpop.f32.mrf.mxu0
        %v1650 = vadd.f32 %v1636, %v1649
        %v1651 = vpop.f32.mrf.mxu0
        %v1652 = vadd.f32 %v1638, %v1651
        %1653 = vdwg.mxu0
        %1654 = vmatpush.bf16.msra.mxu0 %v1537
        %1655 = vmatpush.bf16.msra.mxu0 %v1536
        %1656 = vmatpush.bf16.msra.mxu0 %v1535
        %1657 = vmatpush.bf16.msra.mxu0 %v1534
        %1658 = vmatpush.bf16.msra.mxu0 %v1533
        %1659 = vmatpush.bf16.msra.mxu0 %v1532
        %1660 = vmatpush.bf16.msra.mxu0 %v1531
        %1661 = vmatpush.bf16.msra.mxu0 %v1530
        %1662 = vmatmul.bf16.gmra.mxu0 %v1271
        %v1663 = vpop.f32.mrf.mxu0
        %v1664 = vadd.f32 %v1650, %v1663
        %v1665 = vpop.f32.mrf.mxu0
        %v1666 = vadd.f32 %v1652, %v1665
        %1667 = vdwg.mxu0
        %1668 = vmatpush.bf16.msra.mxu0 %v1545
        %1669 = vmatpush.bf16.msra.mxu0 %v1544
        %1670 = vmatpush.bf16.msra.mxu0 %v1543
        %1671 = vmatpush.bf16.msra.mxu0 %v1542
        %1672 = vmatpush.bf16.msra.mxu0 %v1541
        %1673 = vmatpush.bf16.msra.mxu0 %v1540
        %1674 = vmatpush.bf16.msra.mxu0 %v1539
        %1675 = vmatpush.bf16.msra.mxu0 %v1538
        %1676 = vmatmul.bf16.gmra.mxu0 %v1274
        %v1677 = vpop.f32.mrf.mxu0
        %v1678 = vadd.f32 %v1664, %v1677
        %v1679 = vpop.f32.mrf.mxu0
        %v1680 = vadd.f32 %v1666, %v1679
        %1681 = vdwg.mxu0
        %1682 = vmatpush.bf16.msra.mxu0 %v1553
        %1683 = vmatpush.bf16.msra.mxu0 %v1552
        %1684 = vmatpush.bf16.msra.mxu0 %v1551
        %1685 = vmatpush.bf16.msra.mxu0 %v1550
        %1686 = vmatpush.bf16.msra.mxu0 %v1549
        %1687 = vmatpush.bf16.msra.mxu0 %v1548
        %1688 = vmatpush.bf16.msra.mxu0 %v1547
        %1689 = vmatpush.bf16.msra.mxu0 %v1546
        %1690 = vmatmul.bf16.gmra.mxu0 %v1277
        %v1691 = vpop.f32.mrf.mxu0
        %v1692 = vadd.f32 %v1678, %v1691
        %v1693 = vpop.f32.mrf.mxu0
        %v1694 = vadd.f32 %v1680, %v1693
        %1695 = vdwg.mxu0
        %1696 = vmatpush.bf16.msra.mxu0 %v1561
        %1697 = vmatpush.bf16.msra.mxu0 %v1560
        %1698 = vmatpush.bf16.msra.mxu0 %v1559
        %1699 = vmatpush.bf16.msra.mxu0 %v1558
        %1700 = vmatpush.bf16.msra.mxu0 %v1557
        %1701 = vmatpush.bf16.msra.mxu0 %v1556
        %1702 = vmatpush.bf16.msra.mxu0 %v1555
        %1703 = vmatpush.bf16.msra.mxu0 %v1554
        %1704 = vmatmul.bf16.gmra.mxu0 %v1280
        %v1705 = vpop.f32.mrf.mxu0
        %v1706 = vadd.f32 %v1692, %v1705
        %v1707 = vpop.f32.mrf.mxu0
        %v1708 = vadd.f32 %v1694, %v1707
        %1709 = vdwg.mxu0
        %1710 = vmatpush.bf16.msra.mxu0 %v1569
        %1711 = vmatpush.bf16.msra.mxu0 %v1568
        %1712 = vmatpush.bf16.msra.mxu0 %v1567
        %1713 = vmatpush.bf16.msra.mxu0 %v1566
        %1714 = vmatpush.bf16.msra.mxu0 %v1565
        %1715 = vmatpush.bf16.msra.mxu0 %v1564
        %1716 = vmatpush.bf16.msra.mxu0 %v1563
        %1717 = vmatpush.bf16.msra.mxu0 %v1562
        %1718 = vmatmul.bf16.gmra.mxu0 %v1282
        %v1719 = vpop.f32.mrf.mxu0
        %v1720 = vadd.f32 %v1706, %v1719
        %v1721 = vpop.f32.mrf.mxu0
        %v1722 = vadd.f32 %v1708, %v1721
        %1723 = vdwg.mxu0
        %v1724 = vld [vmem:[#allocation6 + $0x2] sm:$0x1]
        %v1725 = vperm.slane %v1724, 0
        %v1726 = vadd.f32 %v1720, %v1725
        %v1727 = vadd.f32 %v1722, %v1725
        %v1728 = vmax.f32 %v1726, 0.0
        %v1729 = vmax.f32 %v1727, 0.0
        %v1730 = vld [vmem:[#allocation3 + $0x400] sm:$0xf]
        %v1731 = vld [vmem:[#allocation3 + $0x404] sm:$0xf]
        %v1732 = vld [vmem:[#allocation3 + $0x408] sm:$0xf]
        %v1733 = vld [vmem:[#allocation3 + $0x40c] sm:$0xf]
        %v1734 = vld [vmem:[#allocation3 + $0x410] sm:$0xf]
        %v1735 = vld [vmem:[#allocation3 + $0x414] sm:$0xf]
        %v1736 = vld [vmem:[#allocation3 + $0x418] sm:$0xf]
        %v1737 = vld [vmem:[#allocation3 + $0x41c] sm:$0xf]
        %v1738 = vld [vmem:[#allocation3 + $0x420] sm:$0xf]
        %v1739 = vld [vmem:[#allocation3 + $0x424] sm:$0xf]
        %v1740 = vld [vmem:[#allocation3 + $0x428] sm:$0xf]
        %v1741 = vld [vmem:[#allocation3 + $0x42c] sm:$0xf]
        %v1742 = vld [vmem:[#allocation3 + $0x430] sm:$0xf]
        %v1743 = vld [vmem:[#allocation3 + $0x434] sm:$0xf]
        %v1744 = vld [vmem:[#allocation3 + $0x438] sm:$0xf]
        %v1745 = vld [vmem:[#allocation3 + $0x43c] sm:$0xf]
        %v1763 = vunpack.c.l.b16 %v1730
        %v1764 = vunpack.c.l.b16 %v1731
        %v1765 = vunpack.c.l.b16 %v1732
        %v1766 = vunpack.c.l.b16 %v1733
        %v1767 = vunpack.c.l.b16 %v1734
        %v1768 = vunpack.c.l.b16 %v1735
        %v1769 = vunpack.c.l.b16 %v1736
        %v1770 = vunpack.c.l.b16 %v1737
        %v1771 = vunpack.c.l.b16 %v1738
        %v1772 = vunpack.c.l.b16 %v1739
        %v1773 = vunpack.c.l.b16 %v1740
        %v1774 = vunpack.c.l.b16 %v1741
        %v1775 = vunpack.c.l.b16 %v1742
        %v1776 = vunpack.c.l.b16 %v1743
        %v1777 = vunpack.c.l.b16 %v1744
        %v1778 = vunpack.c.l.b16 %v1745
        %v1779 = vpack.c.b16 %v1764, %v1763
        %v1780 = vpack.c.b16 %v1766, %v1765
        %v1781 = vpack.c.b16 %v1768, %v1767
        %v1782 = vpack.c.b16 %v1770, %v1769
        %v1783 = vpack.c.b16 %v1772, %v1771
        %v1784 = vpack.c.b16 %v1774, %v1773
        %v1785 = vpack.c.b16 %v1776, %v1775
        %v1786 = vpack.c.b16 %v1778, %v1777
        %1795 = vmatpush.bf16.msra.mxu0 %v1786
        %1796 = vmatpush.bf16.msra.mxu0 %v1785
        %1797 = vmatpush.bf16.msra.mxu0 %v1784
        %1798 = vmatpush.bf16.msra.mxu0 %v1783
        %1799 = vmatpush.bf16.msra.mxu0 %v1782
        %1800 = vmatpush.bf16.msra.mxu0 %v1781
        %1801 = vmatpush.bf16.msra.mxu0 %v1780
        %1802 = vmatpush.bf16.msra.mxu0 %v1779
        %1803 = vmatmul.bf16.gmra.mxu0 %v474
        %v1804 = vpop.f32.mrf.mxu0
        %v1805 = vadd.f32 0.0, %v1804
        %v1806 = vpop.f32.mrf.mxu0
        %v1807 = vadd.f32 0.0, %v1806
        %1808 = vdwg.mxu0
        %v1809 = vld [vmem:[#allocation6 + $0x3] sm:$0x1]
        %v1810 = vperm.slane %v1809, 0
        %v1811 = vadd.f32 %v1805, %v1810
        %v1812 = vadd.f32 %v1807, %v1810
        %v1813 = vadd.f32 %v1728, %v1811
        %v1814 = vadd.f32 %v1729, %v1812
        %v1815 = vmax.f32 %v1813, 0.0
        %v1816 = vmax.f32 %v1814, 0.0
        %v1817 = vpack.c.bf16 %v1815, %v1815
        %v1818 = vpack.c.bf16 %v1816, %v1816
        %1819 = vst [vmem:[#allocation2 + $0x8] sm:$0xf] %v1817
        %1820 = vst [vmem:[#allocation2 + $0xc] sm:$0xf] %v1818
        %v1821 = vld [vmem:[#allocation2] sm:$0xc]
        %v1822 = vld [vmem:[#allocation2 + $0x4] sm:$0xf]
        %v1823 = vld [vmem:[#allocation2 + $0x8] sm:$0x3]
        %v1824 = vld [vmem:[#allocation2] sm:$0x8]
        %v1825 = vld [vmem:[#allocation2 + $0x8] sm:$0x7]
        %v1826 = vld [vmem:[#allocation2 + $0x8] sm:$0xf]
        %v1827 = vld [vmem:[#allocation2 + $0x4] sm:$0xe]
        %v1828 = vld [vmem:[#allocation2 + $0x8] sm:$0xf]
        %v1829 = vld [vmem:[#allocation2 + $0xc] sm:$0x1]
        %v1830 = vld [vmem:[#allocation2 + $0x4] sm:$0xc]
        %v1831 = vld [vmem:[#allocation2 + $0xc] sm:$0x3]
        %v1832 = vld [vmem:[#allocation2 + $0x4] sm:$0x8]
        %v1833 = vld [vmem:[#allocation2 + $0xc] sm:$0x7]
        %v1837 = vunpack.c.l.b16 %v1821
        %v1838 = vunpack.c.l.b16 %v1822
        %v1839 = vunpack.c.l.b16 %v1823
        %v1840 = vpack.c.b16 %v1838, %v1837
        %v1841 = vpack.c.b16 %v1839, %v1839
        %v1844 = vunpack.c.l.b16 %v1824
        %v1845 = vunpack.c.l.b16 %v1825
        %v1846 = vpack.c.b16 %v1838, %v1844
        %v1847 = vpack.c.b16 %v1845, %v1845
        %v1848 = vrot.slane %v1846, 1
        %v1849 = vrot.slane %v1847, 1
        %v1850 = vsel %vm417, %v1848, %v1849
        %v1852 = vunpack.c.l.b16 %v1826
        %v1853 = vpack.c.b16 %v1852, %v1838
        %v1854 = vrot.slane %v1853, 6
        %v1858 = vunpack.c.l.b16 %v1827
        %v1859 = vunpack.c.l.b16 %v1828
        %v1860 = vunpack.c.l.b16 %v1829
        %v1861 = vpack.c.b16 %v1859, %v1858
        %v1862 = vpack.c.b16 %v1860, %v1860
        %vm1863 = vcmask 1040384
        %v1864 = vrot.slane %v1861, 7
        %v1865 = vrot.slane %v1862, 7
        %v1866 = vsel %vm1863, %v1864, %v1865
        %v1869 = vunpack.c.l.b16 %v1830
        %v1870 = vunpack.c.l.b16 %v1831
        %v1871 = vpack.c.b16 %v1859, %v1869
        %v1872 = vpack.c.b16 %v1870, %v1870
        %v1875 = vunpack.c.l.b16 %v1832
        %v1876 = vunpack.c.l.b16 %v1833
        %v1877 = vpack.c.b16 %v1859, %v1875
        %v1878 = vpack.c.b16 %v1876, %v1876
        %v1879 = vrot.slane %v1877, 1
        %v1880 = vrot.slane %v1878, 1
        %v1881 = vsel %vm417, %v1879, %v1880
        %v1884 = vunpack.c.l.b16 %v1817
        %v1885 = vunpack.c.l.b16 %v1818
        %v1886 = vpack.c.b16 %v1885, %v1884
        %v1887 = vrot.slane %v1886, 6
        %v1888 = vld [vmem:[#allocation3 + $0x440] sm:$0xf]
        %v1889 = vld [vmem:[#allocation3 + $0x444] sm:$0xf]
        %v1890 = vld [vmem:[#allocation3 + $0x448] sm:$0xf]
        %v1891 = vld [vmem:[#allocation3 + $0x44c] sm:$0xf]
        %v1892 = vld [vmem:[#allocation3 + $0x450] sm:$0xf]
        %v1893 = vld [vmem:[#allocation3 + $0x454] sm:$0xf]
        %v1894 = vld [vmem:[#allocation3 + $0x458] sm:$0xf]
        %v1895 = vld [vmem:[#allocation3 + $0x45c] sm:$0xf]
        %v1896 = vld [vmem:[#allocation3 + $0x460] sm:$0xf]
        %v1897 = vld [vmem:[#allocation3 + $0x464] sm:$0xf]
        %v1898 = vld [vmem:[#allocation3 + $0x468] sm:$0xf]
        %v1899 = vld [vmem:[#allocation3 + $0x46c] sm:$0xf]
        %v1900 = vld [vmem:[#allocation3 + $0x470] sm:$0xf]
        %v1901 = vld [vmem:[#allocation3 + $0x474] sm:$0xf]
        %v1902 = vld [vmem:[#allocation3 + $0x478] sm:$0xf]
        %v1903 = vld [vmem:[#allocation3 + $0x47c] sm:$0xf]
        %v1904 = vld [vmem:[#allocation3 + $0x480] sm:$0xf]
        %v1905 = vld [vmem:[#allocation3 + $0x484] sm:$0xf]
        %v1906 = vld [vmem:[#allocation3 + $0x488] sm:$0xf]
        %v1907 = vld [vmem:[#allocation3 + $0x48c] sm:$0xf]
        %v1908 = vld [vmem:[#allocation3 + $0x490] sm:$0xf]
        %v1909 = vld [vmem:[#allocation3 + $0x494] sm:$0xf]
        %v1910 = vld [vmem:[#allocation3 + $0x498] sm:$0xf]
        %v1911 = vld [vmem:[#allocation3 + $0x49c] sm:$0xf]
        %v1912 = vld [vmem:[#allocation3 + $0x4a0] sm:$0xf]
        %v1913 = vld [vmem:[#allocation3 + $0x4a4] sm:$0xf]
        %v1914 = vld [vmem:[#allocation3 + $0x4a8] sm:$0xf]
        %v1915 = vld [vmem:[#allocation3 + $0x4ac] sm:$0xf]
        %v1916 = vld [vmem:[#allocation3 + $0x4b0] sm:$0xf]
        %v1917 = vld [vmem:[#allocation3 + $0x4b4] sm:$0xf]
        %v1918 = vld [vmem:[#allocation3 + $0x4b8] sm:$0xf]
        %v1919 = vld [vmem:[#allocation3 + $0x4bc] sm:$0xf]
        %v1920 = vld [vmem:[#allocation3 + $0x4c0] sm:$0xf]
        %v1921 = vld [vmem:[#allocation3 + $0x4c4] sm:$0xf]
        %v1922 = vld [vmem:[#allocation3 + $0x4c8] sm:$0xf]
        %v1923 = vld [vmem:[#allocation3 + $0x4cc] sm:$0xf]
        %v1924 = vld [vmem:[#allocation3 + $0x4d0] sm:$0xf]
        %v1925 = vld [vmem:[#allocation3 + $0x4d4] sm:$0xf]
        %v1926 = vld [vmem:[#allocation3 + $0x4d8] sm:$0xf]
        %v1927 = vld [vmem:[#allocation3 + $0x4dc] sm:$0xf]
        %v1928 = vld [vmem:[#allocation3 + $0x4e0] sm:$0xf]
        %v1929 = vld [vmem:[#allocation3 + $0x4e4] sm:$0xf]
        %v1930 = vld [vmem:[#allocation3 + $0x4e8] sm:$0xf]
        %v1931 = vld [vmem:[#allocation3 + $0x4ec] sm:$0xf]
        %v1932 = vld [vmem:[#allocation3 + $0x4f0] sm:$0xf]
        %v1933 = vld [vmem:[#allocation3 + $0x4f4] sm:$0xf]
        %v1934 = vld [vmem:[#allocation3 + $0x4f8] sm:$0xf]
        %v1935 = vld [vmem:[#allocation3 + $0x4fc] sm:$0xf]
        %v1936 = vld [vmem:[#allocation3 + $0x500] sm:$0xf]
        %v1937 = vld [vmem:[#allocation3 + $0x504] sm:$0xf]
        %v1938 = vld [vmem:[#allocation3 + $0x508] sm:$0xf]
        %v1939 = vld [vmem:[#allocation3 + $0x50c] sm:$0xf]
        %v1940 = vld [vmem:[#allocation3 + $0x510] sm:$0xf]
        %v1941 = vld [vmem:[#allocation3 + $0x514] sm:$0xf]
        %v1942 = vld [vmem:[#allocation3 + $0x518] sm:$0xf]
        %v1943 = vld [vmem:[#allocation3 + $0x51c] sm:$0xf]
        %v1944 = vld [vmem:[#allocation3 + $0x520] sm:$0xf]
        %v1945 = vld [vmem:[#allocation3 + $0x524] sm:$0xf]
        %v1946 = vld [vmem:[#allocation3 + $0x528] sm:$0xf]
        %v1947 = vld [vmem:[#allocation3 + $0x52c] sm:$0xf]
        %v1948 = vld [vmem:[#allocation3 + $0x530] sm:$0xf]
        %v1949 = vld [vmem:[#allocation3 + $0x534] sm:$0xf]
        %v1950 = vld [vmem:[#allocation3 + $0x538] sm:$0xf]
        %v1951 = vld [vmem:[#allocation3 + $0x53c] sm:$0xf]
        %v1952 = vld [vmem:[#allocation3 + $0x540] sm:$0xf]
        %v1953 = vld [vmem:[#allocation3 + $0x544] sm:$0xf]
        %v1954 = vld [vmem:[#allocation3 + $0x548] sm:$0xf]
        %v1955 = vld [vmem:[#allocation3 + $0x54c] sm:$0xf]
        %v1956 = vld [vmem:[#allocation3 + $0x550] sm:$0xf]
        %v1957 = vld [vmem:[#allocation3 + $0x554] sm:$0xf]
        %v1958 = vld [vmem:[#allocation3 + $0x558] sm:$0xf]
        %v1959 = vld [vmem:[#allocation3 + $0x55c] sm:$0xf]
        %v1960 = vld [vmem:[#allocation3 + $0x560] sm:$0xf]
        %v1961 = vld [vmem:[#allocation3 + $0x564] sm:$0xf]
        %v1962 = vld [vmem:[#allocation3 + $0x568] sm:$0xf]
        %v1963 = vld [vmem:[#allocation3 + $0x56c] sm:$0xf]
        %v1964 = vld [vmem:[#allocation3 + $0x570] sm:$0xf]
        %v1965 = vld [vmem:[#allocation3 + $0x574] sm:$0xf]
        %v1966 = vld [vmem:[#allocation3 + $0x578] sm:$0xf]
        %v1967 = vld [vmem:[#allocation3 + $0x57c] sm:$0xf]
        %v1968 = vld [vmem:[#allocation3 + $0x580] sm:$0xf]
        %v1969 = vld [vmem:[#allocation3 + $0x584] sm:$0xf]
        %v1970 = vld [vmem:[#allocation3 + $0x588] sm:$0xf]
        %v1971 = vld [vmem:[#allocation3 + $0x58c] sm:$0xf]
        %v1972 = vld [vmem:[#allocation3 + $0x590] sm:$0xf]
        %v1973 = vld [vmem:[#allocation3 + $0x594] sm:$0xf]
        %v1974 = vld [vmem:[#allocation3 + $0x598] sm:$0xf]
        %v1975 = vld [vmem:[#allocation3 + $0x59c] sm:$0xf]
        %v1976 = vld [vmem:[#allocation3 + $0x5a0] sm:$0xf]
        %v1977 = vld [vmem:[#allocation3 + $0x5a4] sm:$0xf]
        %v1978 = vld [vmem:[#allocation3 + $0x5a8] sm:$0xf]
        %v1979 = vld [vmem:[#allocation3 + $0x5ac] sm:$0xf]
        %v1980 = vld [vmem:[#allocation3 + $0x5b0] sm:$0xf]
        %v1981 = vld [vmem:[#allocation3 + $0x5b4] sm:$0xf]
        %v1982 = vld [vmem:[#allocation3 + $0x5b8] sm:$0xf]
        %v1983 = vld [vmem:[#allocation3 + $0x5bc] sm:$0xf]
        %v1984 = vld [vmem:[#allocation3 + $0x5c0] sm:$0xf]
        %v1985 = vld [vmem:[#allocation3 + $0x5c4] sm:$0xf]
        %v1986 = vld [vmem:[#allocation3 + $0x5c8] sm:$0xf]
        %v1987 = vld [vmem:[#allocation3 + $0x5cc] sm:$0xf]
        %v1988 = vld [vmem:[#allocation3 + $0x5d0] sm:$0xf]
        %v1989 = vld [vmem:[#allocation3 + $0x5d4] sm:$0xf]
        %v1990 = vld [vmem:[#allocation3 + $0x5d8] sm:$0xf]
        %v1991 = vld [vmem:[#allocation3 + $0x5dc] sm:$0xf]
        %v1992 = vld [vmem:[#allocation3 + $0x5e0] sm:$0xf]
        %v1993 = vld [vmem:[#allocation3 + $0x5e4] sm:$0xf]
        %v1994 = vld [vmem:[#allocation3 + $0x5e8] sm:$0xf]
        %v1995 = vld [vmem:[#allocation3 + $0x5ec] sm:$0xf]
        %v1996 = vld [vmem:[#allocation3 + $0x5f0] sm:$0xf]
        %v1997 = vld [vmem:[#allocation3 + $0x5f4] sm:$0xf]
        %v1998 = vld [vmem:[#allocation3 + $0x5f8] sm:$0xf]
        %v1999 = vld [vmem:[#allocation3 + $0x5fc] sm:$0xf]
        %v2000 = vrot.slane %v1840, 2
        %v2001 = vrot.slane %v1841, 2
        %v2002 = vsel %vm445, %v2000, %v2001
        %v2003 = vrot.slane %v1850, 2
        %v2004 = vrot.slane %v1849, 2
        %v2005 = vsel %vm445, %v2003, %v2004
        %v2006 = vrot.slane %v1854, 2
        %v2007 = vsel %vm445, %v2006, %v2006
        %v2008 = vrot.slane %v1864, 2
        %v2009 = vrot.slane %v1866, 2
        %v2010 = vsel %vm445, %v2008, %v2009
        %v2011 = vrot.slane %v1871, 2
        %v2012 = vrot.slane %v1872, 2
        %v2013 = vsel %vm445, %v2011, %v2012
        %v2014 = vrot.slane %v1881, 2
        %v2015 = vrot.slane %v1880, 2
        %v2016 = vsel %vm445, %v2014, %v2015
        %v2017 = vrot.slane %v1887, 2
        %v2018 = vsel %vm445, %v2017, %v2017
        %v2138 = vunpack.c.l.b16 %v1888
        %v2139 = vunpack.c.l.b16 %v1889
        %v2140 = vunpack.c.l.b16 %v1890
        %v2141 = vunpack.c.l.b16 %v1891
        %v2142 = vunpack.c.l.b16 %v1892
        %v2143 = vunpack.c.l.b16 %v1893
        %v2144 = vunpack.c.l.b16 %v1894
        %v2145 = vunpack.c.l.b16 %v1895
        %v2146 = vunpack.c.l.b16 %v1896
        %v2147 = vunpack.c.l.b16 %v1897
        %v2148 = vunpack.c.l.b16 %v1898
        %v2149 = vunpack.c.l.b16 %v1899
        %v2150 = vunpack.c.l.b16 %v1900
        %v2151 = vunpack.c.l.b16 %v1901
        %v2152 = vunpack.c.l.b16 %v1902
        %v2153 = vunpack.c.l.b16 %v1903
        %v2154 = vunpack.c.l.b16 %v1904
        %v2155 = vunpack.c.l.b16 %v1905
        %v2156 = vunpack.c.l.b16 %v1906
        %v2157 = vunpack.c.l.b16 %v1907
        %v2158 = vunpack.c.l.b16 %v1908
        %v2159 = vunpack.c.l.b16 %v1909
        %v2160 = vunpack.c.l.b16 %v1910
        %v2161 = vunpack.c.l.b16 %v1911
        %v2162 = vunpack.c.l.b16 %v1912
        %v2163 = vunpack.c.l.b16 %v1913
        %v2164 = vunpack.c.l.b16 %v1914
        %v2165 = vunpack.c.l.b16 %v1915
        %v2166 = vunpack.c.l.b16 %v1916
        %v2167 = vunpack.c.l.b16 %v1917
        %v2168 = vunpack.c.l.b16 %v1918
        %v2169 = vunpack.c.l.b16 %v1919
        %v2170 = vunpack.c.l.b16 %v1920
        %v2171 = vunpack.c.l.b16 %v1921
        %v2172 = vunpack.c.l.b16 %v1922
        %v2173 = vunpack.c.l.b16 %v1923
        %v2174 = vunpack.c.l.b16 %v1924
        %v2175 = vunpack.c.l.b16 %v1925
        %v2176 = vunpack.c.l.b16 %v1926
        %v2177 = vunpack.c.l.b16 %v1927
        %v2178 = vunpack.c.l.b16 %v1928
        %v2179 = vunpack.c.l.b16 %v1929
        %v2180 = vunpack.c.l.b16 %v1930
        %v2181 = vunpack.c.l.b16 %v1931
        %v2182 = vunpack.c.l.b16 %v1932
        %v2183 = vunpack.c.l.b16 %v1933
        %v2184 = vunpack.c.l.b16 %v1934
        %v2185 = vunpack.c.l.b16 %v1935
        %v2186 = vunpack.c.l.b16 %v1936
        %v2187 = vunpack.c.l.b16 %v1937
        %v2188 = vunpack.c.l.b16 %v1938
        %v2189 = vunpack.c.l.b16 %v1939
        %v2190 = vunpack.c.l.b16 %v1940
        %v2191 = vunpack.c.l.b16 %v1941
        %v2192 = vunpack.c.l.b16 %v1942
        %v2193 = vunpack.c.l.b16 %v1943
        %v2194 = vunpack.c.l.b16 %v1944
        %v2195 = vunpack.c.l.b16 %v1945
        %v2196 = vunpack.c.l.b16 %v1946
        %v2197 = vunpack.c.l.b16 %v1947
        %v2198 = vunpack.c.l.b16 %v1948
        %v2199 = vunpack.c.l.b16 %v1949
        %v2200 = vunpack.c.l.b16 %v1950
        %v2201 = vunpack.c.l.b16 %v1951
        %v2202 = vunpack.c.l.b16 %v1952
        %v2203 = vunpack.c.l.b16 %v1953
        %v2204 = vunpack.c.l.b16 %v1954
        %v2205 = vunpack.c.l.b16 %v1955
        %v2206 = vunpack.c.l.b16 %v1956
        %v2207 = vunpack.c.l.b16 %v1957
        %v2208 = vunpack.c.l.b16 %v1958
        %v2209 = vunpack.c.l.b16 %v1959
        %v2210 = vunpack.c.l.b16 %v1960
        %v2211 = vunpack.c.l.b16 %v1961
        %v2212 = vunpack.c.l.b16 %v1962
        %v2213 = vunpack.c.l.b16 %v1963
        %v2214 = vunpack.c.l.b16 %v1964
        %v2215 = vunpack.c.l.b16 %v1965
        %v2216 = vunpack.c.l.b16 %v1966
        %v2217 = vunpack.c.l.b16 %v1967
        %v2218 = vunpack.c.l.b16 %v1968
        %v2219 = vunpack.c.l.b16 %v1969
        %v2220 = vunpack.c.l.b16 %v1970
        %v2221 = vunpack.c.l.b16 %v1971
        %v2222 = vunpack.c.l.b16 %v1972
        %v2223 = vunpack.c.l.b16 %v1973
        %v2224 = vunpack.c.l.b16 %v1974
        %v2225 = vunpack.c.l.b16 %v1975
        %v2226 = vunpack.c.l.b16 %v1976
        %v2227 = vunpack.c.l.b16 %v1977
        %v2228 = vunpack.c.l.b16 %v1978
        %v2229 = vunpack.c.l.b16 %v1979
        %v2230 = vunpack.c.l.b16 %v1980
        %v2231 = vunpack.c.l.b16 %v1981
        %v2232 = vunpack.c.l.b16 %v1982
        %v2233 = vunpack.c.l.b16 %v1983
        %v2234 = vunpack.c.l.b16 %v1984
        %v2235 = vunpack.c.l.b16 %v1985
        %v2236 = vunpack.c.l.b16 %v1986
        %v2237 = vunpack.c.l.b16 %v1987
        %v2238 = vunpack.c.l.b16 %v1988
        %v2239 = vunpack.c.l.b16 %v1989
        %v2240 = vunpack.c.l.b16 %v1990
        %v2241 = vunpack.c.l.b16 %v1991
        %v2242 = vunpack.c.l.b16 %v1992
        %v2243 = vunpack.c.l.b16 %v1993
        %v2244 = vunpack.c.l.b16 %v1994
        %v2245 = vunpack.c.l.b16 %v1995
        %v2246 = vunpack.c.l.b16 %v1996
        %v2247 = vunpack.c.l.b16 %v1997
        %v2248 = vunpack.c.l.b16 %v1998
        %v2249 = vunpack.c.l.b16 %v1999
        %v2250 = vpack.c.b16 %v2139, %v2138
        %v2251 = vpack.c.b16 %v2141, %v2140
        %v2252 = vpack.c.b16 %v2143, %v2142
        %v2253 = vpack.c.b16 %v2145, %v2144
        %v2254 = vpack.c.b16 %v2147, %v2146
        %v2255 = vpack.c.b16 %v2149, %v2148
        %v2256 = vpack.c.b16 %v2151, %v2150
        %v2257 = vpack.c.b16 %v2153, %v2152
        %v2258 = vpack.c.b16 %v2155, %v2154
        %v2259 = vpack.c.b16 %v2157, %v2156
        %v2260 = vpack.c.b16 %v2159, %v2158
        %v2261 = vpack.c.b16 %v2161, %v2160
        %v2262 = vpack.c.b16 %v2163, %v2162
        %v2263 = vpack.c.b16 %v2165, %v2164
        %v2264 = vpack.c.b16 %v2167, %v2166
        %v2265 = vpack.c.b16 %v2169, %v2168
        %v2266 = vpack.c.b16 %v2171, %v2170
        %v2267 = vpack.c.b16 %v2173, %v2172
        %v2268 = vpack.c.b16 %v2175, %v2174
        %v2269 = vpack.c.b16 %v2177, %v2176
        %v2270 = vpack.c.b16 %v2179, %v2178
        %v2271 = vpack.c.b16 %v2181, %v2180
        %v2272 = vpack.c.b16 %v2183, %v2182
        %v2273 = vpack.c.b16 %v2185, %v2184
        %v2274 = vpack.c.b16 %v2187, %v2186
        %v2275 = vpack.c.b16 %v2189, %v2188
        %v2276 = vpack.c.b16 %v2191, %v2190
        %v2277 = vpack.c.b16 %v2193, %v2192
        %v2278 = vpack.c.b16 %v2195, %v2194
        %v2279 = vpack.c.b16 %v2197, %v2196
        %v2280 = vpack.c.b16 %v2199, %v2198
        %v2281 = vpack.c.b16 %v2201, %v2200
        %v2282 = vpack.c.b16 %v2203, %v2202
        %v2283 = vpack.c.b16 %v2205, %v2204
        %v2284 = vpack.c.b16 %v2207, %v2206
        %v2285 = vpack.c.b16 %v2209, %v2208
        %v2286 = vpack.c.b16 %v2211, %v2210
        %v2287 = vpack.c.b16 %v2213, %v2212
        %v2288 = vpack.c.b16 %v2215, %v2214
        %v2289 = vpack.c.b16 %v2217, %v2216
        %v2290 = vpack.c.b16 %v2219, %v2218
        %v2291 = vpack.c.b16 %v2221, %v2220
        %v2292 = vpack.c.b16 %v2223, %v2222
        %v2293 = vpack.c.b16 %v2225, %v2224
        %v2294 = vpack.c.b16 %v2227, %v2226
        %v2295 = vpack.c.b16 %v2229, %v2228
        %v2296 = vpack.c.b16 %v2231, %v2230
        %v2297 = vpack.c.b16 %v2233, %v2232
        %v2298 = vpack.c.b16 %v2235, %v2234
        %v2299 = vpack.c.b16 %v2237, %v2236
        %v2300 = vpack.c.b16 %v2239, %v2238
        %v2301 = vpack.c.b16 %v2241, %v2240
        %v2302 = vpack.c.b16 %v2243, %v2242
        %v2303 = vpack.c.b16 %v2245, %v2244
        %v2304 = vpack.c.b16 %v2247, %v2246
        %v2305 = vpack.c.b16 %v2249, %v2248
        %2362 = vmatpush.bf16.msra.mxu0 %v2257
        %2363 = vmatpush.bf16.msra.mxu0 %v2256
        %2364 = vmatpush.bf16.msra.mxu0 %v2255
        %2365 = vmatpush.bf16.msra.mxu0 %v2254
        %2366 = vmatpush.bf16.msra.mxu0 %v2253
        %2367 = vmatpush.bf16.msra.mxu0 %v2252
        %2368 = vmatpush.bf16.msra.mxu0 %v2251
        %2369 = vmatpush.bf16.msra.mxu0 %v2250
        %2370 = vmatmul.bf16.gmra.mxu0 %v2002
        %v2371 = vpop.f32.mrf.mxu0
        %v2372 = vadd.f32 0.0, %v2371
        %v2373 = vpop.f32.mrf.mxu0
        %v2374 = vadd.f32 0.0, %v2373
        %2375 = vdwg.mxu0
        %2376 = vmatpush.bf16.msra.mxu0 %v2265
        %2377 = vmatpush.bf16.msra.mxu0 %v2264
        %2378 = vmatpush.bf16.msra.mxu0 %v2263
        %2379 = vmatpush.bf16.msra.mxu0 %v2262
        %2380 = vmatpush.bf16.msra.mxu0 %v2261
        %2381 = vmatpush.bf16.msra.mxu0 %v2260
        %2382 = vmatpush.bf16.msra.mxu0 %v2259
        %2383 = vmatpush.bf16.msra.mxu0 %v2258
        %2384 = vmatmul.bf16.gmra.mxu0 %v2005
        %v2385 = vpop.f32.mrf.mxu0
        %v2386 = vadd.f32 %v2372, %v2385
        %v2387 = vpop.f32.mrf.mxu0
        %v2388 = vadd.f32 %v2374, %v2387
        %2389 = vdwg.mxu0
        %2390 = vmatpush.bf16.msra.mxu0 %v2273
        %2391 = vmatpush.bf16.msra.mxu0 %v2272
        %2392 = vmatpush.bf16.msra.mxu0 %v2271
        %2393 = vmatpush.bf16.msra.mxu0 %v2270
        %2394 = vmatpush.bf16.msra.mxu0 %v2269
        %2395 = vmatpush.bf16.msra.mxu0 %v2268
        %2396 = vmatpush.bf16.msra.mxu0 %v2267
        %2397 = vmatpush.bf16.msra.mxu0 %v2266
        %2398 = vmatmul.bf16.gmra.mxu0 %v2007
        %v2399 = vpop.f32.mrf.mxu0
        %v2400 = vadd.f32 %v2386, %v2399
        %v2401 = vpop.f32.mrf.mxu0
        %v2402 = vadd.f32 %v2388, %v2401
        %2403 = vdwg.mxu0
        %2404 = vmatpush.bf16.msra.mxu0 %v2281
        %2405 = vmatpush.bf16.msra.mxu0 %v2280
        %2406 = vmatpush.bf16.msra.mxu0 %v2279
        %2407 = vmatpush.bf16.msra.mxu0 %v2278
        %2408 = vmatpush.bf16.msra.mxu0 %v2277
        %2409 = vmatpush.bf16.msra.mxu0 %v2276
        %2410 = vmatpush.bf16.msra.mxu0 %v2275
        %2411 = vmatpush.bf16.msra.mxu0 %v2274
        %2412 = vmatmul.bf16.gmra.mxu0 %v2010
        %v2413 = vpop.f32.mrf.mxu0
        %v2414 = vadd.f32 %v2400, %v2413
        %v2415 = vpop.f32.mrf.mxu0
        %v2416 = vadd.f32 %v2402, %v2415
        %2417 = vdwg.mxu0
        %2418 = vmatpush.bf16.msra.mxu0 %v2289
        %2419 = vmatpush.bf16.msra.mxu0 %v2288
        %2420 = vmatpush.bf16.msra.mxu0 %v2287
        %2421 = vmatpush.bf16.msra.mxu0 %v2286
        %2422 = vmatpush.bf16.msra.mxu0 %v2285
        %2423 = vmatpush.bf16.msra.mxu0 %v2284
        %2424 = vmatpush.bf16.msra.mxu0 %v2283
        %2425 = vmatpush.bf16.msra.mxu0 %v2282
        %2426 = vmatmul.bf16.gmra.mxu0 %v2013
        %v2427 = vpop.f32.mrf.mxu0
        %v2428 = vadd.f32 %v2414, %v2427
        %v2429 = vpop.f32.mrf.mxu0
        %v2430 = vadd.f32 %v2416, %v2429
        %2431 = vdwg.mxu0
        %2432 = vmatpush.bf16.msra.mxu0 %v2297
        %2433 = vmatpush.bf16.msra.mxu0 %v2296
        %2434 = vmatpush.bf16.msra.mxu0 %v2295
        %2435 = vmatpush.bf16.msra.mxu0 %v2294
        %2436 = vmatpush.bf16.msra.mxu0 %v2293
        %2437 = vmatpush.bf16.msra.mxu0 %v2292
        %2438 = vmatpush.bf16.msra.mxu0 %v2291
        %2439 = vmatpush.bf16.msra.mxu0 %v2290
        %2440 = vmatmul.bf16.gmra.mxu0 %v2016
        %v2441 = vpop.f32.mrf.mxu0
        %v2442 = vadd.f32 %v2428, %v2441
        %v2443 = vpop.f32.mrf.mxu0
        %v2444 = vadd.f32 %v2430, %v2443
        %2445 = vdwg.mxu0
        %2446 = vmatpush.bf16.msra.mxu0 %v2305
        %2447 = vmatpush.bf16.msra.mxu0 %v2304
        %2448 = vmatpush.bf16.msra.mxu0 %v2303
        %2449 = vmatpush.bf16.msra.mxu0 %v2302
        %2450 = vmatpush.bf16.msra.mxu0 %v2301
        %2451 = vmatpush.bf16.msra.mxu0 %v2300
        %2452 = vmatpush.bf16.msra.mxu0 %v2299
        %2453 = vmatpush.bf16.msra.mxu0 %v2298
        %2454 = vmatmul.bf16.gmra.mxu0 %v2018
        %v2455 = vpop.f32.mrf.mxu0
        %v2456 = vadd.f32 %v2442, %v2455
        %v2457 = vpop.f32.mrf.mxu0
        %v2458 = vadd.f32 %v2444, %v2457
        %2459 = vdwg.mxu0
        %v2460 = vld [vmem:[#allocation6 + $0x4] sm:$0x1]
        %v2461 = vperm.slane %v2460, 0
        %v2462 = vadd.f32 %v2456, %v2461
        %v2463 = vadd.f32 %v2458, %v2461
        %v2464 = vmax.f32 %v2462, 0.0
        %v2465 = vmax.f32 %v2463, 0.0
        %v2466 = vpack.c.bf16 %v2464, %v2464
        %v2467 = vpack.c.bf16 %v2465, %v2465
        %2468 = vst [vmem:[#allocation2 + $0x8] sm:$0xf] %v2466
        %2469 = vst [vmem:[#allocation2 + $0xc] sm:$0xf] %v2467
        %v2470 = vld [vmem:[#allocation2] sm:$0xc]
        %v2471 = vld [vmem:[#allocation2 + $0x4] sm:$0xf]
        %v2472 = vld [vmem:[#allocation2 + $0x8] sm:$0x3]
        %v2473 = vld [vmem:[#allocation2] sm:$0x8]
        %v2474 = vld [vmem:[#allocation2 + $0x8] sm:$0x7]
        %v2475 = vld [vmem:[#allocation2 + $0x8] sm:$0xf]
        %v2476 = vld [vmem:[#allocation2 + $0x4] sm:$0xe]
        %v2477 = vld [vmem:[#allocation2 + $0x8] sm:$0xf]
        %v2478 = vld [vmem:[#allocation2 + $0xc] sm:$0x1]
        %v2479 = vld [vmem:[#allocation2 + $0x4] sm:$0xc]
        %v2480 = vld [vmem:[#allocation2 + $0xc] sm:$0x3]
        %v2481 = vld [vmem:[#allocation2 + $0x4] sm:$0x8]
        %v2482 = vld [vmem:[#allocation2 + $0xc] sm:$0x7]
        %v2486 = vunpack.c.l.b16 %v2470
        %v2487 = vunpack.c.l.b16 %v2471
        %v2488 = vunpack.c.l.b16 %v2472
        %v2489 = vpack.c.b16 %v2487, %v2486
        %v2490 = vpack.c.b16 %v2488, %v2488
        %v2493 = vunpack.c.l.b16 %v2473
        %v2494 = vunpack.c.l.b16 %v2474
        %v2495 = vpack.c.b16 %v2487, %v2493
        %v2496 = vpack.c.b16 %v2494, %v2494
        %v2497 = vrot.slane %v2495, 1
        %v2498 = vrot.slane %v2496, 1
        %v2499 = vsel %vm417, %v2497, %v2498
        %v2501 = vunpack.c.l.b16 %v2475
        %v2502 = vpack.c.b16 %v2501, %v2487
        %v2503 = vrot.slane %v2502, 6
        %v2507 = vunpack.c.l.b16 %v2476
        %v2508 = vunpack.c.l.b16 %v2477
        %v2509 = vunpack.c.l.b16 %v2478
        %v2510 = vpack.c.b16 %v2508, %v2507
        %v2511 = vpack.c.b16 %v2509, %v2509
        %v2512 = vrot.slane %v2510, 7
        %v2513 = vrot.slane %v2511, 7
        %v2514 = vsel %vm1863, %v2512, %v2513
        %v2517 = vunpack.c.l.b16 %v2479
        %v2518 = vunpack.c.l.b16 %v2480
        %v2519 = vpack.c.b16 %v2508, %v2517
        %v2520 = vpack.c.b16 %v2518, %v2518
        %v2523 = vunpack.c.l.b16 %v2481
        %v2524 = vunpack.c.l.b16 %v2482
        %v2525 = vpack.c.b16 %v2508, %v2523
        %v2526 = vpack.c.b16 %v2524, %v2524
        %v2527 = vrot.slane %v2525, 1
        %v2528 = vrot.slane %v2526, 1
        %v2529 = vsel %vm417, %v2527, %v2528
        %v2532 = vunpack.c.l.b16 %v2466
        %v2533 = vunpack.c.l.b16 %v2467
        %v2534 = vpack.c.b16 %v2533, %v2532
        %v2535 = vrot.slane %v2534, 6
        %v2536 = vld [vmem:[#allocation3 + $0x600] sm:$0xf]
        %v2537 = vld [vmem:[#allocation3 + $0x604] sm:$0xf]
        %v2538 = vld [vmem:[#allocation3 + $0x608] sm:$0xf]
        %v2539 = vld [vmem:[#allocation3 + $0x60c] sm:$0xf]
        %v2540 = vld [vmem:[#allocation3 + $0x610] sm:$0xf]
        %v2541 = vld [vmem:[#allocation3 + $0x614] sm:$0xf]
        %v2542 = vld [vmem:[#allocation3 + $0x618] sm:$0xf]
        %v2543 = vld [vmem:[#allocation3 + $0x61c] sm:$0xf]
        %v2544 = vld [vmem:[#allocation3 + $0x620] sm:$0xf]
        %v2545 = vld [vmem:[#allocation3 + $0x624] sm:$0xf]
        %v2546 = vld [vmem:[#allocation3 + $0x628] sm:$0xf]
        %v2547 = vld [vmem:[#allocation3 + $0x62c] sm:$0xf]
        %v2548 = vld [vmem:[#allocation3 + $0x630] sm:$0xf]
        %v2549 = vld [vmem:[#allocation3 + $0x634] sm:$0xf]
        %v2550 = vld [vmem:[#allocation3 + $0x638] sm:$0xf]
        %v2551 = vld [vmem:[#allocation3 + $0x63c] sm:$0xf]
        %v2552 = vld [vmem:[#allocation3 + $0x640] sm:$0xf]
        %v2553 = vld [vmem:[#allocation3 + $0x644] sm:$0xf]
        %v2554 = vld [vmem:[#allocation3 + $0x648] sm:$0xf]
        %v2555 = vld [vmem:[#allocation3 + $0x64c] sm:$0xf]
        %v2556 = vld [vmem:[#allocation3 + $0x650] sm:$0xf]
        %v2557 = vld [vmem:[#allocation3 + $0x654] sm:$0xf]
        %v2558 = vld [vmem:[#allocation3 + $0x658] sm:$0xf]
        %v2559 = vld [vmem:[#allocation3 + $0x65c] sm:$0xf]
        %v2560 = vld [vmem:[#allocation3 + $0x660] sm:$0xf]
        %v2561 = vld [vmem:[#allocation3 + $0x664] sm:$0xf]
        %v2562 = vld [vmem:[#allocation3 + $0x668] sm:$0xf]
        %v2563 = vld [vmem:[#allocation3 + $0x66c] sm:$0xf]
        %v2564 = vld [vmem:[#allocation3 + $0x670] sm:$0xf]
        %v2565 = vld [vmem:[#allocation3 + $0x674] sm:$0xf]
        %v2566 = vld [vmem:[#allocation3 + $0x678] sm:$0xf]
        %v2567 = vld [vmem:[#allocation3 + $0x67c] sm:$0xf]
        %v2568 = vld [vmem:[#allocation3 + $0x680] sm:$0xf]
        %v2569 = vld [vmem:[#allocation3 + $0x684] sm:$0xf]
        %v2570 = vld [vmem:[#allocation3 + $0x688] sm:$0xf]
        %v2571 = vld [vmem:[#allocation3 + $0x68c] sm:$0xf]
        %v2572 = vld [vmem:[#allocation3 + $0x690] sm:$0xf]
        %v2573 = vld [vmem:[#allocation3 + $0x694] sm:$0xf]
        %v2574 = vld [vmem:[#allocation3 + $0x698] sm:$0xf]
        %v2575 = vld [vmem:[#allocation3 + $0x69c] sm:$0xf]
        %v2576 = vld [vmem:[#allocation3 + $0x6a0] sm:$0xf]
        %v2577 = vld [vmem:[#allocation3 + $0x6a4] sm:$0xf]
        %v2578 = vld [vmem:[#allocation3 + $0x6a8] sm:$0xf]
        %v2579 = vld [vmem:[#allocation3 + $0x6ac] sm:$0xf]
        %v2580 = vld [vmem:[#allocation3 + $0x6b0] sm:$0xf]
        %v2581 = vld [vmem:[#allocation3 + $0x6b4] sm:$0xf]
        %v2582 = vld [vmem:[#allocation3 + $0x6b8] sm:$0xf]
        %v2583 = vld [vmem:[#allocation3 + $0x6bc] sm:$0xf]
        %v2584 = vld [vmem:[#allocation3 + $0x6c0] sm:$0xf]
        %v2585 = vld [vmem:[#allocation3 + $0x6c4] sm:$0xf]
        %v2586 = vld [vmem:[#allocation3 + $0x6c8] sm:$0xf]
        %v2587 = vld [vmem:[#allocation3 + $0x6cc] sm:$0xf]
        %v2588 = vld [vmem:[#allocation3 + $0x6d0] sm:$0xf]
        %v2589 = vld [vmem:[#allocation3 + $0x6d4] sm:$0xf]
        %v2590 = vld [vmem:[#allocation3 + $0x6d8] sm:$0xf]
        %v2591 = vld [vmem:[#allocation3 + $0x6dc] sm:$0xf]
        %v2592 = vld [vmem:[#allocation3 + $0x6e0] sm:$0xf]
        %v2593 = vld [vmem:[#allocation3 + $0x6e4] sm:$0xf]
        %v2594 = vld [vmem:[#allocation3 + $0x6e8] sm:$0xf]
        %v2595 = vld [vmem:[#allocation3 + $0x6ec] sm:$0xf]
        %v2596 = vld [vmem:[#allocation3 + $0x6f0] sm:$0xf]
        %v2597 = vld [vmem:[#allocation3 + $0x6f4] sm:$0xf]
        %v2598 = vld [vmem:[#allocation3 + $0x6f8] sm:$0xf]
        %v2599 = vld [vmem:[#allocation3 + $0x6fc] sm:$0xf]
        %v2600 = vld [vmem:[#allocation3 + $0x700] sm:$0xf]
        %v2601 = vld [vmem:[#allocation3 + $0x704] sm:$0xf]
        %v2602 = vld [vmem:[#allocation3 + $0x708] sm:$0xf]
        %v2603 = vld [vmem:[#allocation3 + $0x70c] sm:$0xf]
        %v2604 = vld [vmem:[#allocation3 + $0x710] sm:$0xf]
        %v2605 = vld [vmem:[#allocation3 + $0x714] sm:$0xf]
        %v2606 = vld [vmem:[#allocation3 + $0x718] sm:$0xf]
        %v2607 = vld [vmem:[#allocation3 + $0x71c] sm:$0xf]
        %v2608 = vld [vmem:[#allocation3 + $0x720] sm:$0xf]
        %v2609 = vld [vmem:[#allocation3 + $0x724] sm:$0xf]
        %v2610 = vld [vmem:[#allocation3 + $0x728] sm:$0xf]
        %v2611 = vld [vmem:[#allocation3 + $0x72c] sm:$0xf]
        %v2612 = vld [vmem:[#allocation3 + $0x730] sm:$0xf]
        %v2613 = vld [vmem:[#allocation3 + $0x734] sm:$0xf]
        %v2614 = vld [vmem:[#allocation3 + $0x738] sm:$0xf]
        %v2615 = vld [vmem:[#allocation3 + $0x73c] sm:$0xf]
        %v2616 = vld [vmem:[#allocation3 + $0x740] sm:$0xf]
        %v2617 = vld [vmem:[#allocation3 + $0x744] sm:$0xf]
        %v2618 = vld [vmem:[#allocation3 + $0x748] sm:$0xf]
        %v2619 = vld [vmem:[#allocation3 + $0x74c] sm:$0xf]
        %v2620 = vld [vmem:[#allocation3 + $0x750] sm:$0xf]
        %v2621 = vld [vmem:[#allocation3 + $0x754] sm:$0xf]
        %v2622 = vld [vmem:[#allocation3 + $0x758] sm:$0xf]
        %v2623 = vld [vmem:[#allocation3 + $0x75c] sm:$0xf]
        %v2624 = vld [vmem:[#allocation3 + $0x760] sm:$0xf]
        %v2625 = vld [vmem:[#allocation3 + $0x764] sm:$0xf]
        %v2626 = vld [vmem:[#allocation3 + $0x768] sm:$0xf]
        %v2627 = vld [vmem:[#allocation3 + $0x76c] sm:$0xf]
        %v2628 = vld [vmem:[#allocation3 + $0x770] sm:$0xf]
        %v2629 = vld [vmem:[#allocation3 + $0x774] sm:$0xf]
        %v2630 = vld [vmem:[#allocation3 + $0x778] sm:$0xf]
        %v2631 = vld [vmem:[#allocation3 + $0x77c] sm:$0xf]
        %v2632 = vld [vmem:[#allocation3 + $0x780] sm:$0xf]
        %v2633 = vld [vmem:[#allocation3 + $0x784] sm:$0xf]
        %v2634 = vld [vmem:[#allocation3 + $0x788] sm:$0xf]
        %v2635 = vld [vmem:[#allocation3 + $0x78c] sm:$0xf]
        %v2636 = vld [vmem:[#allocation3 + $0x790] sm:$0xf]
        %v2637 = vld [vmem:[#allocation3 + $0x794] sm:$0xf]
        %v2638 = vld [vmem:[#allocation3 + $0x798] sm:$0xf]
        %v2639 = vld [vmem:[#allocation3 + $0x79c] sm:$0xf]
        %v2640 = vld [vmem:[#allocation3 + $0x7a0] sm:$0xf]
        %v2641 = vld [vmem:[#allocation3 + $0x7a4] sm:$0xf]
        %v2642 = vld [vmem:[#allocation3 + $0x7a8] sm:$0xf]
        %v2643 = vld [vmem:[#allocation3 + $0x7ac] sm:$0xf]
        %v2644 = vld [vmem:[#allocation3 + $0x7b0] sm:$0xf]
        %v2645 = vld [vmem:[#allocation3 + $0x7b4] sm:$0xf]
        %v2646 = vld [vmem:[#allocation3 + $0x7b8] sm:$0xf]
        %v2647 = vld [vmem:[#allocation3 + $0x7bc] sm:$0xf]
        %v2648 = vrot.slane %v2489, 2
        %v2649 = vrot.slane %v2490, 2
        %v2650 = vsel %vm445, %v2648, %v2649
        %v2651 = vrot.slane %v2499, 2
        %v2652 = vrot.slane %v2498, 2
        %v2653 = vsel %vm445, %v2651, %v2652
        %v2654 = vrot.slane %v2503, 2
        %v2655 = vsel %vm445, %v2654, %v2654
        %v2656 = vrot.slane %v2512, 2
        %v2657 = vrot.slane %v2514, 2
        %v2658 = vsel %vm445, %v2656, %v2657
        %v2659 = vrot.slane %v2519, 2
        %v2660 = vrot.slane %v2520, 2
        %v2661 = vsel %vm445, %v2659, %v2660
        %v2662 = vrot.slane %v2529, 2
        %v2663 = vrot.slane %v2528, 2
        %v2664 = vsel %vm445, %v2662, %v2663
        %v2665 = vrot.slane %v2535, 2
        %v2666 = vsel %vm445, %v2665, %v2665
        %v2786 = vunpack.c.l.b16 %v2536
        %v2787 = vunpack.c.l.b16 %v2537
        %v2788 = vunpack.c.l.b16 %v2538
        %v2789 = vunpack.c.l.b16 %v2539
        %v2790 = vunpack.c.l.b16 %v2540
        %v2791 = vunpack.c.l.b16 %v2541
        %v2792 = vunpack.c.l.b16 %v2542
        %v2793 = vunpack.c.l.b16 %v2543
        %v2794 = vunpack.c.l.b16 %v2544
        %v2795 = vunpack.c.l.b16 %v2545
        %v2796 = vunpack.c.l.b16 %v2546
        %v2797 = vunpack.c.l.b16 %v2547
        %v2798 = vunpack.c.l.b16 %v2548
        %v2799 = vunpack.c.l.b16 %v2549
        %v2800 = vunpack.c.l.b16 %v2550
        %v2801 = vunpack.c.l.b16 %v2551
        %v2802 = vunpack.c.l.b16 %v2552
        %v2803 = vunpack.c.l.b16 %v2553
        %v2804 = vunpack.c.l.b16 %v2554
        %v2805 = vunpack.c.l.b16 %v2555
        %v2806 = vunpack.c.l.b16 %v2556
        %v2807 = vunpack.c.l.b16 %v2557
        %v2808 = vunpack.c.l.b16 %v2558
        %v2809 = vunpack.c.l.b16 %v2559
        %v2810 = vunpack.c.l.b16 %v2560
        %v2811 = vunpack.c.l.b16 %v2561
        %v2812 = vunpack.c.l.b16 %v2562
        %v2813 = vunpack.c.l.b16 %v2563
        %v2814 = vunpack.c.l.b16 %v2564
        %v2815 = vunpack.c.l.b16 %v2565
        %v2816 = vunpack.c.l.b16 %v2566
        %v2817 = vunpack.c.l.b16 %v2567
        %v2818 = vunpack.c.l.b16 %v2568
        %v2819 = vunpack.c.l.b16 %v2569
        %v2820 = vunpack.c.l.b16 %v2570
        %v2821 = vunpack.c.l.b16 %v2571
        %v2822 = vunpack.c.l.b16 %v2572
        %v2823 = vunpack.c.l.b16 %v2573
        %v2824 = vunpack.c.l.b16 %v2574
        %v2825 = vunpack.c.l.b16 %v2575
        %v2826 = vunpack.c.l.b16 %v2576
        %v2827 = vunpack.c.l.b16 %v2577
        %v2828 = vunpack.c.l.b16 %v2578
        %v2829 = vunpack.c.l.b16 %v2579
        %v2830 = vunpack.c.l.b16 %v2580
        %v2831 = vunpack.c.l.b16 %v2581
        %v2832 = vunpack.c.l.b16 %v2582
        %v2833 = vunpack.c.l.b16 %v2583
        %v2834 = vunpack.c.l.b16 %v2584
        %v2835 = vunpack.c.l.b16 %v2585
        %v2836 = vunpack.c.l.b16 %v2586
        %v2837 = vunpack.c.l.b16 %v2587
        %v2838 = vunpack.c.l.b16 %v2588
        %v2839 = vunpack.c.l.b16 %v2589
        %v2840 = vunpack.c.l.b16 %v2590
        %v2841 = vunpack.c.l.b16 %v2591
        %v2842 = vunpack.c.l.b16 %v2592
        %v2843 = vunpack.c.l.b16 %v2593
        %v2844 = vunpack.c.l.b16 %v2594
        %v2845 = vunpack.c.l.b16 %v2595
        %v2846 = vunpack.c.l.b16 %v2596
        %v2847 = vunpack.c.l.b16 %v2597
        %v2848 = vunpack.c.l.b16 %v2598
        %v2849 = vunpack.c.l.b16 %v2599
        %v2850 = vunpack.c.l.b16 %v2600
        %v2851 = vunpack.c.l.b16 %v2601
        %v2852 = vunpack.c.l.b16 %v2602
        %v2853 = vunpack.c.l.b16 %v2603
        %v2854 = vunpack.c.l.b16 %v2604
        %v2855 = vunpack.c.l.b16 %v2605
        %v2856 = vunpack.c.l.b16 %v2606
        %v2857 = vunpack.c.l.b16 %v2607
        %v2858 = vunpack.c.l.b16 %v2608
        %v2859 = vunpack.c.l.b16 %v2609
        %v2860 = vunpack.c.l.b16 %v2610
        %v2861 = vunpack.c.l.b16 %v2611
        %v2862 = vunpack.c.l.b16 %v2612
        %v2863 = vunpack.c.l.b16 %v2613
        %v2864 = vunpack.c.l.b16 %v2614
        %v2865 = vunpack.c.l.b16 %v2615
        %v2866 = vunpack.c.l.b16 %v2616
        %v2867 = vunpack.c.l.b16 %v2617
        %v2868 = vunpack.c.l.b16 %v2618
        %v2869 = vunpack.c.l.b16 %v2619
        %v2870 = vunpack.c.l.b16 %v2620
        %v2871 = vunpack.c.l.b16 %v2621
        %v2872 = vunpack.c.l.b16 %v2622
        %v2873 = vunpack.c.l.b16 %v2623
        %v2874 = vunpack.c.l.b16 %v2624
        %v2875 = vunpack.c.l.b16 %v2625
        %v2876 = vunpack.c.l.b16 %v2626
        %v2877 = vunpack.c.l.b16 %v2627
        %v2878 = vunpack.c.l.b16 %v2628
        %v2879 = vunpack.c.l.b16 %v2629
        %v2880 = vunpack.c.l.b16 %v2630
        %v2881 = vunpack.c.l.b16 %v2631
        %v2882 = vunpack.c.l.b16 %v2632
        %v2883 = vunpack.c.l.b16 %v2633
        %v2884 = vunpack.c.l.b16 %v2634
        %v2885 = vunpack.c.l.b16 %v2635
        %v2886 = vunpack.c.l.b16 %v2636
        %v2887 = vunpack.c.l.b16 %v2637
        %v2888 = vunpack.c.l.b16 %v2638
        %v2889 = vunpack.c.l.b16 %v2639
        %v2890 = vunpack.c.l.b16 %v2640
        %v2891 = vunpack.c.l.b16 %v2641
        %v2892 = vunpack.c.l.b16 %v2642
        %v2893 = vunpack.c.l.b16 %v2643
        %v2894 = vunpack.c.l.b16 %v2644
        %v2895 = vunpack.c.l.b16 %v2645
        %v2896 = vunpack.c.l.b16 %v2646
        %v2897 = vunpack.c.l.b16 %v2647
        %v2898 = vpack.c.b16 %v2787, %v2786
        %v2899 = vpack.c.b16 %v2789, %v2788
        %v2900 = vpack.c.b16 %v2791, %v2790
        %v2901 = vpack.c.b16 %v2793, %v2792
        %v2902 = vpack.c.b16 %v2795, %v2794
        %v2903 = vpack.c.b16 %v2797, %v2796
        %v2904 = vpack.c.b16 %v2799, %v2798
        %v2905 = vpack.c.b16 %v2801, %v2800
        %v2906 = vpack.c.b16 %v2803, %v2802
        %v2907 = vpack.c.b16 %v2805, %v2804
        %v2908 = vpack.c.b16 %v2807, %v2806
        %v2909 = vpack.c.b16 %v2809, %v2808
        %v2910 = vpack.c.b16 %v2811, %v2810
        %v2911 = vpack.c.b16 %v2813, %v2812
        %v2912 = vpack.c.b16 %v2815, %v2814
        %v2913 = vpack.c.b16 %v2817, %v2816
        %v2914 = vpack.c.b16 %v2819, %v2818
        %v2915 = vpack.c.b16 %v2821, %v2820
        %v2916 = vpack.c.b16 %v2823, %v2822
        %v2917 = vpack.c.b16 %v2825, %v2824
        %v2918 = vpack.c.b16 %v2827, %v2826
        %v2919 = vpack.c.b16 %v2829, %v2828
        %v2920 = vpack.c.b16 %v2831, %v2830
        %v2921 = vpack.c.b16 %v2833, %v2832
        %v2922 = vpack.c.b16 %v2835, %v2834
        %v2923 = vpack.c.b16 %v2837, %v2836
        %v2924 = vpack.c.b16 %v2839, %v2838
        %v2925 = vpack.c.b16 %v2841, %v2840
        %v2926 = vpack.c.b16 %v2843, %v2842
        %v2927 = vpack.c.b16 %v2845, %v2844
        %v2928 = vpack.c.b16 %v2847, %v2846
        %v2929 = vpack.c.b16 %v2849, %v2848
        %v2930 = vpack.c.b16 %v2851, %v2850
        %v2931 = vpack.c.b16 %v2853, %v2852
        %v2932 = vpack.c.b16 %v2855, %v2854
        %v2933 = vpack.c.b16 %v2857, %v2856
        %v2934 = vpack.c.b16 %v2859, %v2858
        %v2935 = vpack.c.b16 %v2861, %v2860
        %v2936 = vpack.c.b16 %v2863, %v2862
        %v2937 = vpack.c.b16 %v2865, %v2864
        %v2938 = vpack.c.b16 %v2867, %v2866
        %v2939 = vpack.c.b16 %v2869, %v2868
        %v2940 = vpack.c.b16 %v2871, %v2870
        %v2941 = vpack.c.b16 %v2873, %v2872
        %v2942 = vpack.c.b16 %v2875, %v2874
        %v2943 = vpack.c.b16 %v2877, %v2876
        %v2944 = vpack.c.b16 %v2879, %v2878
        %v2945 = vpack.c.b16 %v2881, %v2880
        %v2946 = vpack.c.b16 %v2883, %v2882
        %v2947 = vpack.c.b16 %v2885, %v2884
        %v2948 = vpack.c.b16 %v2887, %v2886
        %v2949 = vpack.c.b16 %v2889, %v2888
        %v2950 = vpack.c.b16 %v2891, %v2890
        %v2951 = vpack.c.b16 %v2893, %v2892
        %v2952 = vpack.c.b16 %v2895, %v2894
        %v2953 = vpack.c.b16 %v2897, %v2896
        %3010 = vmatpush.bf16.msra.mxu0 %v2905
        %3011 = vmatpush.bf16.msra.mxu0 %v2904
        %3012 = vmatpush.bf16.msra.mxu0 %v2903
        %3013 = vmatpush.bf16.msra.mxu0 %v2902
        %3014 = vmatpush.bf16.msra.mxu0 %v2901
        %3015 = vmatpush.bf16.msra.mxu0 %v2900
        %3016 = vmatpush.bf16.msra.mxu0 %v2899
        %3017 = vmatpush.bf16.msra.mxu0 %v2898
        %3018 = vmatmul.bf16.gmra.mxu0 %v2650
        %v3019 = vpop.f32.mrf.mxu0
        %v3020 = vadd.f32 0.0, %v3019
        %v3021 = vpop.f32.mrf.mxu0
        %v3022 = vadd.f32 0.0, %v3021
        %3023 = vdwg.mxu0
        %3024 = vmatpush.bf16.msra.mxu0 %v2913
        %3025 = vmatpush.bf16.msra.mxu0 %v2912
        %3026 = vmatpush.bf16.msra.mxu0 %v2911
        %3027 = vmatpush.bf16.msra.mxu0 %v2910
        %3028 = vmatpush.bf16.msra.mxu0 %v2909
        %3029 = vmatpush.bf16.msra.mxu0 %v2908
        %3030 = vmatpush.bf16.msra.mxu0 %v2907
        %3031 = vmatpush.bf16.msra.mxu0 %v2906
        %3032 = vmatmul.bf16.gmra.mxu0 %v2653
        %v3033 = vpop.f32.mrf.mxu0
        %v3034 = vadd.f32 %v3020, %v3033
        %v3035 = vpop.f32.mrf.mxu0
        %v3036 = vadd.f32 %v3022, %v3035
        %3037 = vdwg.mxu0
        %3038 = vmatpush.bf16.msra.mxu0 %v2921
        %3039 = vmatpush.bf16.msra.mxu0 %v2920
        %3040 = vmatpush.bf16.msra.mxu0 %v2919
        %3041 = vmatpush.bf16.msra.mxu0 %v2918
        %3042 = vmatpush.bf16.msra.mxu0 %v2917
        %3043 = vmatpush.bf16.msra.mxu0 %v2916
        %3044 = vmatpush.bf16.msra.mxu0 %v2915
        %3045 = vmatpush.bf16.msra.mxu0 %v2914
        %3046 = vmatmul.bf16.gmra.mxu0 %v2655
        %v3047 = vpop.f32.mrf.mxu0
        %v3048 = vadd.f32 %v3034, %v3047
        %v3049 = vpop.f32.mrf.mxu0
        %v3050 = vadd.f32 %v3036, %v3049
        %3051 = vdwg.mxu0
        %3052 = vmatpush.bf16.msra.mxu0 %v2929
        %3053 = vmatpush.bf16.msra.mxu0 %v2928
        %3054 = vmatpush.bf16.msra.mxu0 %v2927
        %3055 = vmatpush.bf16.msra.mxu0 %v2926
        %3056 = vmatpush.bf16.msra.mxu0 %v2925
        %3057 = vmatpush.bf16.msra.mxu0 %v2924
        %3058 = vmatpush.bf16.msra.mxu0 %v2923
        %3059 = vmatpush.bf16.msra.mxu0 %v2922
        %3060 = vmatmul.bf16.gmra.mxu0 %v2658
        %v3061 = vpop.f32.mrf.mxu0
        %v3062 = vadd.f32 %v3048, %v3061
        %v3063 = vpop.f32.mrf.mxu0
        %v3064 = vadd.f32 %v3050, %v3063
        %3065 = vdwg.mxu0
        %3066 = vmatpush.bf16.msra.mxu0 %v2937
        %3067 = vmatpush.bf16.msra.mxu0 %v2936
        %3068 = vmatpush.bf16.msra.mxu0 %v2935
        %3069 = vmatpush.bf16.msra.mxu0 %v2934
        %3070 = vmatpush.bf16.msra.mxu0 %v2933
        %3071 = vmatpush.bf16.msra.mxu0 %v2932
        %3072 = vmatpush.bf16.msra.mxu0 %v2931
        %3073 = vmatpush.bf16.msra.mxu0 %v2930
        %3074 = vmatmul.bf16.gmra.mxu0 %v2661
        %v3075 = vpop.f32.mrf.mxu0
        %v3076 = vadd.f32 %v3062, %v3075
        %v3077 = vpop.f32.mrf.mxu0
        %v3078 = vadd.f32 %v3064, %v3077
        %3079 = vdwg.mxu0
        %3080 = vmatpush.bf16.msra.mxu0 %v2945
        %3081 = vmatpush.bf16.msra.mxu0 %v2944
        %3082 = vmatpush.bf16.msra.mxu0 %v2943
        %3083 = vmatpush.bf16.msra.mxu0 %v2942
        %3084 = vmatpush.bf16.msra.mxu0 %v2941
        %3085 = vmatpush.bf16.msra.mxu0 %v2940
        %3086 = vmatpush.bf16.msra.mxu0 %v2939
        %3087 = vmatpush.bf16.msra.mxu0 %v2938
        %3088 = vmatmul.bf16.gmra.mxu0 %v2664
        %v3089 = vpop.f32.mrf.mxu0
        %v3090 = vadd.f32 %v3076, %v3089
        %v3091 = vpop.f32.mrf.mxu0
        %v3092 = vadd.f32 %v3078, %v3091
        %3093 = vdwg.mxu0
        %3094 = vmatpush.bf16.msra.mxu0 %v2953
        %3095 = vmatpush.bf16.msra.mxu0 %v2952
        %3096 = vmatpush.bf16.msra.mxu0 %v2951
        %3097 = vmatpush.bf16.msra.mxu0 %v2950
        %3098 = vmatpush.bf16.msra.mxu0 %v2949
        %3099 = vmatpush.bf16.msra.mxu0 %v2948
        %3100 = vmatpush.bf16.msra.mxu0 %v2947
        %3101 = vmatpush.bf16.msra.mxu0 %v2946
        %3102 = vmatmul.bf16.gmra.mxu0 %v2666
        %v3103 = vpop.f32.mrf.mxu0
        %v3104 = vadd.f32 %v3090, %v3103
        %v3105 = vpop.f32.mrf.mxu0
        %v3106 = vadd.f32 %v3092, %v3105
        %3107 = vdwg.mxu0
        %v3108 = vld [vmem:[#allocation6 + $0x5] sm:$0x1]
        %v3109 = vperm.slane %v3108, 0
        %v3110 = vadd.f32 %v3104, %v3109
        %v3111 = vadd.f32 %v3106, %v3109
        %v3112 = vmax.f32 %v3110, 0.0
        %v3113 = vmax.f32 %v3111, 0.0
        %v3114 = vadd.f32 %v3112, %v1815
        %v3115 = vadd.f32 %v3113, %v1816
        %v3116 = vmax.f32 %v3114, 0.0
        %v3117 = vmax.f32 %v3115, 0.0
        %v3118 = vpack.c.bf16 %v3116, %v3116
        %v3119 = vpack.c.bf16 %v3117, %v3117
        %3120 = vst [vmem:[#allocation2 + $0x8] sm:$0xf] %v3118
        %3121 = vst [vmem:[#allocation2 + $0xc] sm:$0xf] %v3119
        %v3122 = vld [vmem:[#allocation2] sm:$0xc]
        %v3123 = vld [vmem:[#allocation2 + $0x4] sm:$0xf]
        %v3124 = vld [vmem:[#allocation2 + $0x8] sm:$0x3]
        %v3125 = vld [vmem:[#allocation2 + $0x8] sm:$0xf]
        %v3126 = vld [vmem:[#allocation2 + $0x4] sm:$0xc]
        %v3127 = vld [vmem:[#allocation2 + $0x8] sm:$0xf]
        %v3128 = vld [vmem:[#allocation2 + $0xc] sm:$0x3]
        %v3132 = vunpack.c.l.b16 %v3122
        %v3133 = vunpack.c.l.b16 %v3123
        %v3134 = vunpack.c.l.b16 %v3124
        %v3135 = vpack.c.b16 %v3133, %v3132
        %v3136 = vpack.c.b16 %v3134, %v3134
        %v3138 = vunpack.c.l.b16 %v3125
        %v3139 = vpack.c.b16 %v3138, %v3133
        %v3140 = vrot.slane %v3139, 6
        %v3144 = vunpack.c.l.b16 %v3126
        %v3145 = vunpack.c.l.b16 %v3127
        %v3146 = vunpack.c.l.b16 %v3128
        %v3147 = vpack.c.b16 %v3145, %v3144
        %v3148 = vpack.c.b16 %v3146, %v3146
        %v3151 = vunpack.c.l.b16 %v3118
        %v3152 = vunpack.c.l.b16 %v3119
        %v3153 = vpack.c.b16 %v3152, %v3151
        %v3154 = vrot.slane %v3153, 6
        %v3155 = vld [vmem:[#allocation3 + $0x7c0] sm:$0xf]
        %v3156 = vld [vmem:[#allocation3 + $0x7c4] sm:$0xf]
        %v3157 = vld [vmem:[#allocation3 + $0x7c8] sm:$0xf]
        %v3158 = vld [vmem:[#allocation3 + $0x7cc] sm:$0xf]
        %v3159 = vld [vmem:[#allocation3 + $0x7d0] sm:$0xf]
        %v3160 = vld [vmem:[#allocation3 + $0x7d4] sm:$0xf]
        %v3161 = vld [vmem:[#allocation3 + $0x7d8] sm:$0xf]
        %v3162 = vld [vmem:[#allocation3 + $0x7dc] sm:$0xf]
        %v3163 = vld [vmem:[#allocation3 + $0x7e0] sm:$0xf]
        %v3164 = vld [vmem:[#allocation3 + $0x7e4] sm:$0xf]
        %v3165 = vld [vmem:[#allocation3 + $0x7e8] sm:$0xf]
        %v3166 = vld [vmem:[#allocation3 + $0x7ec] sm:$0xf]
        %v3167 = vld [vmem:[#allocation3 + $0x7f0] sm:$0xf]
        %v3168 = vld [vmem:[#allocation3 + $0x7f4] sm:$0xf]
        %v3169 = vld [vmem:[#allocation3 + $0x7f8] sm:$0xf]
        %v3170 = vld [vmem:[#allocation3 + $0x7fc] sm:$0xf]
        %v3171 = vld [vmem:[#allocation3 + $0x800] sm:$0xf]
        %v3172 = vld [vmem:[#allocation3 + $0x804] sm:$0xf]
        %v3173 = vld [vmem:[#allocation3 + $0x808] sm:$0xf]
        %v3174 = vld [vmem:[#allocation3 + $0x80c] sm:$0xf]
        %v3175 = vld [vmem:[#allocation3 + $0x810] sm:$0xf]
        %v3176 = vld [vmem:[#allocation3 + $0x814] sm:$0xf]
        %v3177 = vld [vmem:[#allocation3 + $0x818] sm:$0xf]
        %v3178 = vld [vmem:[#allocation3 + $0x81c] sm:$0xf]
        %v3179 = vld [vmem:[#allocation3 + $0x820] sm:$0xf]
        %v3180 = vld [vmem:[#allocation3 + $0x824] sm:$0xf]
        %v3181 = vld [vmem:[#allocation3 + $0x828] sm:$0xf]
        %v3182 = vld [vmem:[#allocation3 + $0x82c] sm:$0xf]
        %v3183 = vld [vmem:[#allocation3 + $0x830] sm:$0xf]
        %v3184 = vld [vmem:[#allocation3 + $0x834] sm:$0xf]
        %v3185 = vld [vmem:[#allocation3 + $0x838] sm:$0xf]
        %v3186 = vld [vmem:[#allocation3 + $0x83c] sm:$0xf]
        %v3187 = vld [vmem:[#allocation3 + $0x840] sm:$0xf]
        %v3188 = vld [vmem:[#allocation3 + $0x844] sm:$0xf]
        %v3189 = vld [vmem:[#allocation3 + $0x848] sm:$0xf]
        %v3190 = vld [vmem:[#allocation3 + $0x84c] sm:$0xf]
        %v3191 = vld [vmem:[#allocation3 + $0x850] sm:$0xf]
        %v3192 = vld [vmem:[#allocation3 + $0x854] sm:$0xf]
        %v3193 = vld [vmem:[#allocation3 + $0x858] sm:$0xf]
        %v3194 = vld [vmem:[#allocation3 + $0x85c] sm:$0xf]
        %v3195 = vld [vmem:[#allocation3 + $0x860] sm:$0xf]
        %v3196 = vld [vmem:[#allocation3 + $0x864] sm:$0xf]
        %v3197 = vld [vmem:[#allocation3 + $0x868] sm:$0xf]
        %v3198 = vld [vmem:[#allocation3 + $0x86c] sm:$0xf]
        %v3199 = vld [vmem:[#allocation3 + $0x870] sm:$0xf]
        %v3200 = vld [vmem:[#allocation3 + $0x874] sm:$0xf]
        %v3201 = vld [vmem:[#allocation3 + $0x878] sm:$0xf]
        %v3202 = vld [vmem:[#allocation3 + $0x87c] sm:$0xf]
        %v3203 = vld [vmem:[#allocation3 + $0x880] sm:$0xf]
        %v3204 = vld [vmem:[#allocation3 + $0x884] sm:$0xf]
        %v3205 = vld [vmem:[#allocation3 + $0x888] sm:$0xf]
        %v3206 = vld [vmem:[#allocation3 + $0x88c] sm:$0xf]
        %v3207 = vld [vmem:[#allocation3 + $0x890] sm:$0xf]
        %v3208 = vld [vmem:[#allocation3 + $0x894] sm:$0xf]
        %v3209 = vld [vmem:[#allocation3 + $0x898] sm:$0xf]
        %v3210 = vld [vmem:[#allocation3 + $0x89c] sm:$0xf]
        %v3211 = vld [vmem:[#allocation3 + $0x8a0] sm:$0xf]
        %v3212 = vld [vmem:[#allocation3 + $0x8a4] sm:$0xf]
        %v3213 = vld [vmem:[#allocation3 + $0x8a8] sm:$0xf]
        %v3214 = vld [vmem:[#allocation3 + $0x8ac] sm:$0xf]
        %v3215 = vld [vmem:[#allocation3 + $0x8b0] sm:$0xf]
        %v3216 = vld [vmem:[#allocation3 + $0x8b4] sm:$0xf]
        %v3217 = vld [vmem:[#allocation3 + $0x8b8] sm:$0xf]
        %v3218 = vld [vmem:[#allocation3 + $0x8bc] sm:$0xf]
        %v3219 = vrot.slane %v3135, 2
        %v3220 = vrot.slane %v3136, 2
        %v3221 = vsel %vm445, %v3219, %v3220
        %v3222 = vrot.slane %v3140, 2
        %v3223 = vsel %vm445, %v3222, %v3222
        %v3224 = vrot.slane %v3147, 2
        %v3225 = vrot.slane %v3148, 2
        %v3226 = vsel %vm445, %v3224, %v3225
        %v3227 = vrot.slane %v3154, 2
        %v3228 = vsel %vm445, %v3227, %v3227
        %v3297 = vunpack.c.l.b16 %v3155
        %v3298 = vunpack.c.l.b16 %v3156
        %v3299 = vunpack.c.l.b16 %v3157
        %v3300 = vunpack.c.l.b16 %v3158
        %v3301 = vunpack.c.l.b16 %v3159
        %v3302 = vunpack.c.l.b16 %v3160
        %v3303 = vunpack.c.l.b16 %v3161
        %v3304 = vunpack.c.l.b16 %v3162
        %v3305 = vunpack.c.l.b16 %v3163
        %v3306 = vunpack.c.l.b16 %v3164
        %v3307 = vunpack.c.l.b16 %v3165
        %v3308 = vunpack.c.l.b16 %v3166
        %v3309 = vunpack.c.l.b16 %v3167
        %v3310 = vunpack.c.l.b16 %v3168
        %v3311 = vunpack.c.l.b16 %v3169
        %v3312 = vunpack.c.l.b16 %v3170
        %v3313 = vunpack.c.l.b16 %v3171
        %v3314 = vunpack.c.l.b16 %v3172
        %v3315 = vunpack.c.l.b16 %v3173
        %v3316 = vunpack.c.l.b16 %v3174
        %v3317 = vunpack.c.l.b16 %v3175
        %v3318 = vunpack.c.l.b16 %v3176
        %v3319 = vunpack.c.l.b16 %v3177
        %v3320 = vunpack.c.l.b16 %v3178
        %v3321 = vunpack.c.l.b16 %v3179
        %v3322 = vunpack.c.l.b16 %v3180
        %v3323 = vunpack.c.l.b16 %v3181
        %v3324 = vunpack.c.l.b16 %v3182
        %v3325 = vunpack.c.l.b16 %v3183
        %v3326 = vunpack.c.l.b16 %v3184
        %v3327 = vunpack.c.l.b16 %v3185
        %v3328 = vunpack.c.l.b16 %v3186
        %v3329 = vunpack.c.l.b16 %v3187
        %v3330 = vunpack.c.l.b16 %v3188
        %v3331 = vunpack.c.l.b16 %v3189
        %v3332 = vunpack.c.l.b16 %v3190
        %v3333 = vunpack.c.l.b16 %v3191
        %v3334 = vunpack.c.l.b16 %v3192
        %v3335 = vunpack.c.l.b16 %v3193
        %v3336 = vunpack.c.l.b16 %v3194
        %v3337 = vunpack.c.l.b16 %v3195
        %v3338 = vunpack.c.l.b16 %v3196
        %v3339 = vunpack.c.l.b16 %v3197
        %v3340 = vunpack.c.l.b16 %v3198
        %v3341 = vunpack.c.l.b16 %v3199
        %v3342 = vunpack.c.l.b16 %v3200
        %v3343 = vunpack.c.l.b16 %v3201
        %v3344 = vunpack.c.l.b16 %v3202
        %v3345 = vunpack.c.l.b16 %v3203
        %v3346 = vunpack.c.l.b16 %v3204
        %v3347 = vunpack.c.l.b16 %v3205
        %v3348 = vunpack.c.l.b16 %v3206
        %v3349 = vunpack.c.l.b16 %v3207
        %v3350 = vunpack.c.l.b16 %v3208
        %v3351 = vunpack.c.l.b16 %v3209
        %v3352 = vunpack.c.l.b16 %v3210
        %v3353 = vunpack.c.l.b16 %v3211
        %v3354 = vunpack.c.l.b16 %v3212
        %v3355 = vunpack.c.l.b16 %v3213
        %v3356 = vunpack.c.l.b16 %v3214
        %v3357 = vunpack.c.l.b16 %v3215
        %v3358 = vunpack.c.l.b16 %v3216
        %v3359 = vunpack.c.l.b16 %v3217
        %v3360 = vunpack.c.l.b16 %v3218
        %v3361 = vpack.c.b16 %v3298, %v3297
        %v3362 = vpack.c.b16 %v3300, %v3299
        %v3363 = vpack.c.b16 %v3302, %v3301
        %v3364 = vpack.c.b16 %v3304, %v3303
        %v3365 = vpack.c.b16 %v3306, %v3305
        %v3366 = vpack.c.b16 %v3308, %v3307
        %v3367 = vpack.c.b16 %v3310, %v3309
        %v3368 = vpack.c.b16 %v3312, %v3311
        %v3369 = vpack.c.b16 %v3314, %v3313
        %v3370 = vpack.c.b16 %v3316, %v3315
        %v3371 = vpack.c.b16 %v3318, %v3317
        %v3372 = vpack.c.b16 %v3320, %v3319
        %v3373 = vpack.c.b16 %v3322, %v3321
        %v3374 = vpack.c.b16 %v3324, %v3323
        %v3375 = vpack.c.b16 %v3326, %v3325
        %v3376 = vpack.c.b16 %v3328, %v3327
        %v3377 = vpack.c.b16 %v3330, %v3329
        %v3378 = vpack.c.b16 %v3332, %v3331
        %v3379 = vpack.c.b16 %v3334, %v3333
        %v3380 = vpack.c.b16 %v3336, %v3335
        %v3381 = vpack.c.b16 %v3338, %v3337
        %v3382 = vpack.c.b16 %v3340, %v3339
        %v3383 = vpack.c.b16 %v3342, %v3341
        %v3384 = vpack.c.b16 %v3344, %v3343
        %v3385 = vpack.c.b16 %v3346, %v3345
        %v3386 = vpack.c.b16 %v3348, %v3347
        %v3387 = vpack.c.b16 %v3350, %v3349
        %v3388 = vpack.c.b16 %v3352, %v3351
        %v3389 = vpack.c.b16 %v3354, %v3353
        %v3390 = vpack.c.b16 %v3356, %v3355
        %v3391 = vpack.c.b16 %v3358, %v3357
        %v3392 = vpack.c.b16 %v3360, %v3359
        %3425 = vmatpush.bf16.msra.mxu0 %v3368
        %3426 = vmatpush.bf16.msra.mxu0 %v3367
        %3427 = vmatpush.bf16.msra.mxu0 %v3366
        %3428 = vmatpush.bf16.msra.mxu0 %v3365
        %3429 = vmatpush.bf16.msra.mxu0 %v3364
        %3430 = vmatpush.bf16.msra.mxu0 %v3363
        %3431 = vmatpush.bf16.msra.mxu0 %v3362
        %3432 = vmatpush.bf16.msra.mxu0 %v3361
        %3433 = vmatmul.bf16.gmra.mxu0 %v3221
        %v3434 = vpop.f32.mrf.mxu0
        %v3435 = vadd.f32 0.0, %v3434
        %v3436 = vpop.f32.mrf.mxu0
        %v3437 = vadd.f32 0.0, %v3436
        %3438 = vdwg.mxu0
        %3439 = vmatpush.bf16.msra.mxu0 %v3376
        %3440 = vmatpush.bf16.msra.mxu0 %v3375
        %3441 = vmatpush.bf16.msra.mxu0 %v3374
        %3442 = vmatpush.bf16.msra.mxu0 %v3373
        %3443 = vmatpush.bf16.msra.mxu0 %v3372
        %3444 = vmatpush.bf16.msra.mxu0 %v3371
        %3445 = vmatpush.bf16.msra.mxu0 %v3370
        %3446 = vmatpush.bf16.msra.mxu0 %v3369
        %3447 = vmatmul.bf16.gmra.mxu0 %v3223
        %v3448 = vpop.f32.mrf.mxu0
        %v3449 = vadd.f32 %v3435, %v3448
        %v3450 = vpop.f32.mrf.mxu0
        %v3451 = vadd.f32 %v3437, %v3450
        %3452 = vdwg.mxu0
        %3453 = vmatpush.bf16.msra.mxu0 %v3384
        %3454 = vmatpush.bf16.msra.mxu0 %v3383
        %3455 = vmatpush.bf16.msra.mxu0 %v3382
        %3456 = vmatpush.bf16.msra.mxu0 %v3381
        %3457 = vmatpush.bf16.msra.mxu0 %v3380
        %3458 = vmatpush.bf16.msra.mxu0 %v3379
        %3459 = vmatpush.bf16.msra.mxu0 %v3378
        %3460 = vmatpush.bf16.msra.mxu0 %v3377
        %3461 = vmatmul.bf16.gmra.mxu0 %v3226
        %v3462 = vpop.f32.mrf.mxu0
        %v3463 = vadd.f32 %v3449, %v3462
        %v3464 = vpop.f32.mrf.mxu0
        %v3465 = vadd.f32 %v3451, %v3464
        %3466 = vdwg.mxu0
        %3467 = vmatpush.bf16.msra.mxu0 %v3392
        %3468 = vmatpush.bf16.msra.mxu0 %v3391
        %3469 = vmatpush.bf16.msra.mxu0 %v3390
        %3470 = vmatpush.bf16.msra.mxu0 %v3389
        %3471 = vmatpush.bf16.msra.mxu0 %v3388
        %3472 = vmatpush.bf16.msra.mxu0 %v3387
        %3473 = vmatpush.bf16.msra.mxu0 %v3386
        %3474 = vmatpush.bf16.msra.mxu0 %v3385
        %3475 = vmatmul.bf16.gmra.mxu0 %v3228
        %v3476 = vpop.f32.mrf.mxu0
        %v3477 = vadd.f32 %v3463, %v3476
        %v3478 = vpop.f32.mrf.mxu0
        %v3479 = vadd.f32 %v3465, %v3478
        %3480 = vdwg.mxu0
        %v3481 = vld [vmem:[#allocation6 + $0x6] sm:$0x1]
        %v3482 = vperm.slane %v3481, 0
        %v3483 = vadd.f32 %v3477, %v3482
        %v3484 = vadd.f32 %v3479, %v3482
        %v3485 = vmax.f32 %v3483, 0.0
        %v3486 = vmax.f32 %v3484, 0.0
        %v3487 = vpack.c.bf16 %v3485, %v3485
        %v3488 = vpack.c.bf16 %v3486, %v3486
        %3489 = vst [vmem:[#allocation2 + $0x8] sm:$0xf] %v3487
        %3490 = vst [vmem:[#allocation2 + $0xc] sm:$0xf] %v3488
        %v3491 = vld [vmem:[#allocation2] sm:$0xc]
        %v3492 = vld [vmem:[#allocation2 + $0x4] sm:$0xf]
        %v3493 = vld [vmem:[#allocation2 + $0x8] sm:$0x3]
        %v3494 = vld [vmem:[#allocation2 + $0x8] sm:$0xf]
        %v3495 = vld [vmem:[#allocation2 + $0x4] sm:$0xc]
        %v3496 = vld [vmem:[#allocation2 + $0x8] sm:$0xf]
        %v3497 = vld [vmem:[#allocation2 + $0xc] sm:$0x3]
        %v3501 = vunpack.c.l.b16 %v3491
        %v3502 = vunpack.c.l.b16 %v3492
        %v3503 = vunpack.c.l.b16 %v3493
        %v3504 = vpack.c.b16 %v3502, %v3501
        %v3505 = vpack.c.b16 %v3503, %v3503
        %v3507 = vunpack.c.l.b16 %v3494
        %v3508 = vpack.c.b16 %v3507, %v3502
        %v3509 = vrot.slane %v3508, 6
        %v3513 = vunpack.c.l.b16 %v3495
        %v3514 = vunpack.c.l.b16 %v3496
        %v3515 = vunpack.c.l.b16 %v3497
        %v3516 = vpack.c.b16 %v3514, %v3513
        %v3517 = vpack.c.b16 %v3515, %v3515
        %v3520 = vunpack.c.l.b16 %v3487
        %v3521 = vunpack.c.l.b16 %v3488
        %v3522 = vpack.c.b16 %v3521, %v3520
        %v3523 = vrot.slane %v3522, 6
        %v3524 = vld [vmem:[#allocation3 + $0x8c0] sm:$0xf]
        %v3525 = vld [vmem:[#allocation3 + $0x8c4] sm:$0xf]
        %v3526 = vld [vmem:[#allocation3 + $0x8c8] sm:$0xf]
        %v3527 = vld [vmem:[#allocation3 + $0x8cc] sm:$0xf]
        %v3528 = vld [vmem:[#allocation3 + $0x8d0] sm:$0xf]
        %v3529 = vld [vmem:[#allocation3 + $0x8d4] sm:$0xf]
        %v3530 = vld [vmem:[#allocation3 + $0x8d8] sm:$0xf]
        %v3531 = vld [vmem:[#allocation3 + $0x8dc] sm:$0xf]
        %v3532 = vld [vmem:[#allocation3 + $0x8e0] sm:$0xf]
        %v3533 = vld [vmem:[#allocation3 + $0x8e4] sm:$0xf]
        %v3534 = vld [vmem:[#allocation3 + $0x8e8] sm:$0xf]
        %v3535 = vld [vmem:[#allocation3 + $0x8ec] sm:$0xf]
        %v3536 = vld [vmem:[#allocation3 + $0x8f0] sm:$0xf]
        %v3537 = vld [vmem:[#allocation3 + $0x8f4] sm:$0xf]
        %v3538 = vld [vmem:[#allocation3 + $0x8f8] sm:$0xf]
        %v3539 = vld [vmem:[#allocation3 + $0x8fc] sm:$0xf]
        %v3540 = vld [vmem:[#allocation3 + $0x900] sm:$0xf]
        %v3541 = vld [vmem:[#allocation3 + $0x904] sm:$0xf]
        %v3542 = vld [vmem:[#allocation3 + $0x908] sm:$0xf]
        %v3543 = vld [vmem:[#allocation3 + $0x90c] sm:$0xf]
        %v3544 = vld [vmem:[#allocation3 + $0x910] sm:$0xf]
        %v3545 = vld [vmem:[#allocation3 + $0x914] sm:$0xf]
        %v3546 = vld [vmem:[#allocation3 + $0x918] sm:$0xf]
        %v3547 = vld [vmem:[#allocation3 + $0x91c] sm:$0xf]
        %v3548 = vld [vmem:[#allocation3 + $0x920] sm:$0xf]
        %v3549 = vld [vmem:[#allocation3 + $0x924] sm:$0xf]
        %v3550 = vld [vmem:[#allocation3 + $0x928] sm:$0xf]
        %v3551 = vld [vmem:[#allocation3 + $0x92c] sm:$0xf]
        %v3552 = vld [vmem:[#allocation3 + $0x930] sm:$0xf]
        %v3553 = vld [vmem:[#allocation3 + $0x934] sm:$0xf]
        %v3554 = vld [vmem:[#allocation3 + $0x938] sm:$0xf]
        %v3555 = vld [vmem:[#allocation3 + $0x93c] sm:$0xf]
        %v3556 = vld [vmem:[#allocation3 + $0x940] sm:$0xf]
        %v3557 = vld [vmem:[#allocation3 + $0x944] sm:$0xf]
        %v3558 = vld [vmem:[#allocation3 + $0x948] sm:$0xf]
        %v3559 = vld [vmem:[#allocation3 + $0x94c] sm:$0xf]
        %v3560 = vld [vmem:[#allocation3 + $0x950] sm:$0xf]
        %v3561 = vld [vmem:[#allocation3 + $0x954] sm:$0xf]
        %v3562 = vld [vmem:[#allocation3 + $0x958] sm:$0xf]
        %v3563 = vld [vmem:[#allocation3 + $0x95c] sm:$0xf]
        %v3564 = vld [vmem:[#allocation3 + $0x960] sm:$0xf]
        %v3565 = vld [vmem:[#allocation3 + $0x964] sm:$0xf]
        %v3566 = vld [vmem:[#allocation3 + $0x968] sm:$0xf]
        %v3567 = vld [vmem:[#allocation3 + $0x96c] sm:$0xf]
        %v3568 = vld [vmem:[#allocation3 + $0x970] sm:$0xf]
        %v3569 = vld [vmem:[#allocation3 + $0x974] sm:$0xf]
        %v3570 = vld [vmem:[#allocation3 + $0x978] sm:$0xf]
        %v3571 = vld [vmem:[#allocation3 + $0x97c] sm:$0xf]
        %v3572 = vld [vmem:[#allocation3 + $0x980] sm:$0xf]
        %v3573 = vld [vmem:[#allocation3 + $0x984] sm:$0xf]
        %v3574 = vld [vmem:[#allocation3 + $0x988] sm:$0xf]
        %v3575 = vld [vmem:[#allocation3 + $0x98c] sm:$0xf]
        %v3576 = vld [vmem:[#allocation3 + $0x990] sm:$0xf]
        %v3577 = vld [vmem:[#allocation3 + $0x994] sm:$0xf]
        %v3578 = vld [vmem:[#allocation3 + $0x998] sm:$0xf]
        %v3579 = vld [vmem:[#allocation3 + $0x99c] sm:$0xf]
        %v3580 = vld [vmem:[#allocation3 + $0x9a0] sm:$0xf]
        %v3581 = vld [vmem:[#allocation3 + $0x9a4] sm:$0xf]
        %v3582 = vld [vmem:[#allocation3 + $0x9a8] sm:$0xf]
        %v3583 = vld [vmem:[#allocation3 + $0x9ac] sm:$0xf]
        %v3584 = vld [vmem:[#allocation3 + $0x9b0] sm:$0xf]
        %v3585 = vld [vmem:[#allocation3 + $0x9b4] sm:$0xf]
        %v3586 = vld [vmem:[#allocation3 + $0x9b8] sm:$0xf]
        %v3587 = vld [vmem:[#allocation3 + $0x9bc] sm:$0xf]
        %v3588 = vrot.slane %v3504, 2
        %v3589 = vrot.slane %v3505, 2
        %v3590 = vsel %vm445, %v3588, %v3589
        %v3591 = vrot.slane %v3509, 2
        %v3592 = vsel %vm445, %v3591, %v3591
        %v3593 = vrot.slane %v3516, 2
        %v3594 = vrot.slane %v3517, 2
        %v3595 = vsel %vm445, %v3593, %v3594
        %v3596 = vrot.slane %v3523, 2
        %v3597 = vsel %vm445, %v3596, %v3596
        %v3666 = vunpack.c.l.b16 %v3524
        %v3667 = vunpack.c.l.b16 %v3525
        %v3668 = vunpack.c.l.b16 %v3526
        %v3669 = vunpack.c.l.b16 %v3527
        %v3670 = vunpack.c.l.b16 %v3528
        %v3671 = vunpack.c.l.b16 %v3529
        %v3672 = vunpack.c.l.b16 %v3530
        %v3673 = vunpack.c.l.b16 %v3531
        %v3674 = vunpack.c.l.b16 %v3532
        %v3675 = vunpack.c.l.b16 %v3533
        %v3676 = vunpack.c.l.b16 %v3534
        %v3677 = vunpack.c.l.b16 %v3535
        %v3678 = vunpack.c.l.b16 %v3536
        %v3679 = vunpack.c.l.b16 %v3537
        %v3680 = vunpack.c.l.b16 %v3538
        %v3681 = vunpack.c.l.b16 %v3539
        %v3682 = vunpack.c.l.b16 %v3540
        %v3683 = vunpack.c.l.b16 %v3541
        %v3684 = vunpack.c.l.b16 %v3542
        %v3685 = vunpack.c.l.b16 %v3543
        %v3686 = vunpack.c.l.b16 %v3544
        %v3687 = vunpack.c.l.b16 %v3545
        %v3688 = vunpack.c.l.b16 %v3546
        %v3689 = vunpack.c.l.b16 %v3547
        %v3690 = vunpack.c.l.b16 %v3548
        %v3691 = vunpack.c.l.b16 %v3549
        %v3692 = vunpack.c.l.b16 %v3550
        %v3693 = vunpack.c.l.b16 %v3551
        %v3694 = vunpack.c.l.b16 %v3552
        %v3695 = vunpack.c.l.b16 %v3553
        %v3696 = vunpack.c.l.b16 %v3554
        %v3697 = vunpack.c.l.b16 %v3555
        %v3698 = vunpack.c.l.b16 %v3556
        %v3699 = vunpack.c.l.b16 %v3557
        %v3700 = vunpack.c.l.b16 %v3558
        %v3701 = vunpack.c.l.b16 %v3559
        %v3702 = vunpack.c.l.b16 %v3560
        %v3703 = vunpack.c.l.b16 %v3561
        %v3704 = vunpack.c.l.b16 %v3562
        %v3705 = vunpack.c.l.b16 %v3563
        %v3706 = vunpack.c.l.b16 %v3564
        %v3707 = vunpack.c.l.b16 %v3565
        %v3708 = vunpack.c.l.b16 %v3566
        %v3709 = vunpack.c.l.b16 %v3567
        %v3710 = vunpack.c.l.b16 %v3568
        %v3711 = vunpack.c.l.b16 %v3569
        %v3712 = vunpack.c.l.b16 %v3570
        %v3713 = vunpack.c.l.b16 %v3571
        %v3714 = vunpack.c.l.b16 %v3572
        %v3715 = vunpack.c.l.b16 %v3573
        %v3716 = vunpack.c.l.b16 %v3574
        %v3717 = vunpack.c.l.b16 %v3575
        %v3718 = vunpack.c.l.b16 %v3576
        %v3719 = vunpack.c.l.b16 %v3577
        %v3720 = vunpack.c.l.b16 %v3578
        %v3721 = vunpack.c.l.b16 %v3579
        %v3722 = vunpack.c.l.b16 %v3580
        %v3723 = vunpack.c.l.b16 %v3581
        %v3724 = vunpack.c.l.b16 %v3582
        %v3725 = vunpack.c.l.b16 %v3583
        %v3726 = vunpack.c.l.b16 %v3584
        %v3727 = vunpack.c.l.b16 %v3585
        %v3728 = vunpack.c.l.b16 %v3586
        %v3729 = vunpack.c.l.b16 %v3587
        %v3730 = vpack.c.b16 %v3667, %v3666
        %v3731 = vpack.c.b16 %v3669, %v3668
        %v3732 = vpack.c.b16 %v3671, %v3670
        %v3733 = vpack.c.b16 %v3673, %v3672
        %v3734 = vpack.c.b16 %v3675, %v3674
        %v3735 = vpack.c.b16 %v3677, %v3676
        %v3736 = vpack.c.b16 %v3679, %v3678
        %v3737 = vpack.c.b16 %v3681, %v3680
        %v3738 = vpack.c.b16 %v3683, %v3682
        %v3739 = vpack.c.b16 %v3685, %v3684
        %v3740 = vpack.c.b16 %v3687, %v3686
        %v3741 = vpack.c.b16 %v3689, %v3688
        %v3742 = vpack.c.b16 %v3691, %v3690
        %v3743 = vpack.c.b16 %v3693, %v3692
        %v3744 = vpack.c.b16 %v3695, %v3694
        %v3745 = vpack.c.b16 %v3697, %v3696
        %v3746 = vpack.c.b16 %v3699, %v3698
        %v3747 = vpack.c.b16 %v3701, %v3700
        %v3748 = vpack.c.b16 %v3703, %v3702
        %v3749 = vpack.c.b16 %v3705, %v3704
        %v3750 = vpack.c.b16 %v3707, %v3706
        %v3751 = vpack.c.b16 %v3709, %v3708
        %v3752 = vpack.c.b16 %v3711, %v3710
        %v3753 = vpack.c.b16 %v3713, %v3712
        %v3754 = vpack.c.b16 %v3715, %v3714
        %v3755 = vpack.c.b16 %v3717, %v3716
        %v3756 = vpack.c.b16 %v3719, %v3718
        %v3757 = vpack.c.b16 %v3721, %v3720
        %v3758 = vpack.c.b16 %v3723, %v3722
        %v3759 = vpack.c.b16 %v3725, %v3724
        %v3760 = vpack.c.b16 %v3727, %v3726
        %v3761 = vpack.c.b16 %v3729, %v3728
        %3794 = vmatpush.bf16.msra.mxu0 %v3737
        %3795 = vmatpush.bf16.msra.mxu0 %v3736
        %3796 = vmatpush.bf16.msra.mxu0 %v3735
        %3797 = vmatpush.bf16.msra.mxu0 %v3734
        %3798 = vmatpush.bf16.msra.mxu0 %v3733
        %3799 = vmatpush.bf16.msra.mxu0 %v3732
        %3800 = vmatpush.bf16.msra.mxu0 %v3731
        %3801 = vmatpush.bf16.msra.mxu0 %v3730
        %3802 = vmatmul.bf16.gmra.mxu0 %v3590
        %v3803 = vpop.f32.mrf.mxu0
        %v3804 = vadd.f32 0.0, %v3803
        %v3805 = vpop.f32.mrf.mxu0
        %v3806 = vadd.f32 0.0, %v3805
        %3807 = vdwg.mxu0
        %3808 = vmatpush.bf16.msra.mxu0 %v3745
        %3809 = vmatpush.bf16.msra.mxu0 %v3744
        %3810 = vmatpush.bf16.msra.mxu0 %v3743
        %3811 = vmatpush.bf16.msra.mxu0 %v3742
        %3812 = vmatpush.bf16.msra.mxu0 %v3741
        %3813 = vmatpush.bf16.msra.mxu0 %v3740
        %3814 = vmatpush.bf16.msra.mxu0 %v3739
        %3815 = vmatpush.bf16.msra.mxu0 %v3738
        %3816 = vmatmul.bf16.gmra.mxu0 %v3592
        %v3817 = vpop.f32.mrf.mxu0
        %v3818 = vadd.f32 %v3804, %v3817
        %v3819 = vpop.f32.mrf.mxu0
        %v3820 = vadd.f32 %v3806, %v3819
        %3821 = vdwg.mxu0
        %3822 = vmatpush.bf16.msra.mxu0 %v3753
        %3823 = vmatpush.bf16.msra.mxu0 %v3752
        %3824 = vmatpush.bf16.msra.mxu0 %v3751
        %3825 = vmatpush.bf16.msra.mxu0 %v3750
        %3826 = vmatpush.bf16.msra.mxu0 %v3749
        %3827 = vmatpush.bf16.msra.mxu0 %v3748
        %3828 = vmatpush.bf16.msra.mxu0 %v3747
        %3829 = vmatpush.bf16.msra.mxu0 %v3746
        %3830 = vmatmul.bf16.gmra.mxu0 %v3595
        %v3831 = vpop.f32.mrf.mxu0
        %v3832 = vadd.f32 %v3818, %v3831
        %v3833 = vpop.f32.mrf.mxu0
        %v3834 = vadd.f32 %v3820, %v3833
        %3835 = vdwg.mxu0
        %3836 = vmatpush.bf16.msra.mxu0 %v3761
        %3837 = vmatpush.bf16.msra.mxu0 %v3760
        %3838 = vmatpush.bf16.msra.mxu0 %v3759
        %3839 = vmatpush.bf16.msra.mxu0 %v3758
        %3840 = vmatpush.bf16.msra.mxu0 %v3757
        %3841 = vmatpush.bf16.msra.mxu0 %v3756
        %3842 = vmatpush.bf16.msra.mxu0 %v3755
        %3843 = vmatpush.bf16.msra.mxu0 %v3754
        %3844 = vmatmul.bf16.gmra.mxu0 %v3597
        %v3845 = vpop.f32.mrf.mxu0
        %v3846 = vadd.f32 %v3832, %v3845
        %v3847 = vpop.f32.mrf.mxu0
        %v3848 = vadd.f32 %v3834, %v3847
        %3849 = vdwg.mxu0
        %v3850 = vld [vmem:[#allocation6 + $0x7] sm:$0x1]
        %v3851 = vperm.slane %v3850, 0
        %v3852 = vadd.f32 %v3846, %v3851
        %v3853 = vadd.f32 %v3848, %v3851
        %v3854 = vmax.f32 %v3852, 0.0
        %v3855 = vmax.f32 %v3853, 0.0
        %v3856 = vadd.f32 %v3854, %v3116
        %v3857 = vadd.f32 %v3855, %v3117
        %v3858 = vmax.f32 %v3856, 0.0
        %v3859 = vmax.f32 %v3857, 0.0
        %v3860 = vpack.c.bf16 %v3858, %v3858
        %v3861 = vpack.c.bf16 %v3859, %v3859
        %3862 = vst [vmem:[#allocation2 + $0x8] sm:$0xf] %v3860
        %3863 = vst [vmem:[#allocation2 + $0xc] sm:$0xf] %v3861
        %v3864 = vld [vmem:[#allocation2 + $0x4] sm:$0xf]
        %v3865 = vld [vmem:[#allocation2 + $0x8] sm:$0xf]
        %v3868 = vunpack.c.l.b16 %v3864
        %v3869 = vunpack.c.l.b16 %v3865
        %v3870 = vpack.c.b16 %v3869, %v3868
        %v3874 = vunpack.c.l.b16 %v3860
        %v3875 = vunpack.c.l.b16 %v3861
        %v3876 = vpack.c.b16 %v3875, %v3874
        %v3878 = vld [vmem:[#allocation3 + $0x9c0] sm:$0xf]
        %v3879 = vld [vmem:[#allocation3 + $0x9c4] sm:$0xf]
        %v3880 = vld [vmem:[#allocation3 + $0x9c8] sm:$0xf]
        %v3881 = vld [vmem:[#allocation3 + $0x9cc] sm:$0xf]
        %v3882 = vld [vmem:[#allocation3 + $0x9d0] sm:$0xf]
        %v3883 = vld [vmem:[#allocation3 + $0x9d4] sm:$0xf]
        %v3884 = vld [vmem:[#allocation3 + $0x9d8] sm:$0xf]
        %v3885 = vld [vmem:[#allocation3 + $0x9dc] sm:$0xf]
        %v3886 = vld [vmem:[#allocation3 + $0x9e0] sm:$0xf]
        %v3887 = vld [vmem:[#allocation3 + $0x9e4] sm:$0xf]
        %v3888 = vld [vmem:[#allocation3 + $0x9e8] sm:$0xf]
        %v3889 = vld [vmem:[#allocation3 + $0x9ec] sm:$0xf]
        %v3890 = vld [vmem:[#allocation3 + $0x9f0] sm:$0xf]
        %v3891 = vld [vmem:[#allocation3 + $0x9f4] sm:$0xf]
        %v3892 = vld [vmem:[#allocation3 + $0x9f8] sm:$0xf]
        %v3893 = vld [vmem:[#allocation3 + $0x9fc] sm:$0xf]
        %v3894 = vld [vmem:[#allocation3 + $0xa00] sm:$0xf]
        %v3895 = vld [vmem:[#allocation3 + $0xa04] sm:$0xf]
        %v3896 = vld [vmem:[#allocation3 + $0xa08] sm:$0xf]
        %v3897 = vld [vmem:[#allocation3 + $0xa0c] sm:$0xf]
        %v3898 = vld [vmem:[#allocation3 + $0xa10] sm:$0xf]
        %v3899 = vld [vmem:[#allocation3 + $0xa14] sm:$0xf]
        %v3900 = vld [vmem:[#allocation3 + $0xa18] sm:$0xf]
        %v3901 = vld [vmem:[#allocation3 + $0xa1c] sm:$0xf]
        %v3902 = vld [vmem:[#allocation3 + $0xa20] sm:$0xf]
        %v3903 = vld [vmem:[#allocation3 + $0xa24] sm:$0xf]
        %v3904 = vld [vmem:[#allocation3 + $0xa28] sm:$0xf]
        %v3905 = vld [vmem:[#allocation3 + $0xa2c] sm:$0xf]
        %v3906 = vld [vmem:[#allocation3 + $0xa30] sm:$0xf]
        %v3907 = vld [vmem:[#allocation3 + $0xa34] sm:$0xf]
        %v3908 = vld [vmem:[#allocation3 + $0xa38] sm:$0xf]
        %v3909 = vld [vmem:[#allocation3 + $0xa3c] sm:$0xf]
        %v3942 = vunpack.c.l.b16 %v3878
        %v3943 = vunpack.c.l.b16 %v3879
        %v3944 = vunpack.c.l.b16 %v3880
        %v3945 = vunpack.c.l.b16 %v3881
        %v3946 = vunpack.c.l.b16 %v3882
        %v3947 = vunpack.c.l.b16 %v3883
        %v3948 = vunpack.c.l.b16 %v3884
        %v3949 = vunpack.c.l.b16 %v3885
        %v3950 = vunpack.c.l.b16 %v3886
        %v3951 = vunpack.c.l.b16 %v3887
        %v3952 = vunpack.c.l.b16 %v3888
        %v3953 = vunpack.c.l.b16 %v3889
        %v3954 = vunpack.c.l.b16 %v3890
        %v3955 = vunpack.c.l.b16 %v3891
        %v3956 = vunpack.c.l.b16 %v3892
        %v3957 = vunpack.c.l.b16 %v3893
        %v3958 = vunpack.c.l.b16 %v3894
        %v3959 = vunpack.c.l.b16 %v3895
        %v3960 = vunpack.c.l.b16 %v3896
        %v3961 = vunpack.c.l.b16 %v3897
        %v3962 = vunpack.c.l.b16 %v3898
        %v3963 = vunpack.c.l.b16 %v3899
        %v3964 = vunpack.c.l.b16 %v3900
        %v3965 = vunpack.c.l.b16 %v3901
        %v3966 = vunpack.c.l.b16 %v3902
        %v3967 = vunpack.c.l.b16 %v3903
        %v3968 = vunpack.c.l.b16 %v3904
        %v3969 = vunpack.c.l.b16 %v3905
        %v3970 = vunpack.c.l.b16 %v3906
        %v3971 = vunpack.c.l.b16 %v3907
        %v3972 = vunpack.c.l.b16 %v3908
        %v3973 = vunpack.c.l.b16 %v3909
        %v3974 = vpack.c.b16 %v3943, %v3942
        %v3975 = vpack.c.b16 %v3945, %v3944
        %v3976 = vpack.c.b16 %v3947, %v3946
        %v3977 = vpack.c.b16 %v3949, %v3948
        %v3978 = vpack.c.b16 %v3951, %v3950
        %v3979 = vpack.c.b16 %v3953, %v3952
        %v3980 = vpack.c.b16 %v3955, %v3954
        %v3981 = vpack.c.b16 %v3957, %v3956
        %v3982 = vpack.c.b16 %v3959, %v3958
        %v3983 = vpack.c.b16 %v3961, %v3960
        %v3984 = vpack.c.b16 %v3963, %v3962
        %v3985 = vpack.c.b16 %v3965, %v3964
        %v3986 = vpack.c.b16 %v3967, %v3966
        %v3987 = vpack.c.b16 %v3969, %v3968
        %v3988 = vpack.c.b16 %v3971, %v3970
        %v3989 = vpack.c.b16 %v3973, %v3972
        %4006 = vmatpush.bf16.msra.mxu0 %v3981
        %4007 = vmatpush.bf16.msra.mxu0 %v3980
        %4008 = vmatpush.bf16.msra.mxu0 %v3979
        %4009 = vmatpush.bf16.msra.mxu0 %v3978
        %4010 = vmatpush.bf16.msra.mxu0 %v3977
        %4011 = vmatpush.bf16.msra.mxu0 %v3976
        %4012 = vmatpush.bf16.msra.mxu0 %v3975
        %4013 = vmatpush.bf16.msra.mxu0 %v3974
        %4014 = vmatmul.bf16.gmra.mxu0 %v3870
        %v4015 = vpop.f32.mrf.mxu0
        %v4016 = vadd.f32 0.0, %v4015
        %v4017 = vpop.f32.mrf.mxu0
        %v4018 = vadd.f32 0.0, %v4017
        %4019 = vdwg.mxu0
        %4020 = vmatpush.bf16.msra.mxu0 %v3989
        %4021 = vmatpush.bf16.msra.mxu0 %v3988
        %4022 = vmatpush.bf16.msra.mxu0 %v3987
        %4023 = vmatpush.bf16.msra.mxu0 %v3986
        %4024 = vmatpush.bf16.msra.mxu0 %v3985
        %4025 = vmatpush.bf16.msra.mxu0 %v3984
        %4026 = vmatpush.bf16.msra.mxu0 %v3983
        %4027 = vmatpush.bf16.msra.mxu0 %v3982
        %4028 = vmatmul.bf16.gmra.mxu0 %v3876
        %v4029 = vpop.f32.mrf.mxu0
        %v4030 = vadd.f32 %v4016, %v4029
        %v4031 = vpop.f32.mrf.mxu0
        %v4032 = vadd.f32 %v4018, %v4031
        %4033 = vdwg.mxu0
        %v4034 = vld [vmem:[#allocation6 + $0x8] sm:$0x1]
        %v4035 = vperm.slane %v4034, 0
        %v4036 = vadd.f32 %v4030, %v4035
        %v4037 = vadd.f32 %v4032, %v4035
        %v4038 = vmax.f32 %v4036, 0.0
        %v4039 = vmax.f32 %v4037, 0.0
        %v4040 = vpack.c.bf16 %v4038, %v4038
        %v4041 = vpack.c.bf16 %v4039, %v4039
        %4042 = vst [vmem:[#allocation2 + $0x8] sm:$0xf] %v4040
        %4043 = vst [vmem:[#allocation2 + $0xc] sm:$0xf] %v4041
        %v4044 = vld [vmem:[#allocation2 + $0x4] sm:$0xf]
        %v4045 = vld [vmem:[#allocation2 + $0x8] sm:$0xf]
        %v4048 = vunpack.c.l.b16 %v4044
        %v4049 = vunpack.c.l.b16 %v4045
        %v4050 = vpack.c.b16 %v4049, %v4048
        %v4054 = vunpack.c.l.b16 %v4040
        %v4055 = vunpack.c.l.b16 %v4041
        %v4056 = vpack.c.b16 %v4055, %v4054
        %v4058 = vld [vmem:[#allocation3 + $0xa40] sm:$0xf]
        %v4059 = vld [vmem:[#allocation3 + $0xa44] sm:$0xf]
        %v4060 = vld [vmem:[#allocation3 + $0xa48] sm:$0xf]
        %v4061 = vld [vmem:[#allocation3 + $0xa4c] sm:$0xf]
        %v4062 = vld [vmem:[#allocation3 + $0xa50] sm:$0xf]
        %v4063 = vld [vmem:[#allocation3 + $0xa54] sm:$0xf]
        %v4064 = vld [vmem:[#allocation3 + $0xa58] sm:$0xf]
        %v4065 = vld [vmem:[#allocation3 + $0xa5c] sm:$0xf]
        %v4066 = vld [vmem:[#allocation3 + $0xa60] sm:$0xf]
        %v4067 = vld [vmem:[#allocation3 + $0xa64] sm:$0xf]
        %v4068 = vld [vmem:[#allocation3 + $0xa68] sm:$0xf]
        %v4069 = vld [vmem:[#allocation3 + $0xa6c] sm:$0xf]
        %v4070 = vld [vmem:[#allocation3 + $0xa70] sm:$0xf]
        %v4071 = vld [vmem:[#allocation3 + $0xa74] sm:$0xf]
        %v4072 = vld [vmem:[#allocation3 + $0xa78] sm:$0xf]
        %v4073 = vld [vmem:[#allocation3 + $0xa7c] sm:$0xf]
        %v4074 = vld [vmem:[#allocation3 + $0xa80] sm:$0xf]
        %v4075 = vld [vmem:[#allocation3 + $0xa84] sm:$0xf]
        %v4076 = vld [vmem:[#allocation3 + $0xa88] sm:$0xf]
        %v4077 = vld [vmem:[#allocation3 + $0xa8c] sm:$0xf]
        %v4078 = vld [vmem:[#allocation3 + $0xa90] sm:$0xf]
        %v4079 = vld [vmem:[#allocation3 + $0xa94] sm:$0xf]
        %v4080 = vld [vmem:[#allocation3 + $0xa98] sm:$0xf]
        %v4081 = vld [vmem:[#allocation3 + $0xa9c] sm:$0xf]
        %v4082 = vld [vmem:[#allocation3 + $0xaa0] sm:$0xf]
        %v4083 = vld [vmem:[#allocation3 + $0xaa4] sm:$0xf]
        %v4084 = vld [vmem:[#allocation3 + $0xaa8] sm:$0xf]
        %v4085 = vld [vmem:[#allocation3 + $0xaac] sm:$0xf]
        %v4086 = vld [vmem:[#allocation3 + $0xab0] sm:$0xf]
        %v4087 = vld [vmem:[#allocation3 + $0xab4] sm:$0xf]
        %v4088 = vld [vmem:[#allocation3 + $0xab8] sm:$0xf]
        %v4089 = vld [vmem:[#allocation3 + $0xabc] sm:$0xf]
        %v4122 = vunpack.c.l.b16 %v4058
        %v4123 = vunpack.c.l.b16 %v4059
        %v4124 = vunpack.c.l.b16 %v4060
        %v4125 = vunpack.c.l.b16 %v4061
        %v4126 = vunpack.c.l.b16 %v4062
        %v4127 = vunpack.c.l.b16 %v4063
        %v4128 = vunpack.c.l.b16 %v4064
        %v4129 = vunpack.c.l.b16 %v4065
        %v4130 = vunpack.c.l.b16 %v4066
        %v4131 = vunpack.c.l.b16 %v4067
        %v4132 = vunpack.c.l.b16 %v4068
        %v4133 = vunpack.c.l.b16 %v4069
        %v4134 = vunpack.c.l.b16 %v4070
        %v4135 = vunpack.c.l.b16 %v4071
        %v4136 = vunpack.c.l.b16 %v4072
        %v4137 = vunpack.c.l.b16 %v4073
        %v4138 = vunpack.c.l.b16 %v4074
        %v4139 = vunpack.c.l.b16 %v4075
        %v4140 = vunpack.c.l.b16 %v4076
        %v4141 = vunpack.c.l.b16 %v4077
        %v4142 = vunpack.c.l.b16 %v4078
        %v4143 = vunpack.c.l.b16 %v4079
        %v4144 = vunpack.c.l.b16 %v4080
        %v4145 = vunpack.c.l.b16 %v4081
        %v4146 = vunpack.c.l.b16 %v4082
        %v4147 = vunpack.c.l.b16 %v4083
        %v4148 = vunpack.c.l.b16 %v4084
        %v4149 = vunpack.c.l.b16 %v4085
        %v4150 = vunpack.c.l.b16 %v4086
        %v4151 = vunpack.c.l.b16 %v4087
        %v4152 = vunpack.c.l.b16 %v4088
        %v4153 = vunpack.c.l.b16 %v4089
        %v4154 = vpack.c.b16 %v4123, %v4122
        %v4155 = vpack.c.b16 %v4125, %v4124
        %v4156 = vpack.c.b16 %v4127, %v4126
        %v4157 = vpack.c.b16 %v4129, %v4128
        %v4158 = vpack.c.b16 %v4131, %v4130
        %v4159 = vpack.c.b16 %v4133, %v4132
        %v4160 = vpack.c.b16 %v4135, %v4134
        %v4161 = vpack.c.b16 %v4137, %v4136
        %v4162 = vpack.c.b16 %v4139, %v4138
        %v4163 = vpack.c.b16 %v4141, %v4140
        %v4164 = vpack.c.b16 %v4143, %v4142
        %v4165 = vpack.c.b16 %v4145, %v4144
        %v4166 = vpack.c.b16 %v4147, %v4146
        %v4167 = vpack.c.b16 %v4149, %v4148
        %v4168 = vpack.c.b16 %v4151, %v4150
        %v4169 = vpack.c.b16 %v4153, %v4152
        %4186 = vmatpush.bf16.msra.mxu0 %v4161
        %4187 = vmatpush.bf16.msra.mxu0 %v4160
        %4188 = vmatpush.bf16.msra.mxu0 %v4159
        %4189 = vmatpush.bf16.msra.mxu0 %v4158
        %4190 = vmatpush.bf16.msra.mxu0 %v4157
        %4191 = vmatpush.bf16.msra.mxu0 %v4156
        %4192 = vmatpush.bf16.msra.mxu0 %v4155
        %4193 = vmatpush.bf16.msra.mxu0 %v4154
        %4194 = vmatmul.bf16.gmra.mxu0 %v4050
        %v4195 = vpop.f32.mrf.mxu0
        %v4196 = vadd.f32 0.0, %v4195
        %v4197 = vpop.f32.mrf.mxu0
        %v4198 = vadd.f32 0.0, %v4197
        %4199 = vdwg.mxu0
        %4200 = vmatpush.bf16.msra.mxu0 %v4169
        %4201 = vmatpush.bf16.msra.mxu0 %v4168
        %4202 = vmatpush.bf16.msra.mxu0 %v4167
        %4203 = vmatpush.bf16.msra.mxu0 %v4166
        %4204 = vmatpush.bf16.msra.mxu0 %v4165
        %4205 = vmatpush.bf16.msra.mxu0 %v4164
        %4206 = vmatpush.bf16.msra.mxu0 %v4163
        %4207 = vmatpush.bf16.msra.mxu0 %v4162
        %4208 = vmatmul.bf16.gmra.mxu0 %v4056
        %v4209 = vpop.f32.mrf.mxu0
        %v4210 = vadd.f32 %v4196, %v4209
        %v4211 = vpop.f32.mrf.mxu0
        %v4212 = vadd.f32 %v4198, %v4211
        %4213 = vdwg.mxu0
        %v4214 = vld [vmem:[#allocation6 + $0x9] sm:$0x1]
        %v4215 = vperm.slane %v4214, 0
        %v4216 = vadd.f32 %v4210, %v4215
        %v4217 = vadd.f32 %v4212, %v4215
        %v4218 = vmax.f32 %v4216, 0.0
        %v4219 = vmax.f32 %v4217, 0.0
        %v4220 = vadd.f32 %v4218, %v3858
        %v4221 = vadd.f32 %v4219, %v3859
        %v4222 = vmax.f32 %v4220, 0.0
        %v4223 = vmax.f32 %v4221, 0.0
        %v4224 = vpack.c.bf16 %v4222, %v4222
        %v4225 = vpack.c.bf16 %v4223, %v4223
        %v4226 = vld [vmem:[#allocation3 + $0xac0] sm:$0xf]
        %v4227 = vld [vmem:[#allocation3 + $0xac4] sm:$0xf]
        %v4228 = vld [vmem:[#allocation3 + $0xac8] sm:$0xf]
        %v4229 = vld [vmem:[#allocation3 + $0xacc] sm:$0xf]
        %v4230 = vld [vmem:[#allocation3 + $0xad0] sm:$0xf]
        %v4231 = vld [vmem:[#allocation3 + $0xad4] sm:$0xf]
        %v4232 = vld [vmem:[#allocation3 + $0xad8] sm:$0xf]
        %v4233 = vld [vmem:[#allocation3 + $0xadc] sm:$0xf]
        %v4234 = vld [vmem:[#allocation3 + $0xae0] sm:$0xf]
        %v4235 = vld [vmem:[#allocation3 + $0xae4] sm:$0xf]
        %v4236 = vld [vmem:[#allocation3 + $0xae8] sm:$0xf]
        %v4237 = vld [vmem:[#allocation3 + $0xaec] sm:$0xf]
        %v4238 = vld [vmem:[#allocation3 + $0xaf0] sm:$0xf]
        %v4239 = vld [vmem:[#allocation3 + $0xaf4] sm:$0xf]
        %v4240 = vld [vmem:[#allocation3 + $0xaf8] sm:$0xf]
        %v4241 = vld [vmem:[#allocation3 + $0xafc] sm:$0xf]
        %v4244 = vunpack.c.l.b16 %v4224
        %v4245 = vunpack.c.l.b16 %v4225
        %v4246 = vpack.c.b16 %v4245, %v4244
        %v4264 = vunpack.c.l.b16 %v4226
        %v4265 = vunpack.c.l.b16 %v4227
        %v4266 = vunpack.c.l.b16 %v4228
        %v4267 = vunpack.c.l.b16 %v4229
        %v4268 = vunpack.c.l.b16 %v4230
        %v4269 = vunpack.c.l.b16 %v4231
        %v4270 = vunpack.c.l.b16 %v4232
        %v4271 = vunpack.c.l.b16 %v4233
        %v4272 = vunpack.c.l.b16 %v4234
        %v4273 = vunpack.c.l.b16 %v4235
        %v4274 = vunpack.c.l.b16 %v4236
        %v4275 = vunpack.c.l.b16 %v4237
        %v4276 = vunpack.c.l.b16 %v4238
        %v4277 = vunpack.c.l.b16 %v4239
        %v4278 = vunpack.c.l.b16 %v4240
        %v4279 = vunpack.c.l.b16 %v4241
        %v4280 = vpack.c.b16 %v4265, %v4264
        %v4281 = vpack.c.b16 %v4267, %v4266
        %v4282 = vpack.c.b16 %v4269, %v4268
        %v4283 = vpack.c.b16 %v4271, %v4270
        %v4284 = vpack.c.b16 %v4273, %v4272
        %v4285 = vpack.c.b16 %v4275, %v4274
        %v4286 = vpack.c.b16 %v4277, %v4276
        %v4287 = vpack.c.b16 %v4279, %v4278
        %4296 = vmatpush.bf16.msra.mxu0 %v4287
        %4297 = vmatpush.bf16.msra.mxu0 %v4286
        %4298 = vmatpush.bf16.msra.mxu0 %v4285
        %4299 = vmatpush.bf16.msra.mxu0 %v4284
        %4300 = vmatpush.bf16.msra.mxu0 %v4283
        %4301 = vmatpush.bf16.msra.mxu0 %v4282
        %4302 = vmatpush.bf16.msra.mxu0 %v4281
        %4303 = vmatpush.bf16.msra.mxu0 %v4280
        %4304 = vmatmul.bf16.gmra.mxu0 %v4246
        %v4305 = vpop.f32.mrf.mxu0
        %v4306 = vadd.f32 0.0, %v4305
        %v4307 = vpop.f32.mrf.mxu0
        %v4308 = vadd.f32 0.0, %v4307
        %4309 = vdwg.mxu0
        %v4310 = vld [vmem:[#allocation6 + $0xa] sm:$0x1]
        %v4311 = vperm.slane %v4310, 0
        %v4312 = vadd.f32 %v4306, %v4311
        %v4313 = vadd.f32 %v4308, %v4311
        %v4314 = vmax.f32 %v4312, 0.0
        %v4315 = vmax.f32 %v4313, 0.0
        %v4316 = vpack.c.bf16 %v4314, %v4314
        %v4317 = vpack.c.bf16 %v4315, %v4315
        %v4318 = vld [vmem:[#allocation3 + $0xb00] sm:$0xf]
        %v4319 = vld [vmem:[#allocation3 + $0xb04] sm:$0xf]
        %v4320 = vld [vmem:[#allocation3 + $0xb08] sm:$0xf]
        %v4321 = vld [vmem:[#allocation3 + $0xb0c] sm:$0xf]
        %v4322 = vld [vmem:[#allocation3 + $0xb10] sm:$0xf]
        %v4323 = vld [vmem:[#allocation3 + $0xb14] sm:$0xf]
        %v4324 = vld [vmem:[#allocation3 + $0xb18] sm:$0xf]
        %v4325 = vld [vmem:[#allocation3 + $0xb1c] sm:$0xf]
        %v4326 = vld [vmem:[#allocation3 + $0xb20] sm:$0xf]
        %v4327 = vld [vmem:[#allocation3 + $0xb24] sm:$0xf]
        %v4328 = vld [vmem:[#allocation3 + $0xb28] sm:$0xf]
        %v4329 = vld [vmem:[#allocation3 + $0xb2c] sm:$0xf]
        %v4330 = vld [vmem:[#allocation3 + $0xb30] sm:$0xf]
        %v4331 = vld [vmem:[#allocation3 + $0xb34] sm:$0xf]
        %v4332 = vld [vmem:[#allocation3 + $0xb38] sm:$0xf]
        %v4333 = vld [vmem:[#allocation3 + $0xb3c] sm:$0xf]
        %v4336 = vunpack.c.l.b16 %v4316
        %v4337 = vunpack.c.l.b16 %v4317
        %v4338 = vpack.c.b16 %v4337, %v4336
        %v4356 = vunpack.c.l.b16 %v4318
        %v4357 = vunpack.c.l.b16 %v4319
        %v4358 = vunpack.c.l.b16 %v4320
        %v4359 = vunpack.c.l.b16 %v4321
        %v4360 = vunpack.c.l.b16 %v4322
        %v4361 = vunpack.c.l.b16 %v4323
        %v4362 = vunpack.c.l.b16 %v4324
        %v4363 = vunpack.c.l.b16 %v4325
        %v4364 = vunpack.c.l.b16 %v4326
        %v4365 = vunpack.c.l.b16 %v4327
        %v4366 = vunpack.c.l.b16 %v4328
        %v4367 = vunpack.c.l.b16 %v4329
        %v4368 = vunpack.c.l.b16 %v4330
        %v4369 = vunpack.c.l.b16 %v4331
        %v4370 = vunpack.c.l.b16 %v4332
        %v4371 = vunpack.c.l.b16 %v4333
        %v4372 = vpack.c.b16 %v4357, %v4356
        %v4373 = vpack.c.b16 %v4359, %v4358
        %v4374 = vpack.c.b16 %v4361, %v4360
        %v4375 = vpack.c.b16 %v4363, %v4362
        %v4376 = vpack.c.b16 %v4365, %v4364
        %v4377 = vpack.c.b16 %v4367, %v4366
        %v4378 = vpack.c.b16 %v4369, %v4368
        %v4379 = vpack.c.b16 %v4371, %v4370
        %4388 = vmatpush.bf16.msra.mxu0 %v4379
        %4389 = vmatpush.bf16.msra.mxu0 %v4378
        %4390 = vmatpush.bf16.msra.mxu0 %v4377
        %4391 = vmatpush.bf16.msra.mxu0 %v4376
        %4392 = vmatpush.bf16.msra.mxu0 %v4375
        %4393 = vmatpush.bf16.msra.mxu0 %v4374
        %4394 = vmatpush.bf16.msra.mxu0 %v4373
        %4395 = vmatpush.bf16.msra.mxu0 %v4372
        %4396 = vmatmul.bf16.gmra.mxu0 %v4338
        %v4397 = vpop.f32.mrf.mxu0
        %v4398 = vadd.f32 0.0, %v4397
        %v4399 = vpop.f32.mrf.mxu0
        %v4400 = vadd.f32 0.0, %v4399
        %4401 = vdwg.mxu0
        %v4402 = vld [vmem:[#allocation6 + $0xb] sm:$0x1]
        %v4403 = vperm.slane %v4402, 0
        %v4404 = vadd.f32 %v4398, %v4403
        %v4405 = vadd.f32 %v4400, %v4403
        %v4406 = vmax.f32 %v4404, 0.0
        %v4407 = vmax.f32 %v4405, 0.0
        %v4408 = vadd.f32 %v4406, %v4222
        %v4409 = vadd.f32 %v4407, %v4223
        %v4410 = vmax.f32 %v4408, 0.0
        %v4411 = vmax.f32 %v4409, 0.0
        %v4412 = vpack.c.bf16 %v4410, %v4410
        %v4413 = vpack.c.bf16 %v4411, %v4411
        %v4414 = vld [vmem:[#allocation3 + $0xb40] sm:$0xf]
        %v4415 = vld [vmem:[#allocation3 + $0xb44] sm:$0xf]
        %v4416 = vld [vmem:[#allocation3 + $0xb48] sm:$0xf]
        %v4417 = vld [vmem:[#allocation3 + $0xb4c] sm:$0xf]
        %v4418 = vld [vmem:[#allocation3 + $0xb50] sm:$0xf]
        %v4419 = vld [vmem:[#allocation3 + $0xb54] sm:$0xf]
        %v4420 = vld [vmem:[#allocation3 + $0xb58] sm:$0xf]
        %v4421 = vld [vmem:[#allocation3 + $0xb5c] sm:$0xf]
        %v4422 = vld [vmem:[#allocation3 + $0xb60] sm:$0xf]
        %v4423 = vld [vmem:[#allocation3 + $0xb64] sm:$0xf]
        %v4424 = vld [vmem:[#allocation3 + $0xb68] sm:$0xf]
        %v4425 = vld [vmem:[#allocation3 + $0xb6c] sm:$0xf]
        %v4426 = vld [vmem:[#allocation3 + $0xb70] sm:$0xf]
        %v4427 = vld [vmem:[#allocation3 + $0xb74] sm:$0xf]
        %v4428 = vld [vmem:[#allocation3 + $0xb78] sm:$0xf]
        %v4429 = vld [vmem:[#allocation3 + $0xb7c] sm:$0xf]
        %v4432 = vunpack.c.l.b16 %v4412
        %v4433 = vunpack.c.l.b16 %v4413
        %v4434 = vpack.c.b16 %v4433, %v4432
        %v4452 = vunpack.c.l.b16 %v4414
        %v4453 = vunpack.c.l.b16 %v4415
        %v4454 = vunpack.c.l.b16 %v4416
        %v4455 = vunpack.c.l.b16 %v4417
        %v4456 = vunpack.c.l.b16 %v4418
        %v4457 = vunpack.c.l.b16 %v4419
        %v4458 = vunpack.c.l.b16 %v4420
        %v4459 = vunpack.c.l.b16 %v4421
        %v4460 = vunpack.c.l.b16 %v4422
        %v4461 = vunpack.c.l.b16 %v4423
        %v4462 = vunpack.c.l.b16 %v4424
        %v4463 = vunpack.c.l.b16 %v4425
        %v4464 = vunpack.c.l.b16 %v4426
        %v4465 = vunpack.c.l.b16 %v4427
        %v4466 = vunpack.c.l.b16 %v4428
        %v4467 = vunpack.c.l.b16 %v4429
        %v4468 = vpack.c.b16 %v4453, %v4452
        %v4469 = vpack.c.b16 %v4455, %v4454
        %v4470 = vpack.c.b16 %v4457, %v4456
        %v4471 = vpack.c.b16 %v4459, %v4458
        %v4472 = vpack.c.b16 %v4461, %v4460
        %v4473 = vpack.c.b16 %v4463, %v4462
        %v4474 = vpack.c.b16 %v4465, %v4464
        %v4475 = vpack.c.b16 %v4467, %v4466
        %4484 = vmatpush.bf16.msra.mxu0 %v4475
        %4485 = vmatpush.bf16.msra.mxu0 %v4474
        %4486 = vmatpush.bf16.msra.mxu0 %v4473
        %4487 = vmatpush.bf16.msra.mxu0 %v4472
        %4488 = vmatpush.bf16.msra.mxu0 %v4471
        %4489 = vmatpush.bf16.msra.mxu0 %v4470
        %4490 = vmatpush.bf16.msra.mxu0 %v4469
        %4491 = vmatpush.bf16.msra.mxu0 %v4468
        %4492 = vmatmul.bf16.gmra.mxu0 %v4434
        %v4493 = vpop.f32.mrf.mxu0
        %v4494 = vadd.f32 0.0, %v4493
        %v4495 = vpop.f32.mrf.mxu0
        %v4496 = vadd.f32 0.0, %v4495
        %4497 = vdwg.mxu0
        %v4498 = vld [vmem:[#allocation6 + $0xc] sm:$0x1]
        %v4499 = vperm.slane %v4498, 0
        %v4500 = vadd.f32 %v4494, %v4499
        %v4501 = vadd.f32 %v4496, %v4499
        %v4502 = vmax.f32 %v4500, 0.0
        %v4503 = vmax.f32 %v4501, 0.0
        %v4504 = vpack.c.bf16 %v4502, %v4502
        %v4505 = vpack.c.bf16 %v4503, %v4503
        %v4506 = vld [vmem:[#allocation3 + $0xb80] sm:$0xf]
        %v4507 = vld [vmem:[#allocation3 + $0xb84] sm:$0xf]
        %v4508 = vld [vmem:[#allocation3 + $0xb88] sm:$0xf]
        %v4509 = vld [vmem:[#allocation3 + $0xb8c] sm:$0xf]
        %v4510 = vld [vmem:[#allocation3 + $0xb90] sm:$0xf]
        %v4511 = vld [vmem:[#allocation3 + $0xb94] sm:$0xf]
        %v4512 = vld [vmem:[#allocation3 + $0xb98] sm:$0xf]
        %v4513 = vld [vmem:[#allocation3 + $0xb9c] sm:$0xf]
        %v4514 = vld [vmem:[#allocation3 + $0xba0] sm:$0xf]
        %v4515 = vld [vmem:[#allocation3 + $0xba4] sm:$0xf]
        %v4516 = vld [vmem:[#allocation3 + $0xba8] sm:$0xf]
        %v4517 = vld [vmem:[#allocation3 + $0xbac] sm:$0xf]
        %v4518 = vld [vmem:[#allocation3 + $0xbb0] sm:$0xf]
        %v4519 = vld [vmem:[#allocation3 + $0xbb4] sm:$0xf]
        %v4520 = vld [vmem:[#allocation3 + $0xbb8] sm:$0xf]
        %v4521 = vld [vmem:[#allocation3 + $0xbbc] sm:$0xf]
        %v4524 = vunpack.c.l.b16 %v4504
        %v4525 = vunpack.c.l.b16 %v4505
        %v4526 = vpack.c.b16 %v4525, %v4524
        %v4544 = vunpack.c.l.b16 %v4506
        %v4545 = vunpack.c.l.b16 %v4507
        %v4546 = vunpack.c.l.b16 %v4508
        %v4547 = vunpack.c.l.b16 %v4509
        %v4548 = vunpack.c.l.b16 %v4510
        %v4549 = vunpack.c.l.b16 %v4511
        %v4550 = vunpack.c.l.b16 %v4512
        %v4551 = vunpack.c.l.b16 %v4513
        %v4552 = vunpack.c.l.b16 %v4514
        %v4553 = vunpack.c.l.b16 %v4515
        %v4554 = vunpack.c.l.b16 %v4516
        %v4555 = vunpack.c.l.b16 %v4517
        %v4556 = vunpack.c.l.b16 %v4518
        %v4557 = vunpack.c.l.b16 %v4519
        %v4558 = vunpack.c.l.b16 %v4520
        %v4559 = vunpack.c.l.b16 %v4521
        %v4560 = vpack.c.b16 %v4545, %v4544
        %v4561 = vpack.c.b16 %v4547, %v4546
        %v4562 = vpack.c.b16 %v4549, %v4548
        %v4563 = vpack.c.b16 %v4551, %v4550
        %v4564 = vpack.c.b16 %v4553, %v4552
        %v4565 = vpack.c.b16 %v4555, %v4554
        %v4566 = vpack.c.b16 %v4557, %v4556
        %v4567 = vpack.c.b16 %v4559, %v4558
        %4576 = vmatpush.bf16.msra.mxu0 %v4567
        %4577 = vmatpush.bf16.msra.mxu0 %v4566
        %4578 = vmatpush.bf16.msra.mxu0 %v4565
        %4579 = vmatpush.bf16.msra.mxu0 %v4564
        %4580 = vmatpush.bf16.msra.mxu0 %v4563
        %4581 = vmatpush.bf16.msra.mxu0 %v4562
        %4582 = vmatpush.bf16.msra.mxu0 %v4561
        %4583 = vmatpush.bf16.msra.mxu0 %v4560
        %4584 = vmatmul.bf16.gmra.mxu0 %v4526
        %v4585 = vpop.f32.mrf.mxu0
        %v4586 = vadd.f32 0.0, %v4585
        %v4587 = vpop.f32.mrf.mxu0
        %v4588 = vadd.f32 0.0, %v4587
        %4589 = vdwg.mxu0
        %v4590 = vld [vmem:[#allocation6 + $0xd] sm:$0x1]
        %v4591 = vperm.slane %v4590, 0
        %v4592 = vadd.f32 %v4586, %v4591
        %v4593 = vadd.f32 %v4588, %v4591
        %v4594 = vmax.f32 %v4592, 0.0
        %v4595 = vmax.f32 %v4593, 0.0
        %v4596 = vadd.f32 %v4594, %v4410
        %v4597 = vadd.f32 %v4595, %v4411
        %v4598 = vmax.f32 %v4596, 0.0
        %v4599 = vmax.f32 %v4597, 0.0
        %v4600 = vpack.c.bf16 %v4598, %v4598
        %v4601 = vpack.c.bf16 %v4599, %v4599
        %v4602 = vld [vmem:[#allocation3 + $0xbc0] sm:$0xf]
        %v4603 = vld [vmem:[#allocation3 + $0xbc4] sm:$0xf]
        %v4604 = vld [vmem:[#allocation3 + $0xbc8] sm:$0xf]
        %v4605 = vld [vmem:[#allocation3 + $0xbcc] sm:$0xf]
        %v4606 = vld [vmem:[#allocation3 + $0xbd0] sm:$0xf]
        %v4607 = vld [vmem:[#allocation3 + $0xbd4] sm:$0xf]
        %v4608 = vld [vmem:[#allocation3 + $0xbd8] sm:$0xf]
        %v4609 = vld [vmem:[#allocation3 + $0xbdc] sm:$0xf]
        %v4610 = vld [vmem:[#allocation3 + $0xbe0] sm:$0xf]
        %v4611 = vld [vmem:[#allocation3 + $0xbe4] sm:$0xf]
        %v4612 = vld [vmem:[#allocation3 + $0xbe8] sm:$0xf]
        %v4613 = vld [vmem:[#allocation3 + $0xbec] sm:$0xf]
        %v4614 = vld [vmem:[#allocation3 + $0xbf0] sm:$0xf]
        %v4615 = vld [vmem:[#allocation3 + $0xbf4] sm:$0xf]
        %v4616 = vld [vmem:[#allocation3 + $0xbf8] sm:$0xf]
        %v4617 = vld [vmem:[#allocation3 + $0xbfc] sm:$0xf]
        %v4620 = vunpack.c.l.b16 %v4600
        %v4621 = vunpack.c.l.b16 %v4601
        %v4622 = vpack.c.b16 %v4621, %v4620
        %v4640 = vunpack.c.l.b16 %v4602
        %v4641 = vunpack.c.l.b16 %v4603
        %v4642 = vunpack.c.l.b16 %v4604
        %v4643 = vunpack.c.l.b16 %v4605
        %v4644 = vunpack.c.l.b16 %v4606
        %v4645 = vunpack.c.l.b16 %v4607
        %v4646 = vunpack.c.l.b16 %v4608
        %v4647 = vunpack.c.l.b16 %v4609
        %v4648 = vunpack.c.l.b16 %v4610
        %v4649 = vunpack.c.l.b16 %v4611
        %v4650 = vunpack.c.l.b16 %v4612
        %v4651 = vunpack.c.l.b16 %v4613
        %v4652 = vunpack.c.l.b16 %v4614
        %v4653 = vunpack.c.l.b16 %v4615
        %v4654 = vunpack.c.l.b16 %v4616
        %v4655 = vunpack.c.l.b16 %v4617
        %v4656 = vpack.c.b16 %v4641, %v4640
        %v4657 = vpack.c.b16 %v4643, %v4642
        %v4658 = vpack.c.b16 %v4645, %v4644
        %v4659 = vpack.c.b16 %v4647, %v4646
        %v4660 = vpack.c.b16 %v4649, %v4648
        %v4661 = vpack.c.b16 %v4651, %v4650
        %v4662 = vpack.c.b16 %v4653, %v4652
        %v4663 = vpack.c.b16 %v4655, %v4654
        %4672 = vmatpush.bf16.msra.mxu0 %v4663
        %4673 = vmatpush.bf16.msra.mxu0 %v4662
        %4674 = vmatpush.bf16.msra.mxu0 %v4661
        %4675 = vmatpush.bf16.msra.mxu0 %v4660
        %4676 = vmatpush.bf16.msra.mxu0 %v4659
        %4677 = vmatpush.bf16.msra.mxu0 %v4658
        %4678 = vmatpush.bf16.msra.mxu0 %v4657
        %4679 = vmatpush.bf16.msra.mxu0 %v4656
        %4680 = vmatmul.bf16.gmra.mxu0 %v4622
        %v4681 = vpop.f32.mrf.mxu0
        %v4682 = vadd.f32 0.0, %v4681
        %v4683 = vpop.f32.mrf.mxu0
        %v4684 = vadd.f32 0.0, %v4683
        %4685 = vdwg.mxu0
        %v4686 = vld [vmem:[#allocation6 + $0xe] sm:$0x1]
        %v4687 = vperm.slane %v4686, 0
        %v4688 = vadd.f32 %v4682, %v4687
        %v4689 = vadd.f32 %v4684, %v4687
        %v4690 = vmax.f32 %v4688, 0.0
        %v4691 = vmax.f32 %v4689, 0.0
        %v4692 = vpack.c.bf16 %v4690, %v4690
        %v4693 = vpack.c.bf16 %v4691, %v4691
        %v4694 = vld [vmem:[#allocation3 + $0xc00] sm:$0xf]
        %v4695 = vld [vmem:[#allocation3 + $0xc04] sm:$0xf]
        %v4696 = vld [vmem:[#allocation3 + $0xc08] sm:$0xf]
        %v4697 = vld [vmem:[#allocation3 + $0xc0c] sm:$0xf]
        %v4698 = vld [vmem:[#allocation3 + $0xc10] sm:$0xf]
        %v4699 = vld [vmem:[#allocation3 + $0xc14] sm:$0xf]
        %v4700 = vld [vmem:[#allocation3 + $0xc18] sm:$0xf]
        %v4701 = vld [vmem:[#allocation3 + $0xc1c] sm:$0xf]
        %v4702 = vld [vmem:[#allocation3 + $0xc20] sm:$0xf]
        %v4703 = vld [vmem:[#allocation3 + $0xc24] sm:$0xf]
        %v4704 = vld [vmem:[#allocation3 + $0xc28] sm:$0xf]
        %v4705 = vld [vmem:[#allocation3 + $0xc2c] sm:$0xf]
        %v4706 = vld [vmem:[#allocation3 + $0xc30] sm:$0xf]
        %v4707 = vld [vmem:[#allocation3 + $0xc34] sm:$0xf]
        %v4708 = vld [vmem:[#allocation3 + $0xc38] sm:$0xf]
        %v4709 = vld [vmem:[#allocation3 + $0xc3c] sm:$0xf]
        %v4712 = vunpack.c.l.b16 %v4692
        %v4713 = vunpack.c.l.b16 %v4693
        %v4714 = vpack.c.b16 %v4713, %v4712
        %v4732 = vunpack.c.l.b16 %v4694
        %v4733 = vunpack.c.l.b16 %v4695
        %v4734 = vunpack.c.l.b16 %v4696
        %v4735 = vunpack.c.l.b16 %v4697
        %v4736 = vunpack.c.l.b16 %v4698
        %v4737 = vunpack.c.l.b16 %v4699
        %v4738 = vunpack.c.l.b16 %v4700
        %v4739 = vunpack.c.l.b16 %v4701
        %v4740 = vunpack.c.l.b16 %v4702
        %v4741 = vunpack.c.l.b16 %v4703
        %v4742 = vunpack.c.l.b16 %v4704
        %v4743 = vunpack.c.l.b16 %v4705
        %v4744 = vunpack.c.l.b16 %v4706
        %v4745 = vunpack.c.l.b16 %v4707
        %v4746 = vunpack.c.l.b16 %v4708
        %v4747 = vunpack.c.l.b16 %v4709
        %v4748 = vpack.c.b16 %v4733, %v4732
        %v4749 = vpack.c.b16 %v4735, %v4734
        %v4750 = vpack.c.b16 %v4737, %v4736
        %v4751 = vpack.c.b16 %v4739, %v4738
        %v4752 = vpack.c.b16 %v4741, %v4740
        %v4753 = vpack.c.b16 %v4743, %v4742
        %v4754 = vpack.c.b16 %v4745, %v4744
        %v4755 = vpack.c.b16 %v4747, %v4746
        %4764 = vmatpush.bf16.msra.mxu0 %v4755
        %4765 = vmatpush.bf16.msra.mxu0 %v4754
        %4766 = vmatpush.bf16.msra.mxu0 %v4753
        %4767 = vmatpush.bf16.msra.mxu0 %v4752
        %4768 = vmatpush.bf16.msra.mxu0 %v4751
        %4769 = vmatpush.bf16.msra.mxu0 %v4750
        %4770 = vmatpush.bf16.msra.mxu0 %v4749
        %4771 = vmatpush.bf16.msra.mxu0 %v4748
        %4772 = vmatmul.bf16.gmra.mxu0 %v4714
        %v4773 = vpop.f32.mrf.mxu0
        %v4774 = vadd.f32 0.0, %v4773
        %v4775 = vpop.f32.mrf.mxu0
        %v4776 = vadd.f32 0.0, %v4775
        %4777 = vdwg.mxu0
        %v4778 = vld [vmem:[#allocation6 + $0xf] sm:$0x1]
        %v4779 = vperm.slane %v4778, 0
        %v4780 = vadd.f32 %v4774, %v4779
        %v4781 = vadd.f32 %v4776, %v4779
        %v4782 = vmax.f32 %v4780, 0.0
        %v4783 = vmax.f32 %v4781, 0.0
        %v4784 = vadd.f32 %v4782, %v4598
        %v4785 = vadd.f32 %v4783, %v4599
        %v4786 = vmax.f32 %v4784, 0.0
        %v4787 = vmax.f32 %v4785, 0.0
        %v4788 = vpack.c.bf16 %v4786, %v4786
        %v4789 = vpack.c.bf16 %v4787, %v4787
        %v4790 = vld [vmem:[#allocation3 + $0xc40] sm:$0xf]
        %v4791 = vld [vmem:[#allocation3 + $0xc44] sm:$0xf]
        %v4792 = vld [vmem:[#allocation3 + $0xc48] sm:$0xf]
        %v4793 = vld [vmem:[#allocation3 + $0xc4c] sm:$0xf]
        %v4794 = vld [vmem:[#allocation3 + $0xc50] sm:$0xf]
        %v4795 = vld [vmem:[#allocation3 + $0xc54] sm:$0xf]
        %v4796 = vld [vmem:[#allocation3 + $0xc58] sm:$0xf]
        %v4797 = vld [vmem:[#allocation3 + $0xc5c] sm:$0xf]
        %v4798 = vld [vmem:[#allocation3 + $0xc60] sm:$0xf]
        %v4799 = vld [vmem:[#allocation3 + $0xc64] sm:$0xf]
        %v4800 = vld [vmem:[#allocation3 + $0xc68] sm:$0xf]
        %v4801 = vld [vmem:[#allocation3 + $0xc6c] sm:$0xf]
        %v4802 = vld [vmem:[#allocation3 + $0xc70] sm:$0xf]
        %v4803 = vld [vmem:[#allocation3 + $0xc74] sm:$0xf]
        %v4804 = vld [vmem:[#allocation3 + $0xc78] sm:$0xf]
        %v4805 = vld [vmem:[#allocation3 + $0xc7c] sm:$0xf]
        %v4808 = vunpack.c.l.b16 %v4788
        %v4809 = vunpack.c.l.b16 %v4789
        %v4810 = vpack.c.b16 %v4809, %v4808
        %v4828 = vunpack.c.l.b16 %v4790
        %v4829 = vunpack.c.l.b16 %v4791
        %v4830 = vunpack.c.l.b16 %v4792
        %v4831 = vunpack.c.l.b16 %v4793
        %v4832 = vunpack.c.l.b16 %v4794
        %v4833 = vunpack.c.l.b16 %v4795
        %v4834 = vunpack.c.l.b16 %v4796
        %v4835 = vunpack.c.l.b16 %v4797
        %v4836 = vunpack.c.l.b16 %v4798
        %v4837 = vunpack.c.l.b16 %v4799
        %v4838 = vunpack.c.l.b16 %v4800
        %v4839 = vunpack.c.l.b16 %v4801
        %v4840 = vunpack.c.l.b16 %v4802
        %v4841 = vunpack.c.l.b16 %v4803
        %v4842 = vunpack.c.l.b16 %v4804
        %v4843 = vunpack.c.l.b16 %v4805
        %v4844 = vpack.c.b16 %v4829, %v4828
        %v4845 = vpack.c.b16 %v4831, %v4830
        %v4846 = vpack.c.b16 %v4833, %v4832
        %v4847 = vpack.c.b16 %v4835, %v4834
        %v4848 = vpack.c.b16 %v4837, %v4836
        %v4849 = vpack.c.b16 %v4839, %v4838
        %v4850 = vpack.c.b16 %v4841, %v4840
        %v4851 = vpack.c.b16 %v4843, %v4842
        %4860 = vmatpush.bf16.msra.mxu0 %v4851
        %4861 = vmatpush.bf16.msra.mxu0 %v4850
        %4862 = vmatpush.bf16.msra.mxu0 %v4849
        %4863 = vmatpush.bf16.msra.mxu0 %v4848
        %4864 = vmatpush.bf16.msra.mxu0 %v4847
        %4865 = vmatpush.bf16.msra.mxu0 %v4846
        %4866 = vmatpush.bf16.msra.mxu0 %v4845
        %4867 = vmatpush.bf16.msra.mxu0 %v4844
        %4868 = vmatmul.bf16.gmra.mxu0 %v4810
        %v4869 = vpop.f32.mrf.mxu0
        %v4870 = vadd.f32 0.0, %v4869
        %v4871 = vpop.f32.mrf.mxu0
        %v4872 = vadd.f32 0.0, %v4871
        %4873 = vdwg.mxu0
        %v4874 = vld [vmem:[#allocation6 + $0x10] sm:$0x1]
        %v4875 = vperm.slane %v4874, 0
        %v4876 = vadd.f32 %v4870, %v4875
        %v4877 = vadd.f32 %v4872, %v4875
        %v4878 = vmax.f32 %v4876, 0.0
        %v4879 = vmax.f32 %v4877, 0.0
        %v4880 = vpack.c.bf16 %v4878, %v4878
        %v4881 = vpack.c.bf16 %v4879, %v4879
        %v4882 = vld [vmem:[#allocation3 + $0xc80] sm:$0xf]
        %v4883 = vld [vmem:[#allocation3 + $0xc84] sm:$0xf]
        %v4884 = vld [vmem:[#allocation3 + $0xc88] sm:$0xf]
        %v4885 = vld [vmem:[#allocation3 + $0xc8c] sm:$0xf]
        %v4886 = vld [vmem:[#allocation3 + $0xc90] sm:$0xf]
        %v4887 = vld [vmem:[#allocation3 + $0xc94] sm:$0xf]
        %v4888 = vld [vmem:[#allocation3 + $0xc98] sm:$0xf]
        %v4889 = vld [vmem:[#allocation3 + $0xc9c] sm:$0xf]
        %v4890 = vld [vmem:[#allocation3 + $0xca0] sm:$0xf]
        %v4891 = vld [vmem:[#allocation3 + $0xca4] sm:$0xf]
        %v4892 = vld [vmem:[#allocation3 + $0xca8] sm:$0xf]
        %v4893 = vld [vmem:[#allocation3 + $0xcac] sm:$0xf]
        %v4894 = vld [vmem:[#allocation3 + $0xcb0] sm:$0xf]
        %v4895 = vld [vmem:[#allocation3 + $0xcb4] sm:$0xf]
        %v4896 = vld [vmem:[#allocation3 + $0xcb8] sm:$0xf]
        %v4897 = vld [vmem:[#allocation3 + $0xcbc] sm:$0xf]
        %v4900 = vunpack.c.l.b16 %v4880
        %v4901 = vunpack.c.l.b16 %v4881
        %v4902 = vpack.c.b16 %v4901, %v4900
        %v4920 = vunpack.c.l.b16 %v4882
        %v4921 = vunpack.c.l.b16 %v4883
        %v4922 = vunpack.c.l.b16 %v4884
        %v4923 = vunpack.c.l.b16 %v4885
        %v4924 = vunpack.c.l.b16 %v4886
        %v4925 = vunpack.c.l.b16 %v4887
        %v4926 = vunpack.c.l.b16 %v4888
        %v4927 = vunpack.c.l.b16 %v4889
        %v4928 = vunpack.c.l.b16 %v4890
        %v4929 = vunpack.c.l.b16 %v4891
        %v4930 = vunpack.c.l.b16 %v4892
        %v4931 = vunpack.c.l.b16 %v4893
        %v4932 = vunpack.c.l.b16 %v4894
        %v4933 = vunpack.c.l.b16 %v4895
        %v4934 = vunpack.c.l.b16 %v4896
        %v4935 = vunpack.c.l.b16 %v4897
        %v4936 = vpack.c.b16 %v4921, %v4920
        %v4937 = vpack.c.b16 %v4923, %v4922
        %v4938 = vpack.c.b16 %v4925, %v4924
        %v4939 = vpack.c.b16 %v4927, %v4926
        %v4940 = vpack.c.b16 %v4929, %v4928
        %v4941 = vpack.c.b16 %v4931, %v4930
        %v4942 = vpack.c.b16 %v4933, %v4932
        %v4943 = vpack.c.b16 %v4935, %v4934
        %4952 = vmatpush.bf16.msra.mxu0 %v4943
        %4953 = vmatpush.bf16.msra.mxu0 %v4942
        %4954 = vmatpush.bf16.msra.mxu0 %v4941
        %4955 = vmatpush.bf16.msra.mxu0 %v4940
        %4956 = vmatpush.bf16.msra.mxu0 %v4939
        %4957 = vmatpush.bf16.msra.mxu0 %v4938
        %4958 = vmatpush.bf16.msra.mxu0 %v4937
        %4959 = vmatpush.bf16.msra.mxu0 %v4936
        %4960 = vmatmul.bf16.gmra.mxu0 %v4902
        %v4961 = vpop.f32.mrf.mxu0
        %v4962 = vadd.f32 0.0, %v4961
        %v4963 = vpop.f32.mrf.mxu0
        %v4964 = vadd.f32 0.0, %v4963
        %4965 = vdwg.mxu0
        %v4966 = vld [vmem:[#allocation6 + $0x11] sm:$0x1]
        %v4967 = vperm.slane %v4966, 0
        %v4968 = vadd.f32 %v4962, %v4967
        %v4969 = vadd.f32 %v4964, %v4967
        %v4970 = vmax.f32 %v4968, 0.0
        %v4971 = vmax.f32 %v4969, 0.0
        %v4972 = vadd.f32 %v4970, %v4786
        %v4973 = vadd.f32 %v4971, %v4787
        %v4974 = vmax.f32 %v4972, 0.0
        %v4975 = vmax.f32 %v4973, 0.0
        %v4976 = vadd.f32 %v4974, %v4975
        %v4977 = vrot.slane %v4976, 4
        %v4978 = vadd.f32 %v4976, %v4977
        %v4979 = vrot.slane %v4978, 2
        %v4980 = vadd.f32 %v4978, %v4979
        %v4981 = vrot.slane %v4980, 1
        %v4982 = vadd.f32 %v4980, %v4981
        %v4983 = vpack.c.bf16 %v4982, %v4982
        %v4984 = vld [vmem:[#allocation3 + $0xcc0] sm:$0xf]
        %v4985 = vld [vmem:[#allocation3 + $0xcc4] sm:$0xf]
        %v4986 = vld [vmem:[#allocation3 + $0xcc8] sm:$0xf]
        %v4987 = vld [vmem:[#allocation3 + $0xccc] sm:$0xf]
        %v4988 = vld [vmem:[#allocation3 + $0xcd0] sm:$0xf]
        %v4989 = vld [vmem:[#allocation3 + $0xcd4] sm:$0xf]
        %v4990 = vld [vmem:[#allocation3 + $0xcd8] sm:$0xf]
        %v4991 = vld [vmem:[#allocation3 + $0xcdc] sm:$0xf]
        %v4992 = vld [vmem:[#allocation3 + $0xce0] sm:$0xf]
        %v4993 = vld [vmem:[#allocation3 + $0xce4] sm:$0xf]
        %v4994 = vld [vmem:[#allocation3 + $0xce8] sm:$0xf]
        %v4995 = vld [vmem:[#allocation3 + $0xcec] sm:$0xf]
        %v4996 = vld [vmem:[#allocation3 + $0xcf0] sm:$0xf]
        %v4997 = vld [vmem:[#allocation3 + $0xcf4] sm:$0xf]
        %v4998 = vld [vmem:[#allocation3 + $0xcf8] sm:$0xf]
        %v4999 = vld [vmem:[#allocation3 + $0xcfc] sm:$0xf]
        %v5000 = vld [vmem:[#allocation6 + $0x12] sm:$0x1]
        %v5017 = vunpack.c.l.b16 %v4984
        %v5018 = vunpack.c.l.b16 %v4985
        %v5019 = vunpack.c.l.b16 %v4986
        %v5020 = vunpack.c.l.b16 %v4987
        %v5021 = vunpack.c.l.b16 %v4988
        %v5022 = vunpack.c.l.b16 %v4989
        %v5023 = vunpack.c.l.b16 %v4990
        %v5024 = vunpack.c.l.b16 %v4991
        %v5025 = vunpack.c.l.b16 %v4992
        %v5026 = vunpack.c.l.b16 %v4993
        %v5027 = vunpack.c.l.b16 %v4994
        %v5028 = vunpack.c.l.b16 %v4995
        %v5029 = vunpack.c.l.b16 %v4996
        %v5030 = vunpack.c.l.b16 %v4997
        %v5031 = vunpack.c.l.b16 %v4998
        %v5032 = vunpack.c.l.b16 %v4999
        %v5033 = vpack.c.b16 %v5018, %v5017
        %v5034 = vpack.c.b16 %v5020, %v5019
        %v5035 = vpack.c.b16 %v5022, %v5021
        %v5036 = vpack.c.b16 %v5024, %v5023
        %v5037 = vpack.c.b16 %v5026, %v5025
        %v5038 = vpack.c.b16 %v5028, %v5027
        %v5039 = vpack.c.b16 %v5030, %v5029
        %v5040 = vpack.c.b16 %v5032, %v5031
        %5049 = vmatpush.bf16.msra.mxu0 %v5040
        %5050 = vmatpush.bf16.msra.mxu0 %v5039
        %5051 = vmatpush.bf16.msra.mxu0 %v5038
        %5052 = vmatpush.bf16.msra.mxu0 %v5037
        %5053 = vmatpush.bf16.msra.mxu0 %v5036
        %5054 = vmatpush.bf16.msra.mxu0 %v5035
        %5055 = vmatpush.bf16.msra.mxu0 %v5034
        %5056 = vmatpush.bf16.msra.mxu0 %v5033
        %5057 = vmatmul.bf16.gmra.mxu0 %v4983
        %v5058 = vpop.f32.mrf.mxu0
        %v5059 = vadd.f32 %v5000, %v5058
        %v5060 = vpop.f32.mrf.mxu0
        %5061 = vdwg.mxu0
        %5062 = vst [vmem:[%s196] sm:$0x1] %v5059
        %s5063 = sand.u32 %s95, 1
        %s5064 = scalar_lea.sflag [#allocation5], %s5063
        %s5065 = sand.u32 %s95, 1
        %s5066 = scalar_lea.vmem [#allocation8], %s5065
        // Predicated region
        $region41: #{_fwd.1} parent=31 // pred_check
          %p5067 = pneg %p105
        $region42: #{_fwd.1} parent=31 // pred_check_branch
          %5069 = sbr.rel (%p5067) target = $region44
        $region43: #{_fwd.1} parent=31 // pred_region
          %5071 = vsyncadd %s5064, 0
          %s5072 = scalar_lea.hbm %s3, %s19
          %s5074 = sshll.u32 %s5066, 4
          %s5075 = int_to_ptr.vmem [resolvable:$true] %s5074
          %s5076 = sshll.u32 %s5072, 4
          %s5077 = int_to_ptr.hbm [resolvable:$true] %s5076
          %5079 = dma.vmem_to_hbm [thread:$0]  %s5075, 16, %s5077, %s5064
        $region44: #{_fwd.1} parent=31 // pred_fallthru
          _
      $region32: #{_fwd.1} parent=5 // pred_fallthru
        _
      %p5080 = scmp.le.s32.totalorder 2, %s14
      // Predicated region
      $region45: #{_fwd.1} parent=5 // pred_check
        %p5081 = pneg %p5080
      $region46: #{_fwd.1} parent=5 // pred_check_branch
        %5083 = sbr.rel (%p5081) target = $region48
      $region47: #{_fwd.1} parent=5 // pred_region
        %s5084 = ssub.s32 %s14, 2
        // Predicated region
        $region49: #{_fwd.1} parent=47 // pred_check
          %p5085 = pneg %p111
        $region50: #{_fwd.1} parent=47 // pred_check_branch
          %5087 = sbr.rel (%p5085) target = $region52
        $region51: #{_fwd.1} parent=47 // pred_region
          %s5088 = sand.u32 %s96, 1
          %s5089 = scalar_lea.sflag [#allocation5], %s5088
          %s5090 = sand.u32 %s96, 1
          %s5091 = scalar_lea.vmem [#allocation8], %s5090
          %5093 = dma.done %s5089, 16
        $region52: #{_fwd.1} parent=47 // pred_fallthru
          _
      $region48: #{_fwd.1} parent=5 // pred_fallthru
        _
    $region6: #{_fwd.1} parent=1 // loop_footer
      %s18 = sadd.s32 1, %s14
    $region7: #{_fwd.1} parent=1 // loop_footer_branch
      %13 = sbr.rel target = $region3
    $region8: #{_fwd.1} parent=1 // loop_exit
      _
    %5094 = vsyncpa [#allocation4], 1
    %s5095 = scalar_lea.sflag [#allocation4], 1
    %5096 = vsyncpa %s5095, 1
    %5097 = vsyncpa [#allocation7], 1
    %5098 = vsyncpa [#allocation5], 1
    %s5099 = scalar_lea.sflag [#allocation5], 1
    %5100 = vsyncpa %s5099, 1

</llo_original>
